<compile_context>
chip_gen: v5e
topology: v5e:2x2
jax: 0.10.0
libtpu: 0.0.40
codegen_flags: <defaults>
</compile_context>

<pallas_src>
import functools

import jax
import jax.numpy as jnp
from jax.experimental import pallas as pl
from jax.experimental.pallas import tpu as pltpu


def _round_up(n, m):
    return ((n + m - 1) // m) * m


def vae_kernel(x_ref, eps_ref,
               w1_ref, b1_ref,        # img_2hid             : (Dinp, Hp)  bf16, (1, Hp)  f32
               w23_ref, b23_ref,      # hidden_2{mu|logvar}  : (Hp, 2Lp)   bf16, (1, 2Lp) f32
               w4_ref, b4_ref,        # z_2hid               : (Lp, Hp)    bf16, (1, Hp)  f32
               w5_ref, b5_ref,        # hid_2img             : (Hp, Dinp)  bf16, (1, Dinp) f32
               xrec_ref, mulv_ref):
    lp = eps_ref.shape[1]              # padded latent dim (128)

    # ---- encode ----
    x = x_ref[...]                     # (TB, Dinp) bf16
    h = jnp.dot(x, w1_ref[...], preferred_element_type=jnp.float32) + b1_ref[...]
    h = jnp.maximum(h, 0.0)            # ReLU, f32

    # fused mu|logvar projection: one MXU pass instead of two narrow ones
    ml = jnp.dot(h.astype(jnp.bfloat16), w23_ref[...],
                 preferred_element_type=jnp.float32) + b23_ref[...]
    mu = ml[:, :lp]                    # lane-tile-aligned slices (Lp = 128)
    logvar = ml[:, lp:]

    # ---- reparameterize ----
    std = jnp.exp(0.5 * logvar)
    z = mu + std * eps_ref[...]

    # ---- decode ----
    h2 = jnp.dot(z.astype(jnp.bfloat16), w4_ref[...],
                 preferred_element_type=jnp.float32) + b4_ref[...]
    h2 = jnp.maximum(h2, 0.0)          # ReLU

    logits = jnp.dot(h2.astype(jnp.bfloat16), w5_ref[...],
                     preferred_element_type=jnp.float32) + b5_ref[...]
    # sigmoid: exp on EUP, approximate reciprocal on EUP (VPU slot stays free)
    xrec_ref[...] = pl.reciprocal(1.0 + jnp.exp(-logits), approx=True)

    # lane-dense (TB, 2*Lp) output: mu | logvar packed side by side
    mulv_ref[...] = ml


def pack_params(p, Dinp, Hp, Lp):
    """Pad to tile-aligned shapes, fuse w2|w3, cast weights to bf16."""
    def pad2(a, rows, cols):
        return jnp.pad(a, ((0, rows - a.shape[0]), (0, cols - a.shape[1])))

    w1 = pad2(p["w1"], Dinp, Hp).astype(jnp.bfloat16)
    b1 = pad2(p["b1"], 1, Hp)
    w23 = jnp.concatenate([pad2(p["w2"], Hp, Lp), pad2(p["w3"], Hp, Lp)],
                          axis=1).astype(jnp.bfloat16)
    b23 = jnp.concatenate([pad2(p["b2"], 1, Lp), pad2(p["b3"], 1, Lp)], axis=1)
    w4 = pad2(p["w4"], Lp, Hp).astype(jnp.bfloat16)
    b4 = pad2(p["b4"], 1, Hp)
    w5 = pad2(p["w5"], Hp, Dinp).astype(jnp.bfloat16)
    b5 = pad2(p["b5"], 1, Dinp)
    return (w1, b1, w23, b23, w4, b4, w5, b5)


@functools.partial(jax.jit, static_argnames=("tile_b",))
def vae_forward(x, eps, params, *, tile_b=8):
    """x: (B, Din) f32, eps: (B, L) f32, params: dict of (in,out) f32 weights."""
    B, Din = x.shape
    L = eps.shape[1]
    H = params["w1"].shape[1]

    # Tile-aligned padded dims. (For v6e/v7x-only deployment rounding K/N to
    # 256 gives full MXU passes at ~14% extra weight bytes; 128 keeps the
    # kernel HBM-lean and valid on all generations.)
    Dinp = _round_up(Din, 128)
    Hp = _round_up(H, 128)
    Lp = _round_up(L, 128)
    TB = max(8, int(tile_b))           # batch tile (use 128-256 for real batches)
    Bp = _round_up(B, TB)

    packed = pack_params(params, Dinp, Hp, Lp)
    x_p = jnp.pad(x, ((0, Bp - B), (0, Dinp - Din))).astype(jnp.bfloat16)
    eps_p = jnp.pad(eps, ((0, Bp - B), (0, Lp - L)))          # f32

    grid = (Bp // TB,)

    # Advisory cost estimate so XLA can overlap surrounding ops (eps gen, etc.)
    flops = 2 * Bp * (Dinp * Hp + Hp * 2 * Lp + Lp * Hp + Hp * Dinp)
    bytes_accessed = int(
        x_p.size * 2 + eps_p.size * 4
        + sum(int(a.size) * a.dtype.itemsize for a in packed)
        + Bp * Dinp * 4 + Bp * 2 * Lp * 4)
    cost = pl.CostEstimate(flops=flops,
                           transcendentals=Bp * (Lp + Dinp),
                           bytes_accessed=bytes_accessed)

    def act_spec(cols):                # batch-tiled activations / outputs
        return pl.BlockSpec((TB, cols), lambda i: (i, 0))

    def resident(shape):               # whole-array, constant index map -> fetched once
        return pl.BlockSpec(shape, lambda i: (0, 0))

    xrec_p, mulv = pl.pallas_call(
        vae_kernel,
        grid=grid,
        in_specs=[
            act_spec(Dinp),            # x
            act_spec(Lp),              # eps
            resident((Dinp, Hp)),      # w1 (img_2hid)
            resident((1, Hp)),         # b1
            resident((Hp, 2 * Lp)),    # w2|w3 fused (hidden_2mu | hidden_2logvar)
            resident((1, 2 * Lp)),     # b2|b3
            resident((Lp, Hp)),        # w4 (z_2hid)
            resident((1, Hp)),         # b4
            resident((Hp, Dinp)),      # w5 (hid_2img)
            resident((1, Dinp)),       # b5
        ],
        out_specs=(act_spec(Dinp), act_spec(2 * Lp)),
        out_shape=(
            jax.ShapeDtypeStruct((Bp, Dinp), jnp.float32),     # x_reconstructed (padded)
            jax.ShapeDtypeStruct((Bp, 2 * Lp), jnp.float32),   # mu | logvar (padded)
        ),
        compiler_params=pltpu.CompilerParams(
            dimension_semantics=("parallel",),                 # megacore on v7x
            vmem_limit_bytes=48 * 1024 * 1024,                 # explicit, fits v7x's 64 MiB
        ),
        cost_estimate=cost,
    )(x_p, eps_p, *packed)

    # Slice padding back off in the wrapper (layout plumbing, not compute).
    xrec = xrec_p[:B, :Din]
    mu = mulv[:B, :L]
    logvar = mulv[:B, Lp:Lp + L]
    return xrec, mu, logvar


def init_linear(key, fan_in, fan_out):
    """Deterministic init mimicking nn.Linear's uniform(-1/sqrt(fan_in), ...)."""
    kw, kb = jax.random.split(key)
    bound = 1.0 / jnp.sqrt(fan_in)
    w = jax.random.uniform(kw, (fan_in, fan_out), jnp.float32, -bound, bound)
    b = jax.random.uniform(kb, (1, fan_out), jnp.float32, -bound, bound)
    return w, b


def vae_reference(x, eps, p):
    """Pure-JAX f32 reference with identical semantics (sanity check)."""
    h = jnp.maximum(x @ p["w1"] + p["b1"], 0.0)
    mu = h @ p["w2"] + p["b2"]
    logvar = h @ p["w3"] + p["b3"]
    z = mu + jnp.exp(0.5 * logvar) * eps
    h2 = jnp.maximum(z @ p["w4"] + p["b4"], 0.0)
    xrec = jax.nn.sigmoid(h2 @ p["w5"] + p["b5"])
    return xrec, mu, logvar


if __name__ == "__main__":
    # MNIST-style VAE dims, small batch (2 grid steps at tile_b=8).
    B, Din, H, L = 16, 784, 400, 20

    root = jax.random.PRNGKey(0)
    k_x, k_eps, k1, k2, k3, k4, k5 = jax.random.split(root, 7)

    params = {}
    params["w1"], params["b1"] = init_linear(k1, Din, H)   # img_2hid
    params["w2"], params["b2"] = init_linear(k2, H, L)     # hidden_2mu
    params["w3"], params["b3"] = init_linear(k3, H, L)     # hidden_2logvar
    params["w4"], params["b4"] = init_linear(k4, L, H)     # z_2hid
    params["w5"], params["b5"] = init_linear(k5, H, Din)   # hid_2img

    x = jax.random.uniform(k_x, (B, Din), jnp.float32)     # image-like input
    eps = jax.random.normal(k_eps, (B, L), jnp.float32)    # randn_like(std)

    xrec, mu, logvar = jax.block_until_ready(vae_forward(x, eps, params, tile_b=8))

    # Correctness check vs. the f32 reference (tolerance loosened for bf16
    # weights/activations + approximate reciprocal in the sigmoid).
    xr_r, mu_r, lv_r = vae_reference(x, eps, params)
    assert jnp.allclose(xrec, xr_r, atol=2e-2, rtol=2e-2), float(jnp.max(jnp.abs(xrec - xr_r)))
    assert jnp.allclose(mu, mu_r, atol=2e-2, rtol=2e-2), float(jnp.max(jnp.abs(mu - mu_r)))
    assert jnp.allclose(logvar, lv_r, atol=2e-2, rtol=2e-2), float(jnp.max(jnp.abs(logvar - lv_r)))

    print("KERNEL_OK")
</pallas_src>

<mosaic_0001>
module attributes {stable_mosaic.version = 11 : i64} {
  func.func @vae_kernel(%arg0: i32, %arg1: memref<8x896xbf16, #tpu.memory_space<vmem>>, %arg2: memref<8x128xf32, #tpu.memory_space<vmem>>, %arg3: memref<896x512xbf16, #tpu.memory_space<vmem>>, %arg4: memref<1x512xf32, #tpu.memory_space<vmem>>, %arg5: memref<512x256xbf16, #tpu.memory_space<vmem>>, %arg6: memref<1x256xf32, #tpu.memory_space<vmem>>, %arg7: memref<128x512xbf16, #tpu.memory_space<vmem>>, %arg8: memref<1x512xf32, #tpu.memory_space<vmem>>, %arg9: memref<512x896xbf16, #tpu.memory_space<vmem>>, %arg10: memref<1x896xf32, #tpu.memory_space<vmem>>, %arg11: memref<8x896xf32, #tpu.memory_space<vmem>>, %arg12: memref<8x256xf32, #tpu.memory_space<vmem>>) attributes {dimension_semantics = [#tpu.dimension_semantics<parallel>], iteration_bounds = array<i64: 2>, scalar_prefetch = 0 : i64, scratch_operands = 0 : i64, tpu.core_type = #tpu.core_type<tc>, window_params = [{transform_indices = @transform_0, window_bounds = array<i64: 8, 896>}, {transform_indices = @transform_1, window_bounds = array<i64: 8, 128>}, {pipeline_mode = #tpu.pipeline_mode<synchronous>, transform_indices = @transform_2, window_bounds = array<i64: 896, 512>}, {pipeline_mode = #tpu.pipeline_mode<synchronous>, transform_indices = @transform_3, window_bounds = array<i64: 1, 512>}, {pipeline_mode = #tpu.pipeline_mode<synchronous>, transform_indices = @transform_4, window_bounds = array<i64: 512, 256>}, {pipeline_mode = #tpu.pipeline_mode<synchronous>, transform_indices = @transform_5, window_bounds = array<i64: 1, 256>}, {pipeline_mode = #tpu.pipeline_mode<synchronous>, transform_indices = @transform_6, window_bounds = array<i64: 128, 512>}, {pipeline_mode = #tpu.pipeline_mode<synchronous>, transform_indices = @transform_7, window_bounds = array<i64: 1, 512>}, {pipeline_mode = #tpu.pipeline_mode<synchronous>, transform_indices = @transform_8, window_bounds = array<i64: 512, 896>}, {pipeline_mode = #tpu.pipeline_mode<synchronous>, transform_indices = @transform_9, window_bounds = array<i64: 1, 896>}, {transform_indices = @transform_10, window_bounds = array<i64: 8, 896>}, {transform_indices = @transform_11, window_bounds = array<i64: 8, 256>}]} {
    %c0 = arith.constant 0 : index
    %c0_0 = arith.constant 0 : index
    %0 = vector.load %arg1[%c0, %c0_0] : memref<8x896xbf16, #tpu.memory_space<vmem>>, vector<8x896xbf16>
    %c0_1 = arith.constant 0 : index
    %c0_2 = arith.constant 0 : index
    %1 = vector.load %arg3[%c0_1, %c0_2] : memref<896x512xbf16, #tpu.memory_space<vmem>>, vector<896x512xbf16>
    %cst = arith.constant dense<0.000000e+00> : vector<8x512xf32>
    %2 = tpu.matmul %0, %1, %cst {dimension_numbers = #tpu.dot_dimension_numbers<[1], [0], [0], [1], [0, 0, 1, 1], [], []>} : vector<8x896xbf16>, vector<896x512xbf16>, vector<8x512xf32> -> vector<8x512xf32>
    %c0_3 = arith.constant 0 : index
    %c0_4 = arith.constant 0 : index
    %3 = vector.load %arg4[%c0_3, %c0_4] : memref<1x512xf32, #tpu.memory_space<vmem>>, vector<1x512xf32>
    %4 = vector.broadcast %3 : vector<1x512xf32> to vector<8x512xf32>
    %5 = arith.addf %2, %4 : vector<8x512xf32>
    %cst_5 = arith.constant 0.000000e+00 : f32
    %6 = vector.broadcast %cst_5 : f32 to vector<8x512xf32>
    %7 = arith.maximumf %5, %6 : vector<8x512xf32>
    %8 = arith.truncf %7 : vector<8x512xf32> to vector<8x512xbf16>
    %c0_6 = arith.constant 0 : index
    %c0_7 = arith.constant 0 : index
    %9 = vector.load %arg5[%c0_6, %c0_7] : memref<512x256xbf16, #tpu.memory_space<vmem>>, vector<512x256xbf16>
    %cst_8 = arith.constant dense<0.000000e+00> : vector<8x256xf32>
    %10 = tpu.matmul %8, %9, %cst_8 {dimension_numbers = #tpu.dot_dimension_numbers<[1], [0], [0], [1], [0, 0, 1, 1], [], []>} : vector<8x512xbf16>, vector<512x256xbf16>, vector<8x256xf32> -> vector<8x256xf32>
    %c0_9 = arith.constant 0 : index
    %c0_10 = arith.constant 0 : index
    %11 = vector.load %arg6[%c0_9, %c0_10] : memref<1x256xf32, #tpu.memory_space<vmem>>, vector<1x256xf32>
    %12 = vector.broadcast %11 : vector<1x256xf32> to vector<8x256xf32>
    %13 = arith.addf %10, %12 : vector<8x256xf32>
    %14 = vector.extract_strided_slice %13 {offsets = [0, 0], sizes = [8, 128], strides = [1, 1]} : vector<8x256xf32> to vector<8x128xf32>
    %15 = vector.extract_strided_slice %13 {offsets = [0, 128], sizes = [8, 128], strides = [1, 1]} : vector<8x256xf32> to vector<8x128xf32>
    %cst_11 = arith.constant 5.000000e-01 : f32
    %16 = vector.broadcast %cst_11 : f32 to vector<8x128xf32>
    %17 = arith.mulf %16, %15 : vector<8x128xf32>
    %18 = math.exp %17 : vector<8x128xf32>
    %c0_12 = arith.constant 0 : index
    %c0_13 = arith.constant 0 : index
    %19 = vector.load %arg2[%c0_12, %c0_13] : memref<8x128xf32, #tpu.memory_space<vmem>>, vector<8x128xf32>
    %20 = arith.mulf %18, %19 : vector<8x128xf32>
    %21 = arith.addf %14, %20 : vector<8x128xf32>
    %22 = arith.truncf %21 : vector<8x128xf32> to vector<8x128xbf16>
    %c0_14 = arith.constant 0 : index
    %c0_15 = arith.constant 0 : index
    %23 = vector.load %arg7[%c0_14, %c0_15] : memref<128x512xbf16, #tpu.memory_space<vmem>>, vector<128x512xbf16>
    %cst_16 = arith.constant dense<0.000000e+00> : vector<8x512xf32>
    %24 = tpu.matmul %22, %23, %cst_16 {dimension_numbers = #tpu.dot_dimension_numbers<[1], [0], [0], [1], [0, 0, 1, 1], [], []>} : vector<8x128xbf16>, vector<128x512xbf16>, vector<8x512xf32> -> vector<8x512xf32>
    %c0_17 = arith.constant 0 : index
    %c0_18 = arith.constant 0 : index
    %25 = vector.load %arg8[%c0_17, %c0_18] : memref<1x512xf32, #tpu.memory_space<vmem>>, vector<1x512xf32>
    %26 = vector.broadcast %25 : vector<1x512xf32> to vector<8x512xf32>
    %27 = arith.addf %24, %26 : vector<8x512xf32>
    %cst_19 = arith.constant 0.000000e+00 : f32
    %28 = vector.broadcast %cst_19 : f32 to vector<8x512xf32>
    %29 = arith.maximumf %27, %28 : vector<8x512xf32>
    %30 = arith.truncf %29 : vector<8x512xf32> to vector<8x512xbf16>
    %c0_20 = arith.constant 0 : index
    %c0_21 = arith.constant 0 : index
    %31 = vector.load %arg9[%c0_20, %c0_21] : memref<512x896xbf16, #tpu.memory_space<vmem>>, vector<512x896xbf16>
    %cst_22 = arith.constant dense<0.000000e+00> : vector<8x896xf32>
    %32 = tpu.matmul %30, %31, %cst_22 {dimension_numbers = #tpu.dot_dimension_numbers<[1], [0], [0], [1], [0, 0, 1, 1], [], []>} : vector<8x512xbf16>, vector<512x896xbf16>, vector<8x896xf32> -> vector<8x896xf32>
    %c0_23 = arith.constant 0 : index
    %c0_24 = arith.constant 0 : index
    %33 = vector.load %arg10[%c0_23, %c0_24] : memref<1x896xf32, #tpu.memory_space<vmem>>, vector<1x896xf32>
    %34 = vector.broadcast %33 : vector<1x896xf32> to vector<8x896xf32>
    %35 = arith.addf %32, %34 : vector<8x896xf32>
    %cst_25 = arith.constant 0.000000e+00 : f32
    %36 = vector.broadcast %cst_25 : f32 to vector<8x896xf32>
    %37 = arith.subf %36, %35 : vector<8x896xf32>
    %38 = math.exp %37 : vector<8x896xf32>
    %cst_26 = arith.constant 1.000000e+00 : f32
    %39 = vector.broadcast %cst_26 : f32 to vector<8x896xf32>
    %40 = arith.addf %39, %38 : vector<8x896xf32>
    %41 = tpu.reciprocal %40 {approx = true} : vector<8x896xf32> -> vector<8x896xf32>
    %c0_27 = arith.constant 0 : index
    %c0_28 = arith.constant 0 : index
    %42 = vector.load %arg11[%c0_27, %c0_28] : memref<8x896xf32, #tpu.memory_space<vmem>>, vector<8x896xf32>
    tpu.vector_store %arg11[%c0_27, %c0_28], %41 {strides = array<i32>} : memref<8x896xf32, #tpu.memory_space<vmem>>, vector<8x896xf32>,
    %c0_29 = arith.constant 0 : index
    %c0_30 = arith.constant 0 : index
    %43 = vector.load %arg12[%c0_29, %c0_30] : memref<8x256xf32, #tpu.memory_space<vmem>>, vector<8x256xf32>
    tpu.vector_store %arg12[%c0_29, %c0_30], %13 {strides = array<i32>} : memref<8x256xf32, #tpu.memory_space<vmem>>, vector<8x256xf32>,
    return
  }
  func.func @transform_0(%arg0: i32) -> (i32, i32) {
    %c0_i32 = arith.constant 0 : i32
    %c0_i32_0 = arith.constant 0 : i32
    return %arg0, %c0_i32 : i32, i32
  }
  func.func @transform_1(%arg0: i32) -> (i32, i32) {
    %c0_i32 = arith.constant 0 : i32
    %c0_i32_0 = arith.constant 0 : i32
    return %arg0, %c0_i32 : i32, i32
  }
  func.func @transform_2(%arg0: i32) -> (i32, i32) {
    %c0_i32 = arith.constant 0 : i32
    %c0_i32_0 = arith.constant 0 : i32
    %c0_i32_1 = arith.constant 0 : i32
    return %c0_i32, %c0_i32_0 : i32, i32
  }
  func.func @transform_3(%arg0: i32) -> (i32, i32) {
    %c0_i32 = arith.constant 0 : i32
    %c0_i32_0 = arith.constant 0 : i32
    %c0_i32_1 = arith.constant 0 : i32
    return %c0_i32, %c0_i32_0 : i32, i32
  }
  func.func @transform_4(%arg0: i32) -> (i32, i32) {
    %c0_i32 = arith.constant 0 : i32
    %c0_i32_0 = arith.constant 0 : i32
    %c0_i32_1 = arith.constant 0 : i32
    return %c0_i32, %c0_i32_0 : i32, i32
  }
  func.func @transform_5(%arg0: i32) -> (i32, i32) {
    %c0_i32 = arith.constant 0 : i32
    %c0_i32_0 = arith.constant 0 : i32
    %c0_i32_1 = arith.constant 0 : i32
    return %c0_i32, %c0_i32_0 : i32, i32
  }
  func.func @transform_6(%arg0: i32) -> (i32, i32) {
    %c0_i32 = arith.constant 0 : i32
    %c0_i32_0 = arith.constant 0 : i32
    %c0_i32_1 = arith.constant 0 : i32
    return %c0_i32, %c0_i32_0 : i32, i32
  }
  func.func @transform_7(%arg0: i32) -> (i32, i32) {
    %c0_i32 = arith.constant 0 : i32
    %c0_i32_0 = arith.constant 0 : i32
    %c0_i32_1 = arith.constant 0 : i32
    return %c0_i32, %c0_i32_0 : i32, i32
  }
  func.func @transform_8(%arg0: i32) -> (i32, i32) {
    %c0_i32 = arith.constant 0 : i32
    %c0_i32_0 = arith.constant 0 : i32
    %c0_i32_1 = arith.constant 0 : i32
    return %c0_i32, %c0_i32_0 : i32, i32
  }
  func.func @transform_9(%arg0: i32) -> (i32, i32) {
    %c0_i32 = arith.constant 0 : i32
    %c0_i32_0 = arith.constant 0 : i32
    %c0_i32_1 = arith.constant 0 : i32
    return %c0_i32, %c0_i32_0 : i32, i32
  }
  func.func @transform_10(%arg0: i32) -> (i32, i32) {
    %c0_i32 = arith.constant 0 : i32
    %c0_i32_0 = arith.constant 0 : i32
    return %arg0, %c0_i32 : i32, i32
  }
  func.func @transform_11(%arg0: i32) -> (i32, i32) {
    %c0_i32 = arith.constant 0 : i32
    %c0_i32_0 = arith.constant 0 : i32
    return %arg0, %c0_i32 : i32, i32
  }
}

</mosaic_0001>

<llo_original>
// kernel: vae_forward.1
$region0: #{vae_forward.1}
  #allocation0 [shape = 'u32[]', space=smem, size = 0x4, offset = 0x4, fixed_abs, tag = 'smem constant byte address 0x4 - core index']
  #allocation1 [shape = 'u32[72,128]{1,0:T(1,128)}', space=vmem, size = 0x9000, scoped, tag = 'internal scratch']
  %s0 = inlined_call_operand.vmem [shape: bf16[16,896], index: 0, kind: input, shape index: {}]
  %s1 = inlined_call_operand.vmem [shape: f32[16,128], index: 1, kind: input, shape index: {}]
  %s2 = inlined_call_operand.vmem [shape: bf16[896,512], index: 2, kind: input, shape index: {}]
  %s3 = inlined_call_operand.vmem [shape: f32[1,512], index: 3, kind: input, shape index: {}]
  %s4 = inlined_call_operand.vmem [shape: bf16[512,256], index: 4, kind: input, shape index: {}]
  %s5 = inlined_call_operand.vmem [shape: f32[1,256], index: 5, kind: input, shape index: {}]
  %s6 = inlined_call_operand.vmem [shape: bf16[128,512], index: 6, kind: input, shape index: {}]
  %s7 = inlined_call_operand.vmem [shape: f32[1,512], index: 7, kind: input, shape index: {}]
  %s8 = inlined_call_operand.vmem [shape: bf16[512,896], index: 8, kind: input, shape index: {}]
  %s9 = inlined_call_operand.vmem [shape: f32[1,896], index: 9, kind: input, shape index: {}]
  %s10 = inlined_call_operand.hbm [shape: f32[16,896], index: 10, kind: output, shape index: {0}]
  %s11 = inlined_call_operand.vmem [shape: f32[16,256], index: 11, kind: output, shape index: {1}]
  %12 = xla_tuple %s10, %s11
  %s13 = sld [smem:[#allocation0]]
  $region81: #{vae_forward.1} parent=0
    _
  %s15 = ssub.s32 1, %s13
  %s16 = scalar_select 0, %s15, %s13
  $region1: #{vae_forward.1} parent=0
    #allocation2 [shape = 'u8[57344]{0}', space=vmem, size = 0xe000, scoped, tag = 'output window, operand 0']
    #allocation3 [shape = 's32[2]{0}', space=sflag, size = 0x8, scoped, tag = 'scoped memory for vae_forward.1']
    %17 = vsyncpa [#allocation3], 0
    %s18 = scalar_lea.sflag [#allocation3], 1
    %19 = vsyncpa %s18, 0
    loop: start=0, step=1, limit=4
    $region2: #{vae_forward.1} parent=1 // loop_pre_header
      _
    $region3: #{vae_forward.1} parent=1 // loop_header
      %s21 = sphi 0, %s25
      %p22 = scmp.ge.s32.totalorder %s21, 4
      %s31 = sphi 0, %s33
      %s34 = sphi 0, %s31
      %s35 = sphi 0, %s34
      %s51 = sphi 0, %s35
      %s57 = sphi 0, %s59
      %s60 = sphi 0, %s57
      %s61 = sphi 0, %s60
      %s77 = sphi 0, %s61
      %s81 = sphi 0, %s81
      %s83 = sphi 0, %s81
      %s84 = sphi 0, %s83
      %s98 = sphi 0, %s84
      %s102 = sphi 0, %s102
      %s104 = sphi 0, %s102
      %s105 = sphi 0, %s104
      %s119 = sphi 0, %s105
      %s123 = sphi 0, %s123
      %s125 = sphi 0, %s123
      %s126 = sphi 0, %s125
      %s140 = sphi 0, %s126
      %s144 = sphi 0, %s144
      %s146 = sphi 0, %s144
      %s147 = sphi 0, %s146
      %s161 = sphi 0, %s147
      %s165 = sphi 0, %s165
      %s167 = sphi 0, %s165
      %s168 = sphi 0, %s167
      %s182 = sphi 0, %s168
      %s186 = sphi 0, %s186
      %s188 = sphi 0, %s186
      %s189 = sphi 0, %s188
      %s203 = sphi 0, %s189
      %s207 = sphi 0, %s207
      %s209 = sphi 0, %s207
      %s210 = sphi 0, %s209
      %s224 = sphi 0, %s210
      %s228 = sphi 0, %s228
      %s230 = sphi 0, %s228
      %s231 = sphi 0, %s230
      %s245 = sphi 0, %s231
      %s251 = sphi 0, %s253
      %s254 = sphi 0, %s251
      %s255 = sphi 0, %s254
      %s271 = sphi 0, %s255
      %s277 = sphi 0, %s279
      %s280 = sphi 0, %s277
      %s281 = sphi 0, %s280
      %s297 = sphi 0, %s281
    $region4: #{vae_forward.1} parent=1 // loop_header_branch
      %24 = sbr.rel (%p22) target = $region8
    $region5: #{vae_forward.1} parent=1 // loop_body
      %s26 = ssub.s32 %s21, 1
      %s27 = ssub.s32 %s21, 2
      %s28 = sadd.s32 %s21, 1
      %s29 = ssub.s32 %s21, %s28
      %p30 = scmp.eq.s32.totalorder %s29, 0
      %s32 = sadd.s32 %s31, 1
      %s33 = scalar_select %p30, %s31, %s32
      %p36 = pneg %p30
      %p37 = scmp.eq.s32.totalorder %s21, 1
      %p38 = por %p36, %p37
      %p39 = scmp.ne.s32.totalorder %s31, %s34
      %p40 = scmp.eq.s32.totalorder %s21, 0
      %p41 = por %p39, %p40
      %p42 = scmp.ne.s32.totalorder %s31, %s34
      %p43 = scmp.eq.s32.totalorder %s26, 1
      %p44 = por %p42, %p43
      %p45 = scmp.ne.s32.totalorder %s34, %s35
      %p46 = scmp.eq.s32.totalorder %s26, 0
      %p47 = por %p45, %p46
      %p48 = scmp.ne.s32.totalorder %s34, %s35
      %p49 = scmp.eq.s32.totalorder %s27, 1
      %p50 = por %p48, %p49
      %p52 = scmp.ne.s32.totalorder %s35, %s51
      %p53 = scmp.eq.s32.totalorder %s27, 0
      %p54 = por %p52, %p53
      %s55 = ssub.s32 %s21, %s28
      %p56 = scmp.eq.s32.totalorder %s55, 0
      %s58 = sadd.s32 %s57, 1
      %s59 = scalar_select %p56, %s57, %s58
      %p62 = pneg %p56
      %p63 = scmp.eq.s32.totalorder %s21, 1
      %p64 = por %p62, %p63
      %p65 = scmp.ne.s32.totalorder %s57, %s60
      %p66 = scmp.eq.s32.totalorder %s21, 0
      %p67 = por %p65, %p66
      %p68 = scmp.ne.s32.totalorder %s57, %s60
      %p69 = scmp.eq.s32.totalorder %s26, 1
      %p70 = por %p68, %p69
      %p71 = scmp.ne.s32.totalorder %s60, %s61
      %p72 = scmp.eq.s32.totalorder %s26, 0
      %p73 = por %p71, %p72
      %p74 = scmp.ne.s32.totalorder %s60, %s61
      %p75 = scmp.eq.s32.totalorder %s27, 1
      %p76 = por %p74, %p75
      %p78 = scmp.ne.s32.totalorder %s61, %s77
      %p79 = scmp.eq.s32.totalorder %s27, 0
      %p80 = por %p78, %p79
      %s82 = sadd.s32 %s81, 1
      %p85 = scmp.eq.s32.totalorder %s21, 1
      %p86 = scmp.ne.s32.totalorder %s81, %s83
      %p87 = scmp.eq.s32.totalorder %s21, 0
      %p88 = por %p86, %p87
      %p89 = scmp.ne.s32.totalorder %s81, %s83
      %p90 = scmp.eq.s32.totalorder %s26, 1
      %p91 = por %p89, %p90
      %p92 = scmp.ne.s32.totalorder %s83, %s84
      %p93 = scmp.eq.s32.totalorder %s26, 0
      %p94 = por %p92, %p93
      %p95 = scmp.ne.s32.totalorder %s83, %s84
      %p96 = scmp.eq.s32.totalorder %s27, 1
      %p97 = por %p95, %p96
      %p99 = scmp.ne.s32.totalorder %s84, %s98
      %p100 = scmp.eq.s32.totalorder %s27, 0
      %p101 = por %p99, %p100
      %s103 = sadd.s32 %s102, 1
      %p106 = scmp.eq.s32.totalorder %s21, 1
      %p107 = scmp.ne.s32.totalorder %s102, %s104
      %p108 = scmp.eq.s32.totalorder %s21, 0
      %p109 = por %p107, %p108
      %p110 = scmp.ne.s32.totalorder %s102, %s104
      %p111 = scmp.eq.s32.totalorder %s26, 1
      %p112 = por %p110, %p111
      %p113 = scmp.ne.s32.totalorder %s104, %s105
      %p114 = scmp.eq.s32.totalorder %s26, 0
      %p115 = por %p113, %p114
      %p116 = scmp.ne.s32.totalorder %s104, %s105
      %p117 = scmp.eq.s32.totalorder %s27, 1
      %p118 = por %p116, %p117
      %p120 = scmp.ne.s32.totalorder %s105, %s119
      %p121 = scmp.eq.s32.totalorder %s27, 0
      %p122 = por %p120, %p121
      %s124 = sadd.s32 %s123, 1
      %p127 = scmp.eq.s32.totalorder %s21, 1
      %p128 = scmp.ne.s32.totalorder %s123, %s125
      %p129 = scmp.eq.s32.totalorder %s21, 0
      %p130 = por %p128, %p129
      %p131 = scmp.ne.s32.totalorder %s123, %s125
      %p132 = scmp.eq.s32.totalorder %s26, 1
      %p133 = por %p131, %p132
      %p134 = scmp.ne.s32.totalorder %s125, %s126
      %p135 = scmp.eq.s32.totalorder %s26, 0
      %p136 = por %p134, %p135
      %p137 = scmp.ne.s32.totalorder %s125, %s126
      %p138 = scmp.eq.s32.totalorder %s27, 1
      %p139 = por %p137, %p138
      %p141 = scmp.ne.s32.totalorder %s126, %s140
      %p142 = scmp.eq.s32.totalorder %s27, 0
      %p143 = por %p141, %p142
      %s145 = sadd.s32 %s144, 1
      %p148 = scmp.eq.s32.totalorder %s21, 1
      %p149 = scmp.ne.s32.totalorder %s144, %s146
      %p150 = scmp.eq.s32.totalorder %s21, 0
      %p151 = por %p149, %p150
      %p152 = scmp.ne.s32.totalorder %s144, %s146
      %p153 = scmp.eq.s32.totalorder %s26, 1
      %p154 = por %p152, %p153
      %p155 = scmp.ne.s32.totalorder %s146, %s147
      %p156 = scmp.eq.s32.totalorder %s26, 0
      %p157 = por %p155, %p156
      %p158 = scmp.ne.s32.totalorder %s146, %s147
      %p159 = scmp.eq.s32.totalorder %s27, 1
      %p160 = por %p158, %p159
      %p162 = scmp.ne.s32.totalorder %s147, %s161
      %p163 = scmp.eq.s32.totalorder %s27, 0
      %p164 = por %p162, %p163
      %s166 = sadd.s32 %s165, 1
      %p169 = scmp.eq.s32.totalorder %s21, 1
      %p170 = scmp.ne.s32.totalorder %s165, %s167
      %p171 = scmp.eq.s32.totalorder %s21, 0
      %p172 = por %p170, %p171
      %p173 = scmp.ne.s32.totalorder %s165, %s167
      %p174 = scmp.eq.s32.totalorder %s26, 1
      %p175 = por %p173, %p174
      %p176 = scmp.ne.s32.totalorder %s167, %s168
      %p177 = scmp.eq.s32.totalorder %s26, 0
      %p178 = por %p176, %p177
      %p179 = scmp.ne.s32.totalorder %s167, %s168
      %p180 = scmp.eq.s32.totalorder %s27, 1
      %p181 = por %p179, %p180
      %p183 = scmp.ne.s32.totalorder %s168, %s182
      %p184 = scmp.eq.s32.totalorder %s27, 0
      %p185 = por %p183, %p184
      %s187 = sadd.s32 %s186, 1
      %p190 = scmp.eq.s32.totalorder %s21, 1
      %p191 = scmp.ne.s32.totalorder %s186, %s188
      %p192 = scmp.eq.s32.totalorder %s21, 0
      %p193 = por %p191, %p192
      %p194 = scmp.ne.s32.totalorder %s186, %s188
      %p195 = scmp.eq.s32.totalorder %s26, 1
      %p196 = por %p194, %p195
      %p197 = scmp.ne.s32.totalorder %s188, %s189
      %p198 = scmp.eq.s32.totalorder %s26, 0
      %p199 = por %p197, %p198
      %p200 = scmp.ne.s32.totalorder %s188, %s189
      %p201 = scmp.eq.s32.totalorder %s27, 1
      %p202 = por %p200, %p201
      %p204 = scmp.ne.s32.totalorder %s189, %s203
      %p205 = scmp.eq.s32.totalorder %s27, 0
      %p206 = por %p204, %p205
      %s208 = sadd.s32 %s207, 1
      %p211 = scmp.eq.s32.totalorder %s21, 1
      %p212 = scmp.ne.s32.totalorder %s207, %s209
      %p213 = scmp.eq.s32.totalorder %s21, 0
      %p214 = por %p212, %p213
      %p215 = scmp.ne.s32.totalorder %s207, %s209
      %p216 = scmp.eq.s32.totalorder %s26, 1
      %p217 = por %p215, %p216
      %p218 = scmp.ne.s32.totalorder %s209, %s210
      %p219 = scmp.eq.s32.totalorder %s26, 0
      %p220 = por %p218, %p219
      %p221 = scmp.ne.s32.totalorder %s209, %s210
      %p222 = scmp.eq.s32.totalorder %s27, 1
      %p223 = por %p221, %p222
      %p225 = scmp.ne.s32.totalorder %s210, %s224
      %p226 = scmp.eq.s32.totalorder %s27, 0
      %p227 = por %p225, %p226
      %s229 = sadd.s32 %s228, 1
      %p232 = scmp.eq.s32.totalorder %s21, 1
      %p233 = scmp.ne.s32.totalorder %s228, %s230
      %p234 = scmp.eq.s32.totalorder %s21, 0
      %p235 = por %p233, %p234
      %p236 = scmp.ne.s32.totalorder %s228, %s230
      %p237 = scmp.eq.s32.totalorder %s26, 1
      %p238 = por %p236, %p237
      %p239 = scmp.ne.s32.totalorder %s230, %s231
      %p240 = scmp.eq.s32.totalorder %s26, 0
      %p241 = por %p239, %p240
      %p242 = scmp.ne.s32.totalorder %s230, %s231
      %p243 = scmp.eq.s32.totalorder %s27, 1
      %p244 = por %p242, %p243
      %p246 = scmp.ne.s32.totalorder %s231, %s245
      %p247 = scmp.eq.s32.totalorder %s27, 0
      %p248 = por %p246, %p247
      %s249 = ssub.s32 %s21, %s28
      %p250 = scmp.eq.s32.totalorder %s249, 0
      %s252 = sadd.s32 %s251, 1
      %s253 = scalar_select %p250, %s251, %s252
      %p256 = pneg %p250
      %p257 = scmp.eq.s32.totalorder %s21, 1
      %p258 = por %p256, %p257
      %p259 = scmp.ne.s32.totalorder %s251, %s254
      %p260 = scmp.eq.s32.totalorder %s21, 0
      %p261 = por %p259, %p260
      %p262 = scmp.ne.s32.totalorder %s251, %s254
      %p263 = scmp.eq.s32.totalorder %s26, 1
      %p264 = por %p262, %p263
      %p265 = scmp.ne.s32.totalorder %s254, %s255
      %p266 = scmp.eq.s32.totalorder %s26, 0
      %p267 = por %p265, %p266
      %p268 = scmp.ne.s32.totalorder %s254, %s255
      %p269 = scmp.eq.s32.totalorder %s27, 1
      %p270 = por %p268, %p269
      %p272 = scmp.ne.s32.totalorder %s255, %s271
      %p273 = scmp.eq.s32.totalorder %s27, 0
      %p274 = por %p272, %p273
      %s275 = ssub.s32 %s21, %s28
      %p276 = scmp.eq.s32.totalorder %s275, 0
      %s278 = sadd.s32 %s277, 1
      %s279 = scalar_select %p276, %s277, %s278
      %p282 = pneg %p276
      %p283 = scmp.eq.s32.totalorder %s21, 1
      %p284 = por %p282, %p283
      %p285 = scmp.ne.s32.totalorder %s277, %s280
      %p286 = scmp.eq.s32.totalorder %s21, 0
      %p287 = por %p285, %p286
      %p288 = scmp.ne.s32.totalorder %s277, %s280
      %p289 = scmp.eq.s32.totalorder %s26, 1
      %p290 = por %p288, %p289
      %p291 = scmp.ne.s32.totalorder %s280, %s281
      %p292 = scmp.eq.s32.totalorder %s26, 0
      %p293 = por %p291, %p292
      %p294 = scmp.ne.s32.totalorder %s280, %s281
      %p295 = scmp.eq.s32.totalorder %s27, 1
      %p296 = por %p294, %p295
      %p298 = scmp.ne.s32.totalorder %s281, %s297
      %p299 = scmp.eq.s32.totalorder %s27, 0
      %p300 = por %p298, %p299
      %p301 = scmp.le.s32.totalorder 1, %s21
      %p302 = scmp.lt.s32.totalorder %s21, 3
      %p303 = pnand %p301, %p302
      %p304 = pneg %p303
      // Predicated region
      $region9: #{vae_forward.1} parent=5 // pred_check
        _
      $region10: #{vae_forward.1} parent=5 // pred_check_branch
        %306 = sbr.rel (%p303) target = $region12
      $region11: #{vae_forward.1} parent=5 // pred_region
        %s307 = ssub.s32 %s21, 1
        // Predicated region
        $region13: #{vae_forward.1} parent=11 // pred_check
          %p308 = pneg %p94
        $region14: #{vae_forward.1} parent=11 // pred_check_branch
          %310 = sbr.rel (%p308) target = $region16
        $region15: #{vae_forward.1} parent=11 // pred_region
          _
        $region16: #{vae_forward.1} parent=11 // pred_fallthru
          _
        // Predicated region
        $region17: #{vae_forward.1} parent=11 // pred_check
          %p311 = pneg %p115
        $region18: #{vae_forward.1} parent=11 // pred_check_branch
          %313 = sbr.rel (%p311) target = $region20
        $region19: #{vae_forward.1} parent=11 // pred_region
          _
        $region20: #{vae_forward.1} parent=11 // pred_fallthru
          _
        // Predicated region
        $region21: #{vae_forward.1} parent=11 // pred_check
          %p314 = pneg %p136
        $region22: #{vae_forward.1} parent=11 // pred_check_branch
          %316 = sbr.rel (%p314) target = $region24
        $region23: #{vae_forward.1} parent=11 // pred_region
          _
        $region24: #{vae_forward.1} parent=11 // pred_fallthru
          _
        // Predicated region
        $region25: #{vae_forward.1} parent=11 // pred_check
          %p317 = pneg %p157
        $region26: #{vae_forward.1} parent=11 // pred_check_branch
          %319 = sbr.rel (%p317) target = $region28
        $region27: #{vae_forward.1} parent=11 // pred_region
          _
        $region28: #{vae_forward.1} parent=11 // pred_fallthru
          _
        // Predicated region
        $region29: #{vae_forward.1} parent=11 // pred_check
          %p320 = pneg %p178
        $region30: #{vae_forward.1} parent=11 // pred_check_branch
          %322 = sbr.rel (%p320) target = $region32
        $region31: #{vae_forward.1} parent=11 // pred_region
          _
        $region32: #{vae_forward.1} parent=11 // pred_fallthru
          _
        // Predicated region
        $region33: #{vae_forward.1} parent=11 // pred_check
          %p323 = pneg %p199
        $region34: #{vae_forward.1} parent=11 // pred_check_branch
          %325 = sbr.rel (%p323) target = $region36
        $region35: #{vae_forward.1} parent=11 // pred_region
          _
        $region36: #{vae_forward.1} parent=11 // pred_fallthru
          _
        // Predicated region
        $region37: #{vae_forward.1} parent=11 // pred_check
          %p326 = pneg %p220
        $region38: #{vae_forward.1} parent=11 // pred_check_branch
          %328 = sbr.rel (%p326) target = $region40
        $region39: #{vae_forward.1} parent=11 // pred_region
          _
        $region40: #{vae_forward.1} parent=11 // pred_fallthru
          _
        // Predicated region
        $region41: #{vae_forward.1} parent=11 // pred_check
          %p329 = pneg %p241
        $region42: #{vae_forward.1} parent=11 // pred_check_branch
          %331 = sbr.rel (%p329) target = $region44
        $region43: #{vae_forward.1} parent=11 // pred_region
          _
        $region44: #{vae_forward.1} parent=11 // pred_fallthru
          _
      $region12: #{vae_forward.1} parent=5 // pred_fallthru
        _
      %p332 = scmp.lt.s32.totalorder %s21, 2
      // Predicated region
      $region45: #{vae_forward.1} parent=5 // pred_check
        %p333 = pneg %p332
      $region46: #{vae_forward.1} parent=5 // pred_check_branch
        %335 = sbr.rel (%p333) target = $region48
      $region47: #{vae_forward.1} parent=5 // pred_region
        // Predicated region
        $region49: #{vae_forward.1} parent=47 // pred_check
          %p336 = pneg %p41
        $region50: #{vae_forward.1} parent=47 // pred_check_branch
          %338 = sbr.rel (%p336) target = $region52
        $region51: #{vae_forward.1} parent=47 // pred_region
          %p339 = scmp.lt.s32.totalorder %s21, 1
          %s340 = scalar_select %p339, %s21, 1
          %s341 = smul.addr %s340, 7
          %s342 = smul.addr %s341, 4
          %s343 = scalar_lea.vmem %s0, %s342
        $region52: #{vae_forward.1} parent=47 // pred_fallthru
          _
        // Predicated region
        $region53: #{vae_forward.1} parent=47 // pred_check
          %p344 = pneg %p67
        $region54: #{vae_forward.1} parent=47 // pred_check_branch
          %346 = sbr.rel (%p344) target = $region56
        $region55: #{vae_forward.1} parent=47 // pred_region
          %p347 = scmp.lt.s32.totalorder %s21, 1
          %s348 = scalar_select %p347, %s21, 1
          %s349 = smul.addr %s348, 8
          %s350 = scalar_lea.vmem %s1, %s349
        $region56: #{vae_forward.1} parent=47 // pred_fallthru
          _
      $region48: #{vae_forward.1} parent=5 // pred_fallthru
        _
      %p351 = scmp.le.s32.totalorder 1, %s21
      %p352 = scmp.lt.s32.totalorder %s21, 3
      %p353 = pnand %p351, %p352
      %p354 = pneg %p353
      // Predicated region
      $region57: #{vae_forward.1} parent=5 // pred_check
        _
      $region58: #{vae_forward.1} parent=5 // pred_check_branch
        %356 = sbr.rel (%p353) target = $region60
      $region59: #{vae_forward.1} parent=5 // pred_region
        %s357 = ssub.s32 %s21, 1
        %p358 = scmp.lt.s32.totalorder %s26, 1
        %s359 = scalar_select %p358, %s26, 1
        %s360 = smul.addr %s359, 7
        %s361 = smul.addr %s360, 4
        %s362 = scalar_lea.vmem %s0, %s361
        %p363 = pneg %p47
        %p364 = pneg %p44
        %p365 = scmp.lt.s32.totalorder %s26, 1
        %s366 = scalar_select %p365, %s26, 1
        %s367 = smul.addr %s366, 8
        %s368 = scalar_lea.vmem %s1, %s367
        %p369 = pneg %p73
        %p370 = pneg %p70
        %p371 = pneg %p94
        %p372 = pneg %p91
        %p373 = pneg %p115
        %p374 = pneg %p112
        %p375 = pneg %p136
        %p376 = pneg %p133
        %p377 = pneg %p157
        %p378 = pneg %p154
        %p379 = pneg %p178
        %p380 = pneg %p175
        %p381 = pneg %p199
        %p382 = pneg %p196
        %p383 = pneg %p220
        %p384 = pneg %p217
        %p385 = pneg %p241
        %p386 = pneg %p238
        %p387 = pneg %p267
        %p388 = pneg %p264
        %s389 = sand.u32 %s254, 1
        %s390 = scalar_lea.sflag [#allocation3], %s389
        %s391 = sand.u32 %s254, 1
        %s392 = smul.addr %s391, 56
        %s393 = scalar_lea.vmem [#allocation2], %s392
        %p394 = pneg %p293
        %p395 = pneg %p290
        %p396 = scmp.lt.s32.totalorder %s26, 1
        %s397 = scalar_select %p396, %s26, 1
        %s398 = smul.addr %s397, 2
        %s399 = smul.addr %s398, 8
        %s400 = scalar_lea.vmem %s11, %s399
        %p401 = scmp.lt.s32.totalorder %s26, 1
        %s402 = scalar_select %p401, %s26, 1
        %s403 = smul.addr %s402, 7
        %s404 = smul.addr %s403, 4
        %s405 = scalar_lea.vmem %s0, %s404
        %p406 = scmp.lt.s32.totalorder %s26, 1
        %s407 = scalar_select %p406, %s26, 1
        %s408 = smul.addr %s407, 8
        %s409 = scalar_lea.vmem %s1, %s408
        %p410 = scmp.lt.s32.totalorder %s26, 1
        %s411 = scalar_select %p410, %s26, 1
        %s412 = smul.addr %s411, 2
        %s413 = smul.addr %s412, 8
        %s414 = scalar_lea.vmem %s11, %s413
        %v415 = vld [vmem:[%s405] sm:$0xff]
        %v416 = vld [vmem:[%s405 + $0x8] sm:$0xff]
        %v417 = vld [vmem:[%s405 + $0x10] sm:$0xff]
        %v418 = vld [vmem:[%s405 + $0x18] sm:$0xf]
        %v419 = vld [vmem:[%s2] sm:$0xff]
        %v420 = vld [vmem:[%s2 + $0x8] sm:$0xff]
        %v421 = vld [vmem:[%s2 + $0x10] sm:$0xff]
        %v422 = vld [vmem:[%s2 + $0x18] sm:$0xff]
        %v423 = vld [vmem:[%s2 + $0x20] sm:$0xff]
        %v424 = vld [vmem:[%s2 + $0x28] sm:$0xff]
        %v425 = vld [vmem:[%s2 + $0x30] sm:$0xff]
        %v426 = vld [vmem:[%s2 + $0x38] sm:$0xff]
        %v427 = vld [vmem:[%s2 + $0x40] sm:$0xff]
        %v428 = vld [vmem:[%s2 + $0x48] sm:$0xff]
        %v429 = vld [vmem:[%s2 + $0x50] sm:$0xff]
        %v430 = vld [vmem:[%s2 + $0x58] sm:$0xff]
        %v431 = vld [vmem:[%s2 + $0x60] sm:$0xff]
        %v432 = vld [vmem:[%s2 + $0x68] sm:$0xff]
        %v433 = vld [vmem:[%s2 + $0x70] sm:$0xff]
        %v434 = vld [vmem:[%s2 + $0x78] sm:$0xff]
        %v435 = vld [vmem:[%s2 + $0x80] sm:$0xff]
        %v436 = vld [vmem:[%s2 + $0x88] sm:$0xff]
        %v437 = vld [vmem:[%s2 + $0x90] sm:$0xff]
        %v438 = vld [vmem:[%s2 + $0x98] sm:$0xff]
        %v439 = vld [vmem:[%s2 + $0xa0] sm:$0xff]
        %v440 = vld [vmem:[%s2 + $0xa8] sm:$0xff]
        %v441 = vld [vmem:[%s2 + $0xb0] sm:$0xff]
        %v442 = vld [vmem:[%s2 + $0xb8] sm:$0xff]
        %v443 = vld [vmem:[%s2 + $0xc0] sm:$0xff]
        %v444 = vld [vmem:[%s2 + $0xc8] sm:$0xff]
        %v445 = vld [vmem:[%s2 + $0xd0] sm:$0xff]
        %v446 = vld [vmem:[%s2 + $0xd8] sm:$0xff]
        %v447 = vld [vmem:[%s2 + $0xe0] sm:$0xff]
        %v448 = vld [vmem:[%s2 + $0xe8] sm:$0xff]
        %v449 = vld [vmem:[%s2 + $0xf0] sm:$0xff]
        %v450 = vld [vmem:[%s2 + $0xf8] sm:$0xff]
        %v451 = vld [vmem:[%s2 + $0x100] sm:$0xff]
        %v452 = vld [vmem:[%s2 + $0x108] sm:$0xff]
        %v453 = vld [vmem:[%s2 + $0x110] sm:$0xff]
        %v454 = vld [vmem:[%s2 + $0x118] sm:$0xff]
        %v455 = vld [vmem:[%s2 + $0x120] sm:$0xff]
        %v456 = vld [vmem:[%s2 + $0x128] sm:$0xff]
        %v457 = vld [vmem:[%s2 + $0x130] sm:$0xff]
        %v458 = vld [vmem:[%s2 + $0x138] sm:$0xff]
        %v459 = vld [vmem:[%s2 + $0x140] sm:$0xff]
        %v460 = vld [vmem:[%s2 + $0x148] sm:$0xff]
        %v461 = vld [vmem:[%s2 + $0x150] sm:$0xff]
        %v462 = vld [vmem:[%s2 + $0x158] sm:$0xff]
        %v463 = vld [vmem:[%s2 + $0x160] sm:$0xff]
        %v464 = vld [vmem:[%s2 + $0x168] sm:$0xff]
        %v465 = vld [vmem:[%s2 + $0x170] sm:$0xff]
        %v466 = vld [vmem:[%s2 + $0x178] sm:$0xff]
        %v467 = vld [vmem:[%s2 + $0x180] sm:$0xff]
        %v468 = vld [vmem:[%s2 + $0x188] sm:$0xff]
        %v469 = vld [vmem:[%s2 + $0x190] sm:$0xff]
        %v470 = vld [vmem:[%s2 + $0x198] sm:$0xff]
        %v471 = vld [vmem:[%s2 + $0x1a0] sm:$0xff]
        %v472 = vld [vmem:[%s2 + $0x1a8] sm:$0xff]
        %v473 = vld [vmem:[%s2 + $0x1b0] sm:$0xff]
        %v474 = vld [vmem:[%s2 + $0x1b8] sm:$0xff]
        %v475 = vld [vmem:[%s2 + $0x1c0] sm:$0xff]
        %v476 = vld [vmem:[%s2 + $0x1c8] sm:$0xff]
        %v477 = vld [vmem:[%s2 + $0x1d0] sm:$0xff]
        %v478 = vld [vmem:[%s2 + $0x1d8] sm:$0xff]
        %v479 = vld [vmem:[%s2 + $0x1e0] sm:$0xff]
        %v480 = vld [vmem:[%s2 + $0x1e8] sm:$0xff]
        %v481 = vld [vmem:[%s2 + $0x1f0] sm:$0xff]
        %v482 = vld [vmem:[%s2 + $0x1f8] sm:$0xff]
        %v483 = vld [vmem:[%s2 + $0x200] sm:$0xff]
        %v484 = vld [vmem:[%s2 + $0x208] sm:$0xff]
        %v485 = vld [vmem:[%s2 + $0x210] sm:$0xff]
        %v486 = vld [vmem:[%s2 + $0x218] sm:$0xff]
        %v487 = vld [vmem:[%s2 + $0x220] sm:$0xff]
        %v488 = vld [vmem:[%s2 + $0x228] sm:$0xff]
        %v489 = vld [vmem:[%s2 + $0x230] sm:$0xff]
        %v490 = vld [vmem:[%s2 + $0x238] sm:$0xff]
        %v491 = vld [vmem:[%s2 + $0x240] sm:$0xff]
        %v492 = vld [vmem:[%s2 + $0x248] sm:$0xff]
        %v493 = vld [vmem:[%s2 + $0x250] sm:$0xff]
        %v494 = vld [vmem:[%s2 + $0x258] sm:$0xff]
        %v495 = vld [vmem:[%s2 + $0x260] sm:$0xff]
        %v496 = vld [vmem:[%s2 + $0x268] sm:$0xff]
        %v497 = vld [vmem:[%s2 + $0x270] sm:$0xff]
        %v498 = vld [vmem:[%s2 + $0x278] sm:$0xff]
        %v499 = vld [vmem:[%s2 + $0x280] sm:$0xff]
        %v500 = vld [vmem:[%s2 + $0x288] sm:$0xff]
        %v501 = vld [vmem:[%s2 + $0x290] sm:$0xff]
        %v502 = vld [vmem:[%s2 + $0x298] sm:$0xff]
        %v503 = vld [vmem:[%s2 + $0x2a0] sm:$0xff]
        %v504 = vld [vmem:[%s2 + $0x2a8] sm:$0xff]
        %v505 = vld [vmem:[%s2 + $0x2b0] sm:$0xff]
        %v506 = vld [vmem:[%s2 + $0x2b8] sm:$0xff]
        %v507 = vld [vmem:[%s2 + $0x2c0] sm:$0xff]
        %v508 = vld [vmem:[%s2 + $0x2c8] sm:$0xff]
        %v509 = vld [vmem:[%s2 + $0x2d0] sm:$0xff]
        %v510 = vld [vmem:[%s2 + $0x2d8] sm:$0xff]
        %v511 = vld [vmem:[%s2 + $0x2e0] sm:$0xff]
        %v512 = vld [vmem:[%s2 + $0x2e8] sm:$0xff]
        %v513 = vld [vmem:[%s2 + $0x2f0] sm:$0xff]
        %v514 = vld [vmem:[%s2 + $0x2f8] sm:$0xff]
        %v515 = vld [vmem:[%s2 + $0x300] sm:$0xff]
        %v516 = vld [vmem:[%s2 + $0x308] sm:$0xff]
        %v517 = vld [vmem:[%s2 + $0x310] sm:$0xff]
        %v518 = vld [vmem:[%s2 + $0x318] sm:$0xff]
        %v519 = vld [vmem:[%s2 + $0x320] sm:$0xff]
        %v520 = vld [vmem:[%s2 + $0x328] sm:$0xff]
        %v521 = vld [vmem:[%s2 + $0x330] sm:$0xff]
        %v522 = vld [vmem:[%s2 + $0x338] sm:$0xff]
        %v523 = vld [vmem:[%s2 + $0x340] sm:$0xff]
        %v524 = vld [vmem:[%s2 + $0x348] sm:$0xff]
        %v525 = vld [vmem:[%s2 + $0x350] sm:$0xff]
        %v526 = vld [vmem:[%s2 + $0x358] sm:$0xff]
        %v527 = vld [vmem:[%s2 + $0x360] sm:$0xff]
        %v528 = vld [vmem:[%s2 + $0x368] sm:$0xff]
        %v529 = vld [vmem:[%s2 + $0x370] sm:$0xff]
        %v530 = vld [vmem:[%s2 + $0x378] sm:$0xff]
        %v531 = vld [vmem:[%s2 + $0x380] sm:$0xff]
        %v532 = vld [vmem:[%s2 + $0x388] sm:$0xff]
        %v533 = vld [vmem:[%s2 + $0x390] sm:$0xff]
        %v534 = vld [vmem:[%s2 + $0x398] sm:$0xff]
        %v535 = vld [vmem:[%s2 + $0x3a0] sm:$0xff]
        %v536 = vld [vmem:[%s2 + $0x3a8] sm:$0xff]
        %v537 = vld [vmem:[%s2 + $0x3b0] sm:$0xff]
        %v538 = vld [vmem:[%s2 + $0x3b8] sm:$0xff]
        %v539 = vld [vmem:[%s2 + $0x3c0] sm:$0xff]
        %v540 = vld [vmem:[%s2 + $0x3c8] sm:$0xff]
        %v541 = vld [vmem:[%s2 + $0x3d0] sm:$0xff]
        %v542 = vld [vmem:[%s2 + $0x3d8] sm:$0xff]
        %v543 = vld [vmem:[%s2 + $0x3e0] sm:$0xff]
        %v544 = vld [vmem:[%s2 + $0x3e8] sm:$0xff]
        %v545 = vld [vmem:[%s2 + $0x3f0] sm:$0xff]
        %v546 = vld [vmem:[%s2 + $0x3f8] sm:$0xff]
        %v547 = vld [vmem:[%s2 + $0x400] sm:$0xff]
        %v548 = vld [vmem:[%s2 + $0x408] sm:$0xff]
        %v549 = vld [vmem:[%s2 + $0x410] sm:$0xff]
        %v550 = vld [vmem:[%s2 + $0x418] sm:$0xff]
        %v551 = vld [vmem:[%s2 + $0x420] sm:$0xff]
        %v552 = vld [vmem:[%s2 + $0x428] sm:$0xff]
        %v553 = vld [vmem:[%s2 + $0x430] sm:$0xff]
        %v554 = vld [vmem:[%s2 + $0x438] sm:$0xff]
        %v555 = vld [vmem:[%s2 + $0x440] sm:$0xff]
        %v556 = vld [vmem:[%s2 + $0x448] sm:$0xff]
        %v557 = vld [vmem:[%s2 + $0x450] sm:$0xff]
        %v558 = vld [vmem:[%s2 + $0x458] sm:$0xff]
        %v559 = vld [vmem:[%s2 + $0x460] sm:$0xff]
        %v560 = vld [vmem:[%s2 + $0x468] sm:$0xff]
        %v561 = vld [vmem:[%s2 + $0x470] sm:$0xff]
        %v562 = vld [vmem:[%s2 + $0x478] sm:$0xff]
        %v563 = vld [vmem:[%s2 + $0x480] sm:$0xff]
        %v564 = vld [vmem:[%s2 + $0x488] sm:$0xff]
        %v565 = vld [vmem:[%s2 + $0x490] sm:$0xff]
        %v566 = vld [vmem:[%s2 + $0x498] sm:$0xff]
        %v567 = vld [vmem:[%s2 + $0x4a0] sm:$0xff]
        %v568 = vld [vmem:[%s2 + $0x4a8] sm:$0xff]
        %v569 = vld [vmem:[%s2 + $0x4b0] sm:$0xff]
        %v570 = vld [vmem:[%s2 + $0x4b8] sm:$0xff]
        %v571 = vld [vmem:[%s2 + $0x4c0] sm:$0xff]
        %v572 = vld [vmem:[%s2 + $0x4c8] sm:$0xff]
        %v573 = vld [vmem:[%s2 + $0x4d0] sm:$0xff]
        %v574 = vld [vmem:[%s2 + $0x4d8] sm:$0xff]
        %v575 = vld [vmem:[%s2 + $0x4e0] sm:$0xff]
        %v576 = vld [vmem:[%s2 + $0x4e8] sm:$0xff]
        %v577 = vld [vmem:[%s2 + $0x4f0] sm:$0xff]
        %v578 = vld [vmem:[%s2 + $0x4f8] sm:$0xff]
        %v579 = vld [vmem:[%s2 + $0x500] sm:$0xff]
        %v580 = vld [vmem:[%s2 + $0x508] sm:$0xff]
        %v581 = vld [vmem:[%s2 + $0x510] sm:$0xff]
        %v582 = vld [vmem:[%s2 + $0x518] sm:$0xff]
        %v583 = vld [vmem:[%s2 + $0x520] sm:$0xff]
        %v584 = vld [vmem:[%s2 + $0x528] sm:$0xff]
        %v585 = vld [vmem:[%s2 + $0x530] sm:$0xff]
        %v586 = vld [vmem:[%s2 + $0x538] sm:$0xff]
        %v587 = vld [vmem:[%s2 + $0x540] sm:$0xff]
        %v588 = vld [vmem:[%s2 + $0x548] sm:$0xff]
        %v589 = vld [vmem:[%s2 + $0x550] sm:$0xff]
        %v590 = vld [vmem:[%s2 + $0x558] sm:$0xff]
        %v591 = vld [vmem:[%s2 + $0x560] sm:$0xff]
        %v592 = vld [vmem:[%s2 + $0x568] sm:$0xff]
        %v593 = vld [vmem:[%s2 + $0x570] sm:$0xff]
        %v594 = vld [vmem:[%s2 + $0x578] sm:$0xff]
        %v595 = vld [vmem:[%s2 + $0x580] sm:$0xff]
        %v596 = vld [vmem:[%s2 + $0x588] sm:$0xff]
        %v597 = vld [vmem:[%s2 + $0x590] sm:$0xff]
        %v598 = vld [vmem:[%s2 + $0x598] sm:$0xff]
        %v599 = vld [vmem:[%s2 + $0x5a0] sm:$0xff]
        %v600 = vld [vmem:[%s2 + $0x5a8] sm:$0xff]
        %v601 = vld [vmem:[%s2 + $0x5b0] sm:$0xff]
        %v602 = vld [vmem:[%s2 + $0x5b8] sm:$0xff]
        %v603 = vld [vmem:[%s2 + $0x5c0] sm:$0xff]
        %v604 = vld [vmem:[%s2 + $0x5c8] sm:$0xff]
        %v605 = vld [vmem:[%s2 + $0x5d0] sm:$0xff]
        %v606 = vld [vmem:[%s2 + $0x5d8] sm:$0xff]
        %v607 = vld [vmem:[%s2 + $0x5e0] sm:$0xff]
        %v608 = vld [vmem:[%s2 + $0x5e8] sm:$0xff]
        %v609 = vld [vmem:[%s2 + $0x5f0] sm:$0xff]
        %v610 = vld [vmem:[%s2 + $0x5f8] sm:$0xff]
        %v611 = vld [vmem:[%s2 + $0x600] sm:$0xff]
        %v612 = vld [vmem:[%s2 + $0x608] sm:$0xff]
        %v613 = vld [vmem:[%s2 + $0x610] sm:$0xff]
        %v614 = vld [vmem:[%s2 + $0x618] sm:$0xff]
        %v615 = vld [vmem:[%s2 + $0x620] sm:$0xff]
        %v616 = vld [vmem:[%s2 + $0x628] sm:$0xff]
        %v617 = vld [vmem:[%s2 + $0x630] sm:$0xff]
        %v618 = vld [vmem:[%s2 + $0x638] sm:$0xff]
        %v619 = vld [vmem:[%s2 + $0x640] sm:$0xff]
        %v620 = vld [vmem:[%s2 + $0x648] sm:$0xff]
        %v621 = vld [vmem:[%s2 + $0x650] sm:$0xff]
        %v622 = vld [vmem:[%s2 + $0x658] sm:$0xff]
        %v623 = vld [vmem:[%s2 + $0x660] sm:$0xff]
        %v624 = vld [vmem:[%s2 + $0x668] sm:$0xff]
        %v625 = vld [vmem:[%s2 + $0x670] sm:$0xff]
        %v626 = vld [vmem:[%s2 + $0x678] sm:$0xff]
        %v627 = vld [vmem:[%s2 + $0x680] sm:$0xff]
        %v628 = vld [vmem:[%s2 + $0x688] sm:$0xff]
        %v629 = vld [vmem:[%s2 + $0x690] sm:$0xff]
        %v630 = vld [vmem:[%s2 + $0x698] sm:$0xff]
        %v631 = vld [vmem:[%s2 + $0x6a0] sm:$0xff]
        %v632 = vld [vmem:[%s2 + $0x6a8] sm:$0xff]
        %v633 = vld [vmem:[%s2 + $0x6b0] sm:$0xff]
        %v634 = vld [vmem:[%s2 + $0x6b8] sm:$0xff]
        %v635 = vld [vmem:[%s2 + $0x6c0] sm:$0xff]
        %v636 = vld [vmem:[%s2 + $0x6c8] sm:$0xff]
        %v637 = vld [vmem:[%s2 + $0x6d0] sm:$0xff]
        %v638 = vld [vmem:[%s2 + $0x6d8] sm:$0xff]
        %v639 = vld [vmem:[%s2 + $0x6e0] sm:$0xff]
        %v640 = vld [vmem:[%s2 + $0x6e8] sm:$0xff]
        %v641 = vld [vmem:[%s2 + $0x6f0] sm:$0xff]
        %v642 = vld [vmem:[%s2 + $0x6f8] sm:$0xff]
        %v643 = vld [vmem:[%s3] sm:$0xf]
        %v645 = vperm.slane %v643, 0
        %v646 = vperm.slane %v643, 1
        %v647 = vperm.slane %v643, 2
        %v648 = vperm.slane %v643, 3
        %v657 = vunpack.c.l.b16 %v415
        %v658 = vunpack.c.h.b16 %v415
        %v659 = vunpack.c.l.b16 %v416
        %v660 = vunpack.c.h.b16 %v416
        %v661 = vunpack.c.l.b16 %v417
        %v662 = vunpack.c.h.b16 %v417
        %v663 = vunpack.c.l.b16 %v418
        %v664 = vpack.c.b16 %v657, %v657
        %v665 = vpack.c.b16 %v658, %v658
        %v666 = vpack.c.b16 %v659, %v659
        %v667 = vpack.c.b16 %v660, %v660
        %v668 = vpack.c.b16 %v661, %v661
        %v669 = vpack.c.b16 %v662, %v662
        %v670 = vpack.c.b16 %v663, %v663
        %v902 = vunpack.c.l.b16 %v419
        %v903 = vunpack.c.h.b16 %v419
        %v904 = vunpack.c.l.b16 %v420
        %v905 = vunpack.c.h.b16 %v420
        %v906 = vunpack.c.l.b16 %v421
        %v907 = vunpack.c.h.b16 %v421
        %v908 = vunpack.c.l.b16 %v422
        %v909 = vunpack.c.h.b16 %v422
        %v910 = vunpack.c.l.b16 %v423
        %v911 = vunpack.c.h.b16 %v423
        %v912 = vunpack.c.l.b16 %v424
        %v913 = vunpack.c.h.b16 %v424
        %v914 = vunpack.c.l.b16 %v425
        %v915 = vunpack.c.h.b16 %v425
        %v916 = vunpack.c.l.b16 %v426
        %v917 = vunpack.c.h.b16 %v426
        %v918 = vunpack.c.l.b16 %v427
        %v919 = vunpack.c.h.b16 %v427
        %v920 = vunpack.c.l.b16 %v428
        %v921 = vunpack.c.h.b16 %v428
        %v922 = vunpack.c.l.b16 %v429
        %v923 = vunpack.c.h.b16 %v429
        %v924 = vunpack.c.l.b16 %v430
        %v925 = vunpack.c.h.b16 %v430
        %v926 = vunpack.c.l.b16 %v431
        %v927 = vunpack.c.h.b16 %v431
        %v928 = vunpack.c.l.b16 %v432
        %v929 = vunpack.c.h.b16 %v432
        %v930 = vunpack.c.l.b16 %v433
        %v931 = vunpack.c.h.b16 %v433
        %v932 = vunpack.c.l.b16 %v434
        %v933 = vunpack.c.h.b16 %v434
        %v934 = vunpack.c.l.b16 %v435
        %v935 = vunpack.c.h.b16 %v435
        %v936 = vunpack.c.l.b16 %v436
        %v937 = vunpack.c.h.b16 %v436
        %v938 = vunpack.c.l.b16 %v437
        %v939 = vunpack.c.h.b16 %v437
        %v940 = vunpack.c.l.b16 %v438
        %v941 = vunpack.c.h.b16 %v438
        %v942 = vunpack.c.l.b16 %v439
        %v943 = vunpack.c.h.b16 %v439
        %v944 = vunpack.c.l.b16 %v440
        %v945 = vunpack.c.h.b16 %v440
        %v946 = vunpack.c.l.b16 %v441
        %v947 = vunpack.c.h.b16 %v441
        %v948 = vunpack.c.l.b16 %v442
        %v949 = vunpack.c.h.b16 %v442
        %v950 = vunpack.c.l.b16 %v443
        %v951 = vunpack.c.h.b16 %v443
        %v952 = vunpack.c.l.b16 %v444
        %v953 = vunpack.c.h.b16 %v444
        %v954 = vunpack.c.l.b16 %v445
        %v955 = vunpack.c.h.b16 %v445
        %v956 = vunpack.c.l.b16 %v446
        %v957 = vunpack.c.h.b16 %v446
        %v958 = vunpack.c.l.b16 %v447
        %v959 = vunpack.c.h.b16 %v447
        %v960 = vunpack.c.l.b16 %v448
        %v961 = vunpack.c.h.b16 %v448
        %v962 = vunpack.c.l.b16 %v449
        %v963 = vunpack.c.h.b16 %v449
        %v964 = vunpack.c.l.b16 %v450
        %v965 = vunpack.c.h.b16 %v450
        %v966 = vunpack.c.l.b16 %v451
        %v967 = vunpack.c.h.b16 %v451
        %v968 = vunpack.c.l.b16 %v452
        %v969 = vunpack.c.h.b16 %v452
        %v970 = vunpack.c.l.b16 %v453
        %v971 = vunpack.c.h.b16 %v453
        %v972 = vunpack.c.l.b16 %v454
        %v973 = vunpack.c.h.b16 %v454
        %v974 = vunpack.c.l.b16 %v455
        %v975 = vunpack.c.h.b16 %v455
        %v976 = vunpack.c.l.b16 %v456
        %v977 = vunpack.c.h.b16 %v456
        %v978 = vunpack.c.l.b16 %v457
        %v979 = vunpack.c.h.b16 %v457
        %v980 = vunpack.c.l.b16 %v458
        %v981 = vunpack.c.h.b16 %v458
        %v982 = vunpack.c.l.b16 %v459
        %v983 = vunpack.c.h.b16 %v459
        %v984 = vunpack.c.l.b16 %v460
        %v985 = vunpack.c.h.b16 %v460
        %v986 = vunpack.c.l.b16 %v461
        %v987 = vunpack.c.h.b16 %v461
        %v988 = vunpack.c.l.b16 %v462
        %v989 = vunpack.c.h.b16 %v462
        %v990 = vunpack.c.l.b16 %v463
        %v991 = vunpack.c.h.b16 %v463
        %v992 = vunpack.c.l.b16 %v464
        %v993 = vunpack.c.h.b16 %v464
        %v994 = vunpack.c.l.b16 %v465
        %v995 = vunpack.c.h.b16 %v465
        %v996 = vunpack.c.l.b16 %v466
        %v997 = vunpack.c.h.b16 %v466
        %v998 = vunpack.c.l.b16 %v467
        %v999 = vunpack.c.h.b16 %v467
        %v1000 = vunpack.c.l.b16 %v468
        %v1001 = vunpack.c.h.b16 %v468
        %v1002 = vunpack.c.l.b16 %v469
        %v1003 = vunpack.c.h.b16 %v469
        %v1004 = vunpack.c.l.b16 %v470
        %v1005 = vunpack.c.h.b16 %v470
        %v1006 = vunpack.c.l.b16 %v471
        %v1007 = vunpack.c.h.b16 %v471
        %v1008 = vunpack.c.l.b16 %v472
        %v1009 = vunpack.c.h.b16 %v472
        %v1010 = vunpack.c.l.b16 %v473
        %v1011 = vunpack.c.h.b16 %v473
        %v1012 = vunpack.c.l.b16 %v474
        %v1013 = vunpack.c.h.b16 %v474
        %v1014 = vunpack.c.l.b16 %v475
        %v1015 = vunpack.c.h.b16 %v475
        %v1016 = vunpack.c.l.b16 %v476
        %v1017 = vunpack.c.h.b16 %v476
        %v1018 = vunpack.c.l.b16 %v477
        %v1019 = vunpack.c.h.b16 %v477
        %v1020 = vunpack.c.l.b16 %v478
        %v1021 = vunpack.c.h.b16 %v478
        %v1022 = vunpack.c.l.b16 %v479
        %v1023 = vunpack.c.h.b16 %v479
        %v1024 = vunpack.c.l.b16 %v480
        %v1025 = vunpack.c.h.b16 %v480
        %v1026 = vunpack.c.l.b16 %v481
        %v1027 = vunpack.c.h.b16 %v481
        %v1028 = vunpack.c.l.b16 %v482
        %v1029 = vunpack.c.h.b16 %v482
        %v1030 = vunpack.c.l.b16 %v483
        %v1031 = vunpack.c.h.b16 %v483
        %v1032 = vunpack.c.l.b16 %v484
        %v1033 = vunpack.c.h.b16 %v484
        %v1034 = vunpack.c.l.b16 %v485
        %v1035 = vunpack.c.h.b16 %v485
        %v1036 = vunpack.c.l.b16 %v486
        %v1037 = vunpack.c.h.b16 %v486
        %v1038 = vunpack.c.l.b16 %v487
        %v1039 = vunpack.c.h.b16 %v487
        %v1040 = vunpack.c.l.b16 %v488
        %v1041 = vunpack.c.h.b16 %v488
        %v1042 = vunpack.c.l.b16 %v489
        %v1043 = vunpack.c.h.b16 %v489
        %v1044 = vunpack.c.l.b16 %v490
        %v1045 = vunpack.c.h.b16 %v490
        %v1046 = vunpack.c.l.b16 %v491
        %v1047 = vunpack.c.h.b16 %v491
        %v1048 = vunpack.c.l.b16 %v492
        %v1049 = vunpack.c.h.b16 %v492
        %v1050 = vunpack.c.l.b16 %v493
        %v1051 = vunpack.c.h.b16 %v493
        %v1052 = vunpack.c.l.b16 %v494
        %v1053 = vunpack.c.h.b16 %v494
        %v1054 = vunpack.c.l.b16 %v495
        %v1055 = vunpack.c.h.b16 %v495
        %v1056 = vunpack.c.l.b16 %v496
        %v1057 = vunpack.c.h.b16 %v496
        %v1058 = vunpack.c.l.b16 %v497
        %v1059 = vunpack.c.h.b16 %v497
        %v1060 = vunpack.c.l.b16 %v498
        %v1061 = vunpack.c.h.b16 %v498
        %v1062 = vunpack.c.l.b16 %v499
        %v1063 = vunpack.c.h.b16 %v499
        %v1064 = vunpack.c.l.b16 %v500
        %v1065 = vunpack.c.h.b16 %v500
        %v1066 = vunpack.c.l.b16 %v501
        %v1067 = vunpack.c.h.b16 %v501
        %v1068 = vunpack.c.l.b16 %v502
        %v1069 = vunpack.c.h.b16 %v502
        %v1070 = vunpack.c.l.b16 %v503
        %v1071 = vunpack.c.h.b16 %v503
        %v1072 = vunpack.c.l.b16 %v504
        %v1073 = vunpack.c.h.b16 %v504
        %v1074 = vunpack.c.l.b16 %v505
        %v1075 = vunpack.c.h.b16 %v505
        %v1076 = vunpack.c.l.b16 %v506
        %v1077 = vunpack.c.h.b16 %v506
        %v1078 = vunpack.c.l.b16 %v507
        %v1079 = vunpack.c.h.b16 %v507
        %v1080 = vunpack.c.l.b16 %v508
        %v1081 = vunpack.c.h.b16 %v508
        %v1082 = vunpack.c.l.b16 %v509
        %v1083 = vunpack.c.h.b16 %v509
        %v1084 = vunpack.c.l.b16 %v510
        %v1085 = vunpack.c.h.b16 %v510
        %v1086 = vunpack.c.l.b16 %v511
        %v1087 = vunpack.c.h.b16 %v511
        %v1088 = vunpack.c.l.b16 %v512
        %v1089 = vunpack.c.h.b16 %v512
        %v1090 = vunpack.c.l.b16 %v513
        %v1091 = vunpack.c.h.b16 %v513
        %v1092 = vunpack.c.l.b16 %v514
        %v1093 = vunpack.c.h.b16 %v514
        %v1094 = vunpack.c.l.b16 %v515
        %v1095 = vunpack.c.h.b16 %v515
        %v1096 = vunpack.c.l.b16 %v516
        %v1097 = vunpack.c.h.b16 %v516
        %v1098 = vunpack.c.l.b16 %v517
        %v1099 = vunpack.c.h.b16 %v517
        %v1100 = vunpack.c.l.b16 %v518
        %v1101 = vunpack.c.h.b16 %v518
        %v1102 = vunpack.c.l.b16 %v519
        %v1103 = vunpack.c.h.b16 %v519
        %v1104 = vunpack.c.l.b16 %v520
        %v1105 = vunpack.c.h.b16 %v520
        %v1106 = vunpack.c.l.b16 %v521
        %v1107 = vunpack.c.h.b16 %v521
        %v1108 = vunpack.c.l.b16 %v522
        %v1109 = vunpack.c.h.b16 %v522
        %v1110 = vunpack.c.l.b16 %v523
        %v1111 = vunpack.c.h.b16 %v523
        %v1112 = vunpack.c.l.b16 %v524
        %v1113 = vunpack.c.h.b16 %v524
        %v1114 = vunpack.c.l.b16 %v525
        %v1115 = vunpack.c.h.b16 %v525
        %v1116 = vunpack.c.l.b16 %v526
        %v1117 = vunpack.c.h.b16 %v526
        %v1118 = vunpack.c.l.b16 %v527
        %v1119 = vunpack.c.h.b16 %v527
        %v1120 = vunpack.c.l.b16 %v528
        %v1121 = vunpack.c.h.b16 %v528
        %v1122 = vunpack.c.l.b16 %v529
        %v1123 = vunpack.c.h.b16 %v529
        %v1124 = vunpack.c.l.b16 %v530
        %v1125 = vunpack.c.h.b16 %v530
        %v1126 = vunpack.c.l.b16 %v531
        %v1127 = vunpack.c.h.b16 %v531
        %v1128 = vunpack.c.l.b16 %v532
        %v1129 = vunpack.c.h.b16 %v532
        %v1130 = vunpack.c.l.b16 %v533
        %v1131 = vunpack.c.h.b16 %v533
        %v1132 = vunpack.c.l.b16 %v534
        %v1133 = vunpack.c.h.b16 %v534
        %v1134 = vunpack.c.l.b16 %v535
        %v1135 = vunpack.c.h.b16 %v535
        %v1136 = vunpack.c.l.b16 %v536
        %v1137 = vunpack.c.h.b16 %v536
        %v1138 = vunpack.c.l.b16 %v537
        %v1139 = vunpack.c.h.b16 %v537
        %v1140 = vunpack.c.l.b16 %v538
        %v1141 = vunpack.c.h.b16 %v538
        %v1142 = vunpack.c.l.b16 %v539
        %v1143 = vunpack.c.h.b16 %v539
        %v1144 = vunpack.c.l.b16 %v540
        %v1145 = vunpack.c.h.b16 %v540
        %v1146 = vunpack.c.l.b16 %v541
        %v1147 = vunpack.c.h.b16 %v541
        %v1148 = vunpack.c.l.b16 %v542
        %v1149 = vunpack.c.h.b16 %v542
        %v1150 = vunpack.c.l.b16 %v543
        %v1151 = vunpack.c.h.b16 %v543
        %v1152 = vunpack.c.l.b16 %v544
        %v1153 = vunpack.c.h.b16 %v544
        %v1154 = vunpack.c.l.b16 %v545
        %v1155 = vunpack.c.h.b16 %v545
        %v1156 = vunpack.c.l.b16 %v546
        %v1157 = vunpack.c.h.b16 %v546
        %v1158 = vunpack.c.l.b16 %v547
        %v1159 = vunpack.c.h.b16 %v547
        %v1160 = vunpack.c.l.b16 %v548
        %v1161 = vunpack.c.h.b16 %v548
        %v1162 = vunpack.c.l.b16 %v549
        %v1163 = vunpack.c.h.b16 %v549
        %v1164 = vunpack.c.l.b16 %v550
        %v1165 = vunpack.c.h.b16 %v550
        %v1166 = vunpack.c.l.b16 %v551
        %v1167 = vunpack.c.h.b16 %v551
        %v1168 = vunpack.c.l.b16 %v552
        %v1169 = vunpack.c.h.b16 %v552
        %v1170 = vunpack.c.l.b16 %v553
        %v1171 = vunpack.c.h.b16 %v553
        %v1172 = vunpack.c.l.b16 %v554
        %v1173 = vunpack.c.h.b16 %v554
        %v1174 = vunpack.c.l.b16 %v555
        %v1175 = vunpack.c.h.b16 %v555
        %v1176 = vunpack.c.l.b16 %v556
        %v1177 = vunpack.c.h.b16 %v556
        %v1178 = vunpack.c.l.b16 %v557
        %v1179 = vunpack.c.h.b16 %v557
        %v1180 = vunpack.c.l.b16 %v558
        %v1181 = vunpack.c.h.b16 %v558
        %v1182 = vunpack.c.l.b16 %v559
        %v1183 = vunpack.c.h.b16 %v559
        %v1184 = vunpack.c.l.b16 %v560
        %v1185 = vunpack.c.h.b16 %v560
        %v1186 = vunpack.c.l.b16 %v561
        %v1187 = vunpack.c.h.b16 %v561
        %v1188 = vunpack.c.l.b16 %v562
        %v1189 = vunpack.c.h.b16 %v562
        %v1190 = vunpack.c.l.b16 %v563
        %v1191 = vunpack.c.h.b16 %v563
        %v1192 = vunpack.c.l.b16 %v564
        %v1193 = vunpack.c.h.b16 %v564
        %v1194 = vunpack.c.l.b16 %v565
        %v1195 = vunpack.c.h.b16 %v565
        %v1196 = vunpack.c.l.b16 %v566
        %v1197 = vunpack.c.h.b16 %v566
        %v1198 = vunpack.c.l.b16 %v567
        %v1199 = vunpack.c.h.b16 %v567
        %v1200 = vunpack.c.l.b16 %v568
        %v1201 = vunpack.c.h.b16 %v568
        %v1202 = vunpack.c.l.b16 %v569
        %v1203 = vunpack.c.h.b16 %v569
        %v1204 = vunpack.c.l.b16 %v570
        %v1205 = vunpack.c.h.b16 %v570
        %v1206 = vunpack.c.l.b16 %v571
        %v1207 = vunpack.c.h.b16 %v571
        %v1208 = vunpack.c.l.b16 %v572
        %v1209 = vunpack.c.h.b16 %v572
        %v1210 = vunpack.c.l.b16 %v573
        %v1211 = vunpack.c.h.b16 %v573
        %v1212 = vunpack.c.l.b16 %v574
        %v1213 = vunpack.c.h.b16 %v574
        %v1214 = vunpack.c.l.b16 %v575
        %v1215 = vunpack.c.h.b16 %v575
        %v1216 = vunpack.c.l.b16 %v576
        %v1217 = vunpack.c.h.b16 %v576
        %v1218 = vunpack.c.l.b16 %v577
        %v1219 = vunpack.c.h.b16 %v577
        %v1220 = vunpack.c.l.b16 %v578
        %v1221 = vunpack.c.h.b16 %v578
        %v1222 = vunpack.c.l.b16 %v579
        %v1223 = vunpack.c.h.b16 %v579
        %v1224 = vunpack.c.l.b16 %v580
        %v1225 = vunpack.c.h.b16 %v580
        %v1226 = vunpack.c.l.b16 %v581
        %v1227 = vunpack.c.h.b16 %v581
        %v1228 = vunpack.c.l.b16 %v582
        %v1229 = vunpack.c.h.b16 %v582
        %v1230 = vunpack.c.l.b16 %v583
        %v1231 = vunpack.c.h.b16 %v583
        %v1232 = vunpack.c.l.b16 %v584
        %v1233 = vunpack.c.h.b16 %v584
        %v1234 = vunpack.c.l.b16 %v585
        %v1235 = vunpack.c.h.b16 %v585
        %v1236 = vunpack.c.l.b16 %v586
        %v1237 = vunpack.c.h.b16 %v586
        %v1238 = vunpack.c.l.b16 %v587
        %v1239 = vunpack.c.h.b16 %v587
        %v1240 = vunpack.c.l.b16 %v588
        %v1241 = vunpack.c.h.b16 %v588
        %v1242 = vunpack.c.l.b16 %v589
        %v1243 = vunpack.c.h.b16 %v589
        %v1244 = vunpack.c.l.b16 %v590
        %v1245 = vunpack.c.h.b16 %v590
        %v1246 = vunpack.c.l.b16 %v591
        %v1247 = vunpack.c.h.b16 %v591
        %v1248 = vunpack.c.l.b16 %v592
        %v1249 = vunpack.c.h.b16 %v592
        %v1250 = vunpack.c.l.b16 %v593
        %v1251 = vunpack.c.h.b16 %v593
        %v1252 = vunpack.c.l.b16 %v594
        %v1253 = vunpack.c.h.b16 %v594
        %v1254 = vunpack.c.l.b16 %v595
        %v1255 = vunpack.c.h.b16 %v595
        %v1256 = vunpack.c.l.b16 %v596
        %v1257 = vunpack.c.h.b16 %v596
        %v1258 = vunpack.c.l.b16 %v597
        %v1259 = vunpack.c.h.b16 %v597
        %v1260 = vunpack.c.l.b16 %v598
        %v1261 = vunpack.c.h.b16 %v598
        %v1262 = vunpack.c.l.b16 %v599
        %v1263 = vunpack.c.h.b16 %v599
        %v1264 = vunpack.c.l.b16 %v600
        %v1265 = vunpack.c.h.b16 %v600
        %v1266 = vunpack.c.l.b16 %v601
        %v1267 = vunpack.c.h.b16 %v601
        %v1268 = vunpack.c.l.b16 %v602
        %v1269 = vunpack.c.h.b16 %v602
        %v1270 = vunpack.c.l.b16 %v603
        %v1271 = vunpack.c.h.b16 %v603
        %v1272 = vunpack.c.l.b16 %v604
        %v1273 = vunpack.c.h.b16 %v604
        %v1274 = vunpack.c.l.b16 %v605
        %v1275 = vunpack.c.h.b16 %v605
        %v1276 = vunpack.c.l.b16 %v606
        %v1277 = vunpack.c.h.b16 %v606
        %v1278 = vunpack.c.l.b16 %v607
        %v1279 = vunpack.c.h.b16 %v607
        %v1280 = vunpack.c.l.b16 %v608
        %v1281 = vunpack.c.h.b16 %v608
        %v1282 = vunpack.c.l.b16 %v609
        %v1283 = vunpack.c.h.b16 %v609
        %v1284 = vunpack.c.l.b16 %v610
        %v1285 = vunpack.c.h.b16 %v610
        %v1286 = vunpack.c.l.b16 %v611
        %v1287 = vunpack.c.h.b16 %v611
        %v1288 = vunpack.c.l.b16 %v612
        %v1289 = vunpack.c.h.b16 %v612
        %v1290 = vunpack.c.l.b16 %v613
        %v1291 = vunpack.c.h.b16 %v613
        %v1292 = vunpack.c.l.b16 %v614
        %v1293 = vunpack.c.h.b16 %v614
        %v1294 = vunpack.c.l.b16 %v615
        %v1295 = vunpack.c.h.b16 %v615
        %v1296 = vunpack.c.l.b16 %v616
        %v1297 = vunpack.c.h.b16 %v616
        %v1298 = vunpack.c.l.b16 %v617
        %v1299 = vunpack.c.h.b16 %v617
        %v1300 = vunpack.c.l.b16 %v618
        %v1301 = vunpack.c.h.b16 %v618
        %v1302 = vunpack.c.l.b16 %v619
        %v1303 = vunpack.c.h.b16 %v619
        %v1304 = vunpack.c.l.b16 %v620
        %v1305 = vunpack.c.h.b16 %v620
        %v1306 = vunpack.c.l.b16 %v621
        %v1307 = vunpack.c.h.b16 %v621
        %v1308 = vunpack.c.l.b16 %v622
        %v1309 = vunpack.c.h.b16 %v622
        %v1310 = vunpack.c.l.b16 %v623
        %v1311 = vunpack.c.h.b16 %v623
        %v1312 = vunpack.c.l.b16 %v624
        %v1313 = vunpack.c.h.b16 %v624
        %v1314 = vunpack.c.l.b16 %v625
        %v1315 = vunpack.c.h.b16 %v625
        %v1316 = vunpack.c.l.b16 %v626
        %v1317 = vunpack.c.h.b16 %v626
        %v1318 = vunpack.c.l.b16 %v627
        %v1319 = vunpack.c.h.b16 %v627
        %v1320 = vunpack.c.l.b16 %v628
        %v1321 = vunpack.c.h.b16 %v628
        %v1322 = vunpack.c.l.b16 %v629
        %v1323 = vunpack.c.h.b16 %v629
        %v1324 = vunpack.c.l.b16 %v630
        %v1325 = vunpack.c.h.b16 %v630
        %v1326 = vunpack.c.l.b16 %v631
        %v1327 = vunpack.c.h.b16 %v631
        %v1328 = vunpack.c.l.b16 %v632
        %v1329 = vunpack.c.h.b16 %v632
        %v1330 = vunpack.c.l.b16 %v633
        %v1331 = vunpack.c.h.b16 %v633
        %v1332 = vunpack.c.l.b16 %v634
        %v1333 = vunpack.c.h.b16 %v634
        %v1334 = vunpack.c.l.b16 %v635
        %v1335 = vunpack.c.h.b16 %v635
        %v1336 = vunpack.c.l.b16 %v636
        %v1337 = vunpack.c.h.b16 %v636
        %v1338 = vunpack.c.l.b16 %v637
        %v1339 = vunpack.c.h.b16 %v637
        %v1340 = vunpack.c.l.b16 %v638
        %v1341 = vunpack.c.h.b16 %v638
        %v1342 = vunpack.c.l.b16 %v639
        %v1343 = vunpack.c.h.b16 %v639
        %v1344 = vunpack.c.l.b16 %v640
        %v1345 = vunpack.c.h.b16 %v640
        %v1346 = vunpack.c.l.b16 %v641
        %v1347 = vunpack.c.h.b16 %v641
        %v1348 = vunpack.c.l.b16 %v642
        %v1349 = vunpack.c.h.b16 %v642
        %v1350 = vpack.c.b16 %v906, %v902
        %v1351 = vpack.c.b16 %v907, %v903
        %v1352 = vpack.c.b16 %v908, %v904
        %v1353 = vpack.c.b16 %v909, %v905
        %v1354 = vpack.c.b16 %v914, %v910
        %v1355 = vpack.c.b16 %v915, %v911
        %v1356 = vpack.c.b16 %v916, %v912
        %v1357 = vpack.c.b16 %v917, %v913
        %v1358 = vpack.c.b16 %v922, %v918
        %v1359 = vpack.c.b16 %v923, %v919
        %v1360 = vpack.c.b16 %v924, %v920
        %v1361 = vpack.c.b16 %v925, %v921
        %v1362 = vpack.c.b16 %v930, %v926
        %v1363 = vpack.c.b16 %v931, %v927
        %v1364 = vpack.c.b16 %v932, %v928
        %v1365 = vpack.c.b16 %v933, %v929
        %v1366 = vpack.c.b16 %v938, %v934
        %v1367 = vpack.c.b16 %v939, %v935
        %v1368 = vpack.c.b16 %v940, %v936
        %v1369 = vpack.c.b16 %v941, %v937
        %v1370 = vpack.c.b16 %v946, %v942
        %v1371 = vpack.c.b16 %v947, %v943
        %v1372 = vpack.c.b16 %v948, %v944
        %v1373 = vpack.c.b16 %v949, %v945
        %v1374 = vpack.c.b16 %v954, %v950
        %v1375 = vpack.c.b16 %v955, %v951
        %v1376 = vpack.c.b16 %v956, %v952
        %v1377 = vpack.c.b16 %v957, %v953
        %v1378 = vpack.c.b16 %v962, %v958
        %v1379 = vpack.c.b16 %v963, %v959
        %v1380 = vpack.c.b16 %v964, %v960
        %v1381 = vpack.c.b16 %v965, %v961
        %v1382 = vpack.c.b16 %v970, %v966
        %v1383 = vpack.c.b16 %v971, %v967
        %v1384 = vpack.c.b16 %v972, %v968
        %v1385 = vpack.c.b16 %v973, %v969
        %v1386 = vpack.c.b16 %v978, %v974
        %v1387 = vpack.c.b16 %v979, %v975
        %v1388 = vpack.c.b16 %v980, %v976
        %v1389 = vpack.c.b16 %v981, %v977
        %v1390 = vpack.c.b16 %v986, %v982
        %v1391 = vpack.c.b16 %v987, %v983
        %v1392 = vpack.c.b16 %v988, %v984
        %v1393 = vpack.c.b16 %v989, %v985
        %v1394 = vpack.c.b16 %v994, %v990
        %v1395 = vpack.c.b16 %v995, %v991
        %v1396 = vpack.c.b16 %v996, %v992
        %v1397 = vpack.c.b16 %v997, %v993
        %v1398 = vpack.c.b16 %v1002, %v998
        %v1399 = vpack.c.b16 %v1003, %v999
        %v1400 = vpack.c.b16 %v1004, %v1000
        %v1401 = vpack.c.b16 %v1005, %v1001
        %v1402 = vpack.c.b16 %v1010, %v1006
        %v1403 = vpack.c.b16 %v1011, %v1007
        %v1404 = vpack.c.b16 %v1012, %v1008
        %v1405 = vpack.c.b16 %v1013, %v1009
        %v1406 = vpack.c.b16 %v1018, %v1014
        %v1407 = vpack.c.b16 %v1019, %v1015
        %v1408 = vpack.c.b16 %v1020, %v1016
        %v1409 = vpack.c.b16 %v1021, %v1017
        %v1410 = vpack.c.b16 %v1026, %v1022
        %v1411 = vpack.c.b16 %v1027, %v1023
        %v1412 = vpack.c.b16 %v1028, %v1024
        %v1413 = vpack.c.b16 %v1029, %v1025
        %v1414 = vpack.c.b16 %v1034, %v1030
        %v1415 = vpack.c.b16 %v1035, %v1031
        %v1416 = vpack.c.b16 %v1036, %v1032
        %v1417 = vpack.c.b16 %v1037, %v1033
        %v1418 = vpack.c.b16 %v1042, %v1038
        %v1419 = vpack.c.b16 %v1043, %v1039
        %v1420 = vpack.c.b16 %v1044, %v1040
        %v1421 = vpack.c.b16 %v1045, %v1041
        %v1422 = vpack.c.b16 %v1050, %v1046
        %v1423 = vpack.c.b16 %v1051, %v1047
        %v1424 = vpack.c.b16 %v1052, %v1048
        %v1425 = vpack.c.b16 %v1053, %v1049
        %v1426 = vpack.c.b16 %v1058, %v1054
        %v1427 = vpack.c.b16 %v1059, %v1055
        %v1428 = vpack.c.b16 %v1060, %v1056
        %v1429 = vpack.c.b16 %v1061, %v1057
        %v1430 = vpack.c.b16 %v1066, %v1062
        %v1431 = vpack.c.b16 %v1067, %v1063
        %v1432 = vpack.c.b16 %v1068, %v1064
        %v1433 = vpack.c.b16 %v1069, %v1065
        %v1434 = vpack.c.b16 %v1074, %v1070
        %v1435 = vpack.c.b16 %v1075, %v1071
        %v1436 = vpack.c.b16 %v1076, %v1072
        %v1437 = vpack.c.b16 %v1077, %v1073
        %v1438 = vpack.c.b16 %v1082, %v1078
        %v1439 = vpack.c.b16 %v1083, %v1079
        %v1440 = vpack.c.b16 %v1084, %v1080
        %v1441 = vpack.c.b16 %v1085, %v1081
        %v1442 = vpack.c.b16 %v1090, %v1086
        %v1443 = vpack.c.b16 %v1091, %v1087
        %v1444 = vpack.c.b16 %v1092, %v1088
        %v1445 = vpack.c.b16 %v1093, %v1089
        %v1446 = vpack.c.b16 %v1098, %v1094
        %v1447 = vpack.c.b16 %v1099, %v1095
        %v1448 = vpack.c.b16 %v1100, %v1096
        %v1449 = vpack.c.b16 %v1101, %v1097
        %v1450 = vpack.c.b16 %v1106, %v1102
        %v1451 = vpack.c.b16 %v1107, %v1103
        %v1452 = vpack.c.b16 %v1108, %v1104
        %v1453 = vpack.c.b16 %v1109, %v1105
        %v1454 = vpack.c.b16 %v1114, %v1110
        %v1455 = vpack.c.b16 %v1115, %v1111
        %v1456 = vpack.c.b16 %v1116, %v1112
        %v1457 = vpack.c.b16 %v1117, %v1113
        %v1458 = vpack.c.b16 %v1122, %v1118
        %v1459 = vpack.c.b16 %v1123, %v1119
        %v1460 = vpack.c.b16 %v1124, %v1120
        %v1461 = vpack.c.b16 %v1125, %v1121
        %v1462 = vpack.c.b16 %v1130, %v1126
        %v1463 = vpack.c.b16 %v1131, %v1127
        %v1464 = vpack.c.b16 %v1132, %v1128
        %v1465 = vpack.c.b16 %v1133, %v1129
        %v1466 = vpack.c.b16 %v1138, %v1134
        %v1467 = vpack.c.b16 %v1139, %v1135
        %v1468 = vpack.c.b16 %v1140, %v1136
        %v1469 = vpack.c.b16 %v1141, %v1137
        %v1470 = vpack.c.b16 %v1146, %v1142
        %v1471 = vpack.c.b16 %v1147, %v1143
        %v1472 = vpack.c.b16 %v1148, %v1144
        %v1473 = vpack.c.b16 %v1149, %v1145
        %v1474 = vpack.c.b16 %v1154, %v1150
        %v1475 = vpack.c.b16 %v1155, %v1151
        %v1476 = vpack.c.b16 %v1156, %v1152
        %v1477 = vpack.c.b16 %v1157, %v1153
        %v1478 = vpack.c.b16 %v1162, %v1158
        %v1479 = vpack.c.b16 %v1163, %v1159
        %v1480 = vpack.c.b16 %v1164, %v1160
        %v1481 = vpack.c.b16 %v1165, %v1161
        %v1482 = vpack.c.b16 %v1170, %v1166
        %v1483 = vpack.c.b16 %v1171, %v1167
        %v1484 = vpack.c.b16 %v1172, %v1168
        %v1485 = vpack.c.b16 %v1173, %v1169
        %v1486 = vpack.c.b16 %v1178, %v1174
        %v1487 = vpack.c.b16 %v1179, %v1175
        %v1488 = vpack.c.b16 %v1180, %v1176
        %v1489 = vpack.c.b16 %v1181, %v1177
        %v1490 = vpack.c.b16 %v1186, %v1182
        %v1491 = vpack.c.b16 %v1187, %v1183
        %v1492 = vpack.c.b16 %v1188, %v1184
        %v1493 = vpack.c.b16 %v1189, %v1185
        %v1494 = vpack.c.b16 %v1194, %v1190
        %v1495 = vpack.c.b16 %v1195, %v1191
        %v1496 = vpack.c.b16 %v1196, %v1192
        %v1497 = vpack.c.b16 %v1197, %v1193
        %v1498 = vpack.c.b16 %v1202, %v1198
        %v1499 = vpack.c.b16 %v1203, %v1199
        %v1500 = vpack.c.b16 %v1204, %v1200
        %v1501 = vpack.c.b16 %v1205, %v1201
        %v1502 = vpack.c.b16 %v1210, %v1206
        %v1503 = vpack.c.b16 %v1211, %v1207
        %v1504 = vpack.c.b16 %v1212, %v1208
        %v1505 = vpack.c.b16 %v1213, %v1209
        %v1506 = vpack.c.b16 %v1218, %v1214
        %v1507 = vpack.c.b16 %v1219, %v1215
        %v1508 = vpack.c.b16 %v1220, %v1216
        %v1509 = vpack.c.b16 %v1221, %v1217
        %v1510 = vpack.c.b16 %v1226, %v1222
        %v1511 = vpack.c.b16 %v1227, %v1223
        %v1512 = vpack.c.b16 %v1228, %v1224
        %v1513 = vpack.c.b16 %v1229, %v1225
        %v1514 = vpack.c.b16 %v1234, %v1230
        %v1515 = vpack.c.b16 %v1235, %v1231
        %v1516 = vpack.c.b16 %v1236, %v1232
        %v1517 = vpack.c.b16 %v1237, %v1233
        %v1518 = vpack.c.b16 %v1242, %v1238
        %v1519 = vpack.c.b16 %v1243, %v1239
        %v1520 = vpack.c.b16 %v1244, %v1240
        %v1521 = vpack.c.b16 %v1245, %v1241
        %v1522 = vpack.c.b16 %v1250, %v1246
        %v1523 = vpack.c.b16 %v1251, %v1247
        %v1524 = vpack.c.b16 %v1252, %v1248
        %v1525 = vpack.c.b16 %v1253, %v1249
        %v1526 = vpack.c.b16 %v1258, %v1254
        %v1527 = vpack.c.b16 %v1259, %v1255
        %v1528 = vpack.c.b16 %v1260, %v1256
        %v1529 = vpack.c.b16 %v1261, %v1257
        %v1530 = vpack.c.b16 %v1266, %v1262
        %v1531 = vpack.c.b16 %v1267, %v1263
        %v1532 = vpack.c.b16 %v1268, %v1264
        %v1533 = vpack.c.b16 %v1269, %v1265
        %v1534 = vpack.c.b16 %v1274, %v1270
        %v1535 = vpack.c.b16 %v1275, %v1271
        %v1536 = vpack.c.b16 %v1276, %v1272
        %v1537 = vpack.c.b16 %v1277, %v1273
        %v1538 = vpack.c.b16 %v1282, %v1278
        %v1539 = vpack.c.b16 %v1283, %v1279
        %v1540 = vpack.c.b16 %v1284, %v1280
        %v1541 = vpack.c.b16 %v1285, %v1281
        %v1542 = vpack.c.b16 %v1290, %v1286
        %v1543 = vpack.c.b16 %v1291, %v1287
        %v1544 = vpack.c.b16 %v1292, %v1288
        %v1545 = vpack.c.b16 %v1293, %v1289
        %v1546 = vpack.c.b16 %v1298, %v1294
        %v1547 = vpack.c.b16 %v1299, %v1295
        %v1548 = vpack.c.b16 %v1300, %v1296
        %v1549 = vpack.c.b16 %v1301, %v1297
        %v1550 = vpack.c.b16 %v1306, %v1302
        %v1551 = vpack.c.b16 %v1307, %v1303
        %v1552 = vpack.c.b16 %v1308, %v1304
        %v1553 = vpack.c.b16 %v1309, %v1305
        %v1554 = vpack.c.b16 %v1314, %v1310
        %v1555 = vpack.c.b16 %v1315, %v1311
        %v1556 = vpack.c.b16 %v1316, %v1312
        %v1557 = vpack.c.b16 %v1317, %v1313
        %v1558 = vpack.c.b16 %v1322, %v1318
        %v1559 = vpack.c.b16 %v1323, %v1319
        %v1560 = vpack.c.b16 %v1324, %v1320
        %v1561 = vpack.c.b16 %v1325, %v1321
        %v1562 = vpack.c.b16 %v1330, %v1326
        %v1563 = vpack.c.b16 %v1331, %v1327
        %v1564 = vpack.c.b16 %v1332, %v1328
        %v1565 = vpack.c.b16 %v1333, %v1329
        %v1566 = vpack.c.b16 %v1338, %v1334
        %v1567 = vpack.c.b16 %v1339, %v1335
        %v1568 = vpack.c.b16 %v1340, %v1336
        %v1569 = vpack.c.b16 %v1341, %v1337
        %v1570 = vpack.c.b16 %v1346, %v1342
        %v1571 = vpack.c.b16 %v1347, %v1343
        %v1572 = vpack.c.b16 %v1348, %v1344
        %v1573 = vpack.c.b16 %v1349, %v1345
        %1798 = vmatpush.bf16.msra.mxu0 %v1378
        %1799 = vmatpush.bf16.msra.mxu0 %v1374
        %1800 = vmatpush.bf16.msra.mxu0 %v1370
        %1801 = vmatpush.bf16.msra.mxu0 %v1366
        %1802 = vmatpush.bf16.msra.mxu0 %v1362
        %1803 = vmatpush.bf16.msra.mxu0 %v1358
        %1804 = vmatpush.bf16.msra.mxu0 %v1354
        %1805 = vmatpush.bf16.msra.mxu0 %v1350
        %1806 = vmatmul.bf16.gmra.mxu0 %v664
        %v1807 = vpop.f32.mrf.mxu0
        %v1808 = vadd.f32 %v645, %v1807
        %v1809 = vpop.f32.mrf.mxu0
        %1810 = vdwg.mxu0
        %1811 = vmatpush.bf16.msra.mxu0 %v1410
        %1812 = vmatpush.bf16.msra.mxu0 %v1406
        %1813 = vmatpush.bf16.msra.mxu0 %v1402
        %1814 = vmatpush.bf16.msra.mxu0 %v1398
        %1815 = vmatpush.bf16.msra.mxu0 %v1394
        %1816 = vmatpush.bf16.msra.mxu0 %v1390
        %1817 = vmatpush.bf16.msra.mxu0 %v1386
        %1818 = vmatpush.bf16.msra.mxu0 %v1382
        %1819 = vmatmul.bf16.gmra.mxu0 %v665
        %v1820 = vpop.f32.mrf.mxu0
        %v1821 = vadd.f32 %v1808, %v1820
        %v1822 = vpop.f32.mrf.mxu0
        %1823 = vdwg.mxu0
        %1824 = vmatpush.bf16.msra.mxu0 %v1442
        %1825 = vmatpush.bf16.msra.mxu0 %v1438
        %1826 = vmatpush.bf16.msra.mxu0 %v1434
        %1827 = vmatpush.bf16.msra.mxu0 %v1430
        %1828 = vmatpush.bf16.msra.mxu0 %v1426
        %1829 = vmatpush.bf16.msra.mxu0 %v1422
        %1830 = vmatpush.bf16.msra.mxu0 %v1418
        %1831 = vmatpush.bf16.msra.mxu0 %v1414
        %1832 = vmatmul.bf16.gmra.mxu0 %v666
        %v1833 = vpop.f32.mrf.mxu0
        %v1834 = vadd.f32 %v1821, %v1833
        %v1835 = vpop.f32.mrf.mxu0
        %1836 = vdwg.mxu0
        %1837 = vmatpush.bf16.msra.mxu0 %v1474
        %1838 = vmatpush.bf16.msra.mxu0 %v1470
        %1839 = vmatpush.bf16.msra.mxu0 %v1466
        %1840 = vmatpush.bf16.msra.mxu0 %v1462
        %1841 = vmatpush.bf16.msra.mxu0 %v1458
        %1842 = vmatpush.bf16.msra.mxu0 %v1454
        %1843 = vmatpush.bf16.msra.mxu0 %v1450
        %1844 = vmatpush.bf16.msra.mxu0 %v1446
        %1845 = vmatmul.bf16.gmra.mxu0 %v667
        %v1846 = vpop.f32.mrf.mxu0
        %v1847 = vadd.f32 %v1834, %v1846
        %v1848 = vpop.f32.mrf.mxu0
        %1849 = vdwg.mxu0
        %1850 = vmatpush.bf16.msra.mxu0 %v1506
        %1851 = vmatpush.bf16.msra.mxu0 %v1502
        %1852 = vmatpush.bf16.msra.mxu0 %v1498
        %1853 = vmatpush.bf16.msra.mxu0 %v1494
        %1854 = vmatpush.bf16.msra.mxu0 %v1490
        %1855 = vmatpush.bf16.msra.mxu0 %v1486
        %1856 = vmatpush.bf16.msra.mxu0 %v1482
        %1857 = vmatpush.bf16.msra.mxu0 %v1478
        %1858 = vmatmul.bf16.gmra.mxu0 %v668
        %v1859 = vpop.f32.mrf.mxu0
        %v1860 = vadd.f32 %v1847, %v1859
        %v1861 = vpop.f32.mrf.mxu0
        %1862 = vdwg.mxu0
        %1863 = vmatpush.bf16.msra.mxu0 %v1538
        %1864 = vmatpush.bf16.msra.mxu0 %v1534
        %1865 = vmatpush.bf16.msra.mxu0 %v1530
        %1866 = vmatpush.bf16.msra.mxu0 %v1526
        %1867 = vmatpush.bf16.msra.mxu0 %v1522
        %1868 = vmatpush.bf16.msra.mxu0 %v1518
        %1869 = vmatpush.bf16.msra.mxu0 %v1514
        %1870 = vmatpush.bf16.msra.mxu0 %v1510
        %1871 = vmatmul.bf16.gmra.mxu0 %v669
        %v1872 = vpop.f32.mrf.mxu0
        %v1873 = vadd.f32 %v1860, %v1872
        %v1874 = vpop.f32.mrf.mxu0
        %1875 = vdwg.mxu0
        %1876 = vmatpush.bf16.msra.mxu0 %v1570
        %1877 = vmatpush.bf16.msra.mxu0 %v1566
        %1878 = vmatpush.bf16.msra.mxu0 %v1562
        %1879 = vmatpush.bf16.msra.mxu0 %v1558
        %1880 = vmatpush.bf16.msra.mxu0 %v1554
        %1881 = vmatpush.bf16.msra.mxu0 %v1550
        %1882 = vmatpush.bf16.msra.mxu0 %v1546
        %1883 = vmatpush.bf16.msra.mxu0 %v1542
        %1884 = vmatmul.bf16.gmra.mxu0 %v670
        %v1885 = vpop.f32.mrf.mxu0
        %v1886 = vadd.f32 %v1873, %v1885
        %v1887 = vpop.f32.mrf.mxu0
        %1888 = vdwg.mxu0
        %1889 = vmatpush.bf16.msra.mxu0 %v1379
        %1890 = vmatpush.bf16.msra.mxu0 %v1375
        %1891 = vmatpush.bf16.msra.mxu0 %v1371
        %1892 = vmatpush.bf16.msra.mxu0 %v1367
        %1893 = vmatpush.bf16.msra.mxu0 %v1363
        %1894 = vmatpush.bf16.msra.mxu0 %v1359
        %1895 = vmatpush.bf16.msra.mxu0 %v1355
        %1896 = vmatpush.bf16.msra.mxu0 %v1351
        %1897 = vmatmul.bf16.gmra.mxu0 %v664
        %v1898 = vpop.f32.mrf.mxu0
        %v1899 = vadd.f32 %v646, %v1898
        %v1900 = vpop.f32.mrf.mxu0
        %1901 = vdwg.mxu0
        %1902 = vmatpush.bf16.msra.mxu0 %v1411
        %1903 = vmatpush.bf16.msra.mxu0 %v1407
        %1904 = vmatpush.bf16.msra.mxu0 %v1403
        %1905 = vmatpush.bf16.msra.mxu0 %v1399
        %1906 = vmatpush.bf16.msra.mxu0 %v1395
        %1907 = vmatpush.bf16.msra.mxu0 %v1391
        %1908 = vmatpush.bf16.msra.mxu0 %v1387
        %1909 = vmatpush.bf16.msra.mxu0 %v1383
        %1910 = vmatmul.bf16.gmra.mxu0 %v665
        %v1911 = vpop.f32.mrf.mxu0
        %v1912 = vadd.f32 %v1899, %v1911
        %v1913 = vpop.f32.mrf.mxu0
        %1914 = vdwg.mxu0
        %1915 = vmatpush.bf16.msra.mxu0 %v1443
        %1916 = vmatpush.bf16.msra.mxu0 %v1439
        %1917 = vmatpush.bf16.msra.mxu0 %v1435
        %1918 = vmatpush.bf16.msra.mxu0 %v1431
        %1919 = vmatpush.bf16.msra.mxu0 %v1427
        %1920 = vmatpush.bf16.msra.mxu0 %v1423
        %1921 = vmatpush.bf16.msra.mxu0 %v1419
        %1922 = vmatpush.bf16.msra.mxu0 %v1415
        %1923 = vmatmul.bf16.gmra.mxu0 %v666
        %v1924 = vpop.f32.mrf.mxu0
        %v1925 = vadd.f32 %v1912, %v1924
        %v1926 = vpop.f32.mrf.mxu0
        %1927 = vdwg.mxu0
        %1928 = vmatpush.bf16.msra.mxu0 %v1475
        %1929 = vmatpush.bf16.msra.mxu0 %v1471
        %1930 = vmatpush.bf16.msra.mxu0 %v1467
        %1931 = vmatpush.bf16.msra.mxu0 %v1463
        %1932 = vmatpush.bf16.msra.mxu0 %v1459
        %1933 = vmatpush.bf16.msra.mxu0 %v1455
        %1934 = vmatpush.bf16.msra.mxu0 %v1451
        %1935 = vmatpush.bf16.msra.mxu0 %v1447
        %1936 = vmatmul.bf16.gmra.mxu0 %v667
        %v1937 = vpop.f32.mrf.mxu0
        %v1938 = vadd.f32 %v1925, %v1937
        %v1939 = vpop.f32.mrf.mxu0
        %1940 = vdwg.mxu0
        %1941 = vmatpush.bf16.msra.mxu0 %v1507
        %1942 = vmatpush.bf16.msra.mxu0 %v1503
        %1943 = vmatpush.bf16.msra.mxu0 %v1499
        %1944 = vmatpush.bf16.msra.mxu0 %v1495
        %1945 = vmatpush.bf16.msra.mxu0 %v1491
        %1946 = vmatpush.bf16.msra.mxu0 %v1487
        %1947 = vmatpush.bf16.msra.mxu0 %v1483
        %1948 = vmatpush.bf16.msra.mxu0 %v1479
        %1949 = vmatmul.bf16.gmra.mxu0 %v668
        %v1950 = vpop.f32.mrf.mxu0
        %v1951 = vadd.f32 %v1938, %v1950
        %v1952 = vpop.f32.mrf.mxu0
        %1953 = vdwg.mxu0
        %1954 = vmatpush.bf16.msra.mxu0 %v1539
        %1955 = vmatpush.bf16.msra.mxu0 %v1535
        %1956 = vmatpush.bf16.msra.mxu0 %v1531
        %1957 = vmatpush.bf16.msra.mxu0 %v1527
        %1958 = vmatpush.bf16.msra.mxu0 %v1523
        %1959 = vmatpush.bf16.msra.mxu0 %v1519
        %1960 = vmatpush.bf16.msra.mxu0 %v1515
        %1961 = vmatpush.bf16.msra.mxu0 %v1511
        %1962 = vmatmul.bf16.gmra.mxu0 %v669
        %v1963 = vpop.f32.mrf.mxu0
        %v1964 = vadd.f32 %v1951, %v1963
        %v1965 = vpop.f32.mrf.mxu0
        %1966 = vdwg.mxu0
        %1967 = vmatpush.bf16.msra.mxu0 %v1571
        %1968 = vmatpush.bf16.msra.mxu0 %v1567
        %1969 = vmatpush.bf16.msra.mxu0 %v1563
        %1970 = vmatpush.bf16.msra.mxu0 %v1559
        %1971 = vmatpush.bf16.msra.mxu0 %v1555
        %1972 = vmatpush.bf16.msra.mxu0 %v1551
        %1973 = vmatpush.bf16.msra.mxu0 %v1547
        %1974 = vmatpush.bf16.msra.mxu0 %v1543
        %1975 = vmatmul.bf16.gmra.mxu0 %v670
        %v1976 = vpop.f32.mrf.mxu0
        %v1977 = vadd.f32 %v1964, %v1976
        %v1978 = vpop.f32.mrf.mxu0
        %1979 = vdwg.mxu0
        %1980 = vmatpush.bf16.msra.mxu0 %v1380
        %1981 = vmatpush.bf16.msra.mxu0 %v1376
        %1982 = vmatpush.bf16.msra.mxu0 %v1372
        %1983 = vmatpush.bf16.msra.mxu0 %v1368
        %1984 = vmatpush.bf16.msra.mxu0 %v1364
        %1985 = vmatpush.bf16.msra.mxu0 %v1360
        %1986 = vmatpush.bf16.msra.mxu0 %v1356
        %1987 = vmatpush.bf16.msra.mxu0 %v1352
        %1988 = vmatmul.bf16.gmra.mxu0 %v664
        %v1989 = vpop.f32.mrf.mxu0
        %v1990 = vadd.f32 %v647, %v1989
        %v1991 = vpop.f32.mrf.mxu0
        %1992 = vdwg.mxu0
        %1993 = vmatpush.bf16.msra.mxu0 %v1412
        %1994 = vmatpush.bf16.msra.mxu0 %v1408
        %1995 = vmatpush.bf16.msra.mxu0 %v1404
        %1996 = vmatpush.bf16.msra.mxu0 %v1400
        %1997 = vmatpush.bf16.msra.mxu0 %v1396
        %1998 = vmatpush.bf16.msra.mxu0 %v1392
        %1999 = vmatpush.bf16.msra.mxu0 %v1388
        %2000 = vmatpush.bf16.msra.mxu0 %v1384
        %2001 = vmatmul.bf16.gmra.mxu0 %v665
        %v2002 = vpop.f32.mrf.mxu0
        %v2003 = vadd.f32 %v1990, %v2002
        %v2004 = vpop.f32.mrf.mxu0
        %2005 = vdwg.mxu0
        %2006 = vmatpush.bf16.msra.mxu0 %v1444
        %2007 = vmatpush.bf16.msra.mxu0 %v1440
        %2008 = vmatpush.bf16.msra.mxu0 %v1436
        %2009 = vmatpush.bf16.msra.mxu0 %v1432
        %2010 = vmatpush.bf16.msra.mxu0 %v1428
        %2011 = vmatpush.bf16.msra.mxu0 %v1424
        %2012 = vmatpush.bf16.msra.mxu0 %v1420
        %2013 = vmatpush.bf16.msra.mxu0 %v1416
        %2014 = vmatmul.bf16.gmra.mxu0 %v666
        %v2015 = vpop.f32.mrf.mxu0
        %v2016 = vadd.f32 %v2003, %v2015
        %v2017 = vpop.f32.mrf.mxu0
        %2018 = vdwg.mxu0
        %2019 = vmatpush.bf16.msra.mxu0 %v1476
        %2020 = vmatpush.bf16.msra.mxu0 %v1472
        %2021 = vmatpush.bf16.msra.mxu0 %v1468
        %2022 = vmatpush.bf16.msra.mxu0 %v1464
        %2023 = vmatpush.bf16.msra.mxu0 %v1460
        %2024 = vmatpush.bf16.msra.mxu0 %v1456
        %2025 = vmatpush.bf16.msra.mxu0 %v1452
        %2026 = vmatpush.bf16.msra.mxu0 %v1448
        %2027 = vmatmul.bf16.gmra.mxu0 %v667
        %v2028 = vpop.f32.mrf.mxu0
        %v2029 = vadd.f32 %v2016, %v2028
        %v2030 = vpop.f32.mrf.mxu0
        %2031 = vdwg.mxu0
        %2032 = vmatpush.bf16.msra.mxu0 %v1508
        %2033 = vmatpush.bf16.msra.mxu0 %v1504
        %2034 = vmatpush.bf16.msra.mxu0 %v1500
        %2035 = vmatpush.bf16.msra.mxu0 %v1496
        %2036 = vmatpush.bf16.msra.mxu0 %v1492
        %2037 = vmatpush.bf16.msra.mxu0 %v1488
        %2038 = vmatpush.bf16.msra.mxu0 %v1484
        %2039 = vmatpush.bf16.msra.mxu0 %v1480
        %2040 = vmatmul.bf16.gmra.mxu0 %v668
        %v2041 = vpop.f32.mrf.mxu0
        %v2042 = vadd.f32 %v2029, %v2041
        %v2043 = vpop.f32.mrf.mxu0
        %2044 = vdwg.mxu0
        %2045 = vmatpush.bf16.msra.mxu0 %v1540
        %2046 = vmatpush.bf16.msra.mxu0 %v1536
        %2047 = vmatpush.bf16.msra.mxu0 %v1532
        %2048 = vmatpush.bf16.msra.mxu0 %v1528
        %2049 = vmatpush.bf16.msra.mxu0 %v1524
        %2050 = vmatpush.bf16.msra.mxu0 %v1520
        %2051 = vmatpush.bf16.msra.mxu0 %v1516
        %2052 = vmatpush.bf16.msra.mxu0 %v1512
        %2053 = vmatmul.bf16.gmra.mxu0 %v669
        %v2054 = vpop.f32.mrf.mxu0
        %v2055 = vadd.f32 %v2042, %v2054
        %v2056 = vpop.f32.mrf.mxu0
        %2057 = vdwg.mxu0
        %2058 = vmatpush.bf16.msra.mxu0 %v1572
        %2059 = vmatpush.bf16.msra.mxu0 %v1568
        %2060 = vmatpush.bf16.msra.mxu0 %v1564
        %2061 = vmatpush.bf16.msra.mxu0 %v1560
        %2062 = vmatpush.bf16.msra.mxu0 %v1556
        %2063 = vmatpush.bf16.msra.mxu0 %v1552
        %2064 = vmatpush.bf16.msra.mxu0 %v1548
        %2065 = vmatpush.bf16.msra.mxu0 %v1544
        %2066 = vmatmul.bf16.gmra.mxu0 %v670
        %v2067 = vpop.f32.mrf.mxu0
        %v2068 = vadd.f32 %v2055, %v2067
        %v2069 = vpop.f32.mrf.mxu0
        %2070 = vdwg.mxu0
        %2071 = vmatpush.bf16.msra.mxu0 %v1381
        %2072 = vmatpush.bf16.msra.mxu0 %v1377
        %2073 = vmatpush.bf16.msra.mxu0 %v1373
        %2074 = vmatpush.bf16.msra.mxu0 %v1369
        %2075 = vmatpush.bf16.msra.mxu0 %v1365
        %2076 = vmatpush.bf16.msra.mxu0 %v1361
        %2077 = vmatpush.bf16.msra.mxu0 %v1357
        %2078 = vmatpush.bf16.msra.mxu0 %v1353
        %2079 = vmatmul.bf16.gmra.mxu0 %v664
        %v2080 = vpop.f32.mrf.mxu0
        %v2081 = vadd.f32 %v648, %v2080
        %v2082 = vpop.f32.mrf.mxu0
        %2083 = vdwg.mxu0
        %2084 = vmatpush.bf16.msra.mxu0 %v1413
        %2085 = vmatpush.bf16.msra.mxu0 %v1409
        %2086 = vmatpush.bf16.msra.mxu0 %v1405
        %2087 = vmatpush.bf16.msra.mxu0 %v1401
        %2088 = vmatpush.bf16.msra.mxu0 %v1397
        %2089 = vmatpush.bf16.msra.mxu0 %v1393
        %2090 = vmatpush.bf16.msra.mxu0 %v1389
        %2091 = vmatpush.bf16.msra.mxu0 %v1385
        %2092 = vmatmul.bf16.gmra.mxu0 %v665
        %v2093 = vpop.f32.mrf.mxu0
        %v2094 = vadd.f32 %v2081, %v2093
        %v2095 = vpop.f32.mrf.mxu0
        %2096 = vdwg.mxu0
        %2097 = vmatpush.bf16.msra.mxu0 %v1445
        %2098 = vmatpush.bf16.msra.mxu0 %v1441
        %2099 = vmatpush.bf16.msra.mxu0 %v1437
        %2100 = vmatpush.bf16.msra.mxu0 %v1433
        %2101 = vmatpush.bf16.msra.mxu0 %v1429
        %2102 = vmatpush.bf16.msra.mxu0 %v1425
        %2103 = vmatpush.bf16.msra.mxu0 %v1421
        %2104 = vmatpush.bf16.msra.mxu0 %v1417
        %2105 = vmatmul.bf16.gmra.mxu0 %v666
        %v2106 = vpop.f32.mrf.mxu0
        %v2107 = vadd.f32 %v2094, %v2106
        %v2108 = vpop.f32.mrf.mxu0
        %2109 = vdwg.mxu0
        %2110 = vmatpush.bf16.msra.mxu0 %v1477
        %2111 = vmatpush.bf16.msra.mxu0 %v1473
        %2112 = vmatpush.bf16.msra.mxu0 %v1469
        %2113 = vmatpush.bf16.msra.mxu0 %v1465
        %2114 = vmatpush.bf16.msra.mxu0 %v1461
        %2115 = vmatpush.bf16.msra.mxu0 %v1457
        %2116 = vmatpush.bf16.msra.mxu0 %v1453
        %2117 = vmatpush.bf16.msra.mxu0 %v1449
        %2118 = vmatmul.bf16.gmra.mxu0 %v667
        %v2119 = vpop.f32.mrf.mxu0
        %v2120 = vadd.f32 %v2107, %v2119
        %v2121 = vpop.f32.mrf.mxu0
        %2122 = vdwg.mxu0
        %2123 = vmatpush.bf16.msra.mxu0 %v1509
        %2124 = vmatpush.bf16.msra.mxu0 %v1505
        %2125 = vmatpush.bf16.msra.mxu0 %v1501
        %2126 = vmatpush.bf16.msra.mxu0 %v1497
        %2127 = vmatpush.bf16.msra.mxu0 %v1493
        %2128 = vmatpush.bf16.msra.mxu0 %v1489
        %2129 = vmatpush.bf16.msra.mxu0 %v1485
        %2130 = vmatpush.bf16.msra.mxu0 %v1481
        %2131 = vmatmul.bf16.gmra.mxu0 %v668
        %v2132 = vpop.f32.mrf.mxu0
        %v2133 = vadd.f32 %v2120, %v2132
        %v2134 = vpop.f32.mrf.mxu0
        %2135 = vdwg.mxu0
        %2136 = vmatpush.bf16.msra.mxu0 %v1541
        %2137 = vmatpush.bf16.msra.mxu0 %v1537
        %2138 = vmatpush.bf16.msra.mxu0 %v1533
        %2139 = vmatpush.bf16.msra.mxu0 %v1529
        %2140 = vmatpush.bf16.msra.mxu0 %v1525
        %2141 = vmatpush.bf16.msra.mxu0 %v1521
        %2142 = vmatpush.bf16.msra.mxu0 %v1517
        %2143 = vmatpush.bf16.msra.mxu0 %v1513
        %2144 = vmatmul.bf16.gmra.mxu0 %v669
        %v2145 = vpop.f32.mrf.mxu0
        %v2146 = vadd.f32 %v2133, %v2145
        %v2147 = vpop.f32.mrf.mxu0
        %2148 = vdwg.mxu0
        %2149 = vmatpush.bf16.msra.mxu0 %v1573
        %2150 = vmatpush.bf16.msra.mxu0 %v1569
        %2151 = vmatpush.bf16.msra.mxu0 %v1565
        %2152 = vmatpush.bf16.msra.mxu0 %v1561
        %2153 = vmatpush.bf16.msra.mxu0 %v1557
        %2154 = vmatpush.bf16.msra.mxu0 %v1553
        %2155 = vmatpush.bf16.msra.mxu0 %v1549
        %2156 = vmatpush.bf16.msra.mxu0 %v1545
        %2157 = vmatmul.bf16.gmra.mxu0 %v670
        %v2158 = vpop.f32.mrf.mxu0
        %v2159 = vadd.f32 %v2146, %v2158
        %v2160 = vpop.f32.mrf.mxu0
        %2161 = vdwg.mxu0
        %v2162 = vmax.f32 %v1886, 0.0
        %v2163 = vmax.f32 %v1977, 0.0
        %v2164 = vmax.f32 %v2068, 0.0
        %v2165 = vmax.f32 %v2159, 0.0
        %v2166 = vpack.c.bf16 %v2162, %v2162
        %v2167 = vpack.c.bf16 %v2163, %v2163
        %v2168 = vpack.c.bf16 %v2164, %v2164
        %v2169 = vpack.c.bf16 %v2165, %v2165
        %v2170 = vld [vmem:[%s4] sm:$0xff]
        %v2171 = vld [vmem:[%s4 + $0x8] sm:$0xff]
        %v2172 = vld [vmem:[%s4 + $0x10] sm:$0xff]
        %v2173 = vld [vmem:[%s4 + $0x18] sm:$0xff]
        %v2174 = vld [vmem:[%s4 + $0x20] sm:$0xff]
        %v2175 = vld [vmem:[%s4 + $0x28] sm:$0xff]
        %v2176 = vld [vmem:[%s4 + $0x30] sm:$0xff]
        %v2177 = vld [vmem:[%s4 + $0x38] sm:$0xff]
        %v2178 = vld [vmem:[%s4 + $0x40] sm:$0xff]
        %v2179 = vld [vmem:[%s4 + $0x48] sm:$0xff]
        %v2180 = vld [vmem:[%s4 + $0x50] sm:$0xff]
        %v2181 = vld [vmem:[%s4 + $0x58] sm:$0xff]
        %v2182 = vld [vmem:[%s4 + $0x60] sm:$0xff]
        %v2183 = vld [vmem:[%s4 + $0x68] sm:$0xff]
        %v2184 = vld [vmem:[%s4 + $0x70] sm:$0xff]
        %v2185 = vld [vmem:[%s4 + $0x78] sm:$0xff]
        %v2186 = vld [vmem:[%s4 + $0x80] sm:$0xff]
        %v2187 = vld [vmem:[%s4 + $0x88] sm:$0xff]
        %v2188 = vld [vmem:[%s4 + $0x90] sm:$0xff]
        %v2189 = vld [vmem:[%s4 + $0x98] sm:$0xff]
        %v2190 = vld [vmem:[%s4 + $0xa0] sm:$0xff]
        %v2191 = vld [vmem:[%s4 + $0xa8] sm:$0xff]
        %v2192 = vld [vmem:[%s4 + $0xb0] sm:$0xff]
        %v2193 = vld [vmem:[%s4 + $0xb8] sm:$0xff]
        %v2194 = vld [vmem:[%s4 + $0xc0] sm:$0xff]
        %v2195 = vld [vmem:[%s4 + $0xc8] sm:$0xff]
        %v2196 = vld [vmem:[%s4 + $0xd0] sm:$0xff]
        %v2197 = vld [vmem:[%s4 + $0xd8] sm:$0xff]
        %v2198 = vld [vmem:[%s4 + $0xe0] sm:$0xff]
        %v2199 = vld [vmem:[%s4 + $0xe8] sm:$0xff]
        %v2200 = vld [vmem:[%s4 + $0xf0] sm:$0xff]
        %v2201 = vld [vmem:[%s4 + $0xf8] sm:$0xff]
        %v2202 = vld [vmem:[%s4 + $0x100] sm:$0xff]
        %v2203 = vld [vmem:[%s4 + $0x108] sm:$0xff]
        %v2204 = vld [vmem:[%s4 + $0x110] sm:$0xff]
        %v2205 = vld [vmem:[%s4 + $0x118] sm:$0xff]
        %v2206 = vld [vmem:[%s4 + $0x120] sm:$0xff]
        %v2207 = vld [vmem:[%s4 + $0x128] sm:$0xff]
        %v2208 = vld [vmem:[%s4 + $0x130] sm:$0xff]
        %v2209 = vld [vmem:[%s4 + $0x138] sm:$0xff]
        %v2210 = vld [vmem:[%s4 + $0x140] sm:$0xff]
        %v2211 = vld [vmem:[%s4 + $0x148] sm:$0xff]
        %v2212 = vld [vmem:[%s4 + $0x150] sm:$0xff]
        %v2213 = vld [vmem:[%s4 + $0x158] sm:$0xff]
        %v2214 = vld [vmem:[%s4 + $0x160] sm:$0xff]
        %v2215 = vld [vmem:[%s4 + $0x168] sm:$0xff]
        %v2216 = vld [vmem:[%s4 + $0x170] sm:$0xff]
        %v2217 = vld [vmem:[%s4 + $0x178] sm:$0xff]
        %v2218 = vld [vmem:[%s4 + $0x180] sm:$0xff]
        %v2219 = vld [vmem:[%s4 + $0x188] sm:$0xff]
        %v2220 = vld [vmem:[%s4 + $0x190] sm:$0xff]
        %v2221 = vld [vmem:[%s4 + $0x198] sm:$0xff]
        %v2222 = vld [vmem:[%s4 + $0x1a0] sm:$0xff]
        %v2223 = vld [vmem:[%s4 + $0x1a8] sm:$0xff]
        %v2224 = vld [vmem:[%s4 + $0x1b0] sm:$0xff]
        %v2225 = vld [vmem:[%s4 + $0x1b8] sm:$0xff]
        %v2226 = vld [vmem:[%s4 + $0x1c0] sm:$0xff]
        %v2227 = vld [vmem:[%s4 + $0x1c8] sm:$0xff]
        %v2228 = vld [vmem:[%s4 + $0x1d0] sm:$0xff]
        %v2229 = vld [vmem:[%s4 + $0x1d8] sm:$0xff]
        %v2230 = vld [vmem:[%s4 + $0x1e0] sm:$0xff]
        %v2231 = vld [vmem:[%s4 + $0x1e8] sm:$0xff]
        %v2232 = vld [vmem:[%s4 + $0x1f0] sm:$0xff]
        %v2233 = vld [vmem:[%s4 + $0x1f8] sm:$0xff]
        %v2234 = vld [vmem:[%s5] sm:$0x3]
        %v2236 = vperm.slane %v2234, 0
        %v2237 = vperm.slane %v2234, 1
        %v2304 = vunpack.c.l.b16 %v2170
        %v2305 = vunpack.c.h.b16 %v2170
        %v2306 = vunpack.c.l.b16 %v2171
        %v2307 = vunpack.c.h.b16 %v2171
        %v2308 = vunpack.c.l.b16 %v2172
        %v2309 = vunpack.c.h.b16 %v2172
        %v2310 = vunpack.c.l.b16 %v2173
        %v2311 = vunpack.c.h.b16 %v2173
        %v2312 = vunpack.c.l.b16 %v2174
        %v2313 = vunpack.c.h.b16 %v2174
        %v2314 = vunpack.c.l.b16 %v2175
        %v2315 = vunpack.c.h.b16 %v2175
        %v2316 = vunpack.c.l.b16 %v2176
        %v2317 = vunpack.c.h.b16 %v2176
        %v2318 = vunpack.c.l.b16 %v2177
        %v2319 = vunpack.c.h.b16 %v2177
        %v2320 = vunpack.c.l.b16 %v2178
        %v2321 = vunpack.c.h.b16 %v2178
        %v2322 = vunpack.c.l.b16 %v2179
        %v2323 = vunpack.c.h.b16 %v2179
        %v2324 = vunpack.c.l.b16 %v2180
        %v2325 = vunpack.c.h.b16 %v2180
        %v2326 = vunpack.c.l.b16 %v2181
        %v2327 = vunpack.c.h.b16 %v2181
        %v2328 = vunpack.c.l.b16 %v2182
        %v2329 = vunpack.c.h.b16 %v2182
        %v2330 = vunpack.c.l.b16 %v2183
        %v2331 = vunpack.c.h.b16 %v2183
        %v2332 = vunpack.c.l.b16 %v2184
        %v2333 = vunpack.c.h.b16 %v2184
        %v2334 = vunpack.c.l.b16 %v2185
        %v2335 = vunpack.c.h.b16 %v2185
        %v2336 = vunpack.c.l.b16 %v2186
        %v2337 = vunpack.c.h.b16 %v2186
        %v2338 = vunpack.c.l.b16 %v2187
        %v2339 = vunpack.c.h.b16 %v2187
        %v2340 = vunpack.c.l.b16 %v2188
        %v2341 = vunpack.c.h.b16 %v2188
        %v2342 = vunpack.c.l.b16 %v2189
        %v2343 = vunpack.c.h.b16 %v2189
        %v2344 = vunpack.c.l.b16 %v2190
        %v2345 = vunpack.c.h.b16 %v2190
        %v2346 = vunpack.c.l.b16 %v2191
        %v2347 = vunpack.c.h.b16 %v2191
        %v2348 = vunpack.c.l.b16 %v2192
        %v2349 = vunpack.c.h.b16 %v2192
        %v2350 = vunpack.c.l.b16 %v2193
        %v2351 = vunpack.c.h.b16 %v2193
        %v2352 = vunpack.c.l.b16 %v2194
        %v2353 = vunpack.c.h.b16 %v2194
        %v2354 = vunpack.c.l.b16 %v2195
        %v2355 = vunpack.c.h.b16 %v2195
        %v2356 = vunpack.c.l.b16 %v2196
        %v2357 = vunpack.c.h.b16 %v2196
        %v2358 = vunpack.c.l.b16 %v2197
        %v2359 = vunpack.c.h.b16 %v2197
        %v2360 = vunpack.c.l.b16 %v2198
        %v2361 = vunpack.c.h.b16 %v2198
        %v2362 = vunpack.c.l.b16 %v2199
        %v2363 = vunpack.c.h.b16 %v2199
        %v2364 = vunpack.c.l.b16 %v2200
        %v2365 = vunpack.c.h.b16 %v2200
        %v2366 = vunpack.c.l.b16 %v2201
        %v2367 = vunpack.c.h.b16 %v2201
        %v2368 = vunpack.c.l.b16 %v2202
        %v2369 = vunpack.c.h.b16 %v2202
        %v2370 = vunpack.c.l.b16 %v2203
        %v2371 = vunpack.c.h.b16 %v2203
        %v2372 = vunpack.c.l.b16 %v2204
        %v2373 = vunpack.c.h.b16 %v2204
        %v2374 = vunpack.c.l.b16 %v2205
        %v2375 = vunpack.c.h.b16 %v2205
        %v2376 = vunpack.c.l.b16 %v2206
        %v2377 = vunpack.c.h.b16 %v2206
        %v2378 = vunpack.c.l.b16 %v2207
        %v2379 = vunpack.c.h.b16 %v2207
        %v2380 = vunpack.c.l.b16 %v2208
        %v2381 = vunpack.c.h.b16 %v2208
        %v2382 = vunpack.c.l.b16 %v2209
        %v2383 = vunpack.c.h.b16 %v2209
        %v2384 = vunpack.c.l.b16 %v2210
        %v2385 = vunpack.c.h.b16 %v2210
        %v2386 = vunpack.c.l.b16 %v2211
        %v2387 = vunpack.c.h.b16 %v2211
        %v2388 = vunpack.c.l.b16 %v2212
        %v2389 = vunpack.c.h.b16 %v2212
        %v2390 = vunpack.c.l.b16 %v2213
        %v2391 = vunpack.c.h.b16 %v2213
        %v2392 = vunpack.c.l.b16 %v2214
        %v2393 = vunpack.c.h.b16 %v2214
        %v2394 = vunpack.c.l.b16 %v2215
        %v2395 = vunpack.c.h.b16 %v2215
        %v2396 = vunpack.c.l.b16 %v2216
        %v2397 = vunpack.c.h.b16 %v2216
        %v2398 = vunpack.c.l.b16 %v2217
        %v2399 = vunpack.c.h.b16 %v2217
        %v2400 = vunpack.c.l.b16 %v2218
        %v2401 = vunpack.c.h.b16 %v2218
        %v2402 = vunpack.c.l.b16 %v2219
        %v2403 = vunpack.c.h.b16 %v2219
        %v2404 = vunpack.c.l.b16 %v2220
        %v2405 = vunpack.c.h.b16 %v2220
        %v2406 = vunpack.c.l.b16 %v2221
        %v2407 = vunpack.c.h.b16 %v2221
        %v2408 = vunpack.c.l.b16 %v2222
        %v2409 = vunpack.c.h.b16 %v2222
        %v2410 = vunpack.c.l.b16 %v2223
        %v2411 = vunpack.c.h.b16 %v2223
        %v2412 = vunpack.c.l.b16 %v2224
        %v2413 = vunpack.c.h.b16 %v2224
        %v2414 = vunpack.c.l.b16 %v2225
        %v2415 = vunpack.c.h.b16 %v2225
        %v2416 = vunpack.c.l.b16 %v2226
        %v2417 = vunpack.c.h.b16 %v2226
        %v2418 = vunpack.c.l.b16 %v2227
        %v2419 = vunpack.c.h.b16 %v2227
        %v2420 = vunpack.c.l.b16 %v2228
        %v2421 = vunpack.c.h.b16 %v2228
        %v2422 = vunpack.c.l.b16 %v2229
        %v2423 = vunpack.c.h.b16 %v2229
        %v2424 = vunpack.c.l.b16 %v2230
        %v2425 = vunpack.c.h.b16 %v2230
        %v2426 = vunpack.c.l.b16 %v2231
        %v2427 = vunpack.c.h.b16 %v2231
        %v2428 = vunpack.c.l.b16 %v2232
        %v2429 = vunpack.c.h.b16 %v2232
        %v2430 = vunpack.c.l.b16 %v2233
        %v2431 = vunpack.c.h.b16 %v2233
        %v2432 = vpack.c.b16 %v2306, %v2304
        %v2433 = vpack.c.b16 %v2307, %v2305
        %v2434 = vpack.c.b16 %v2310, %v2308
        %v2435 = vpack.c.b16 %v2311, %v2309
        %v2436 = vpack.c.b16 %v2314, %v2312
        %v2437 = vpack.c.b16 %v2315, %v2313
        %v2438 = vpack.c.b16 %v2318, %v2316
        %v2439 = vpack.c.b16 %v2319, %v2317
        %v2440 = vpack.c.b16 %v2322, %v2320
        %v2441 = vpack.c.b16 %v2323, %v2321
        %v2442 = vpack.c.b16 %v2326, %v2324
        %v2443 = vpack.c.b16 %v2327, %v2325
        %v2444 = vpack.c.b16 %v2330, %v2328
        %v2445 = vpack.c.b16 %v2331, %v2329
        %v2446 = vpack.c.b16 %v2334, %v2332
        %v2447 = vpack.c.b16 %v2335, %v2333
        %v2448 = vpack.c.b16 %v2338, %v2336
        %v2449 = vpack.c.b16 %v2339, %v2337
        %v2450 = vpack.c.b16 %v2342, %v2340
        %v2451 = vpack.c.b16 %v2343, %v2341
        %v2452 = vpack.c.b16 %v2346, %v2344
        %v2453 = vpack.c.b16 %v2347, %v2345
        %v2454 = vpack.c.b16 %v2350, %v2348
        %v2455 = vpack.c.b16 %v2351, %v2349
        %v2456 = vpack.c.b16 %v2354, %v2352
        %v2457 = vpack.c.b16 %v2355, %v2353
        %v2458 = vpack.c.b16 %v2358, %v2356
        %v2459 = vpack.c.b16 %v2359, %v2357
        %v2460 = vpack.c.b16 %v2362, %v2360
        %v2461 = vpack.c.b16 %v2363, %v2361
        %v2462 = vpack.c.b16 %v2366, %v2364
        %v2463 = vpack.c.b16 %v2367, %v2365
        %v2464 = vpack.c.b16 %v2370, %v2368
        %v2465 = vpack.c.b16 %v2371, %v2369
        %v2466 = vpack.c.b16 %v2374, %v2372
        %v2467 = vpack.c.b16 %v2375, %v2373
        %v2468 = vpack.c.b16 %v2378, %v2376
        %v2469 = vpack.c.b16 %v2379, %v2377
        %v2470 = vpack.c.b16 %v2382, %v2380
        %v2471 = vpack.c.b16 %v2383, %v2381
        %v2472 = vpack.c.b16 %v2386, %v2384
        %v2473 = vpack.c.b16 %v2387, %v2385
        %v2474 = vpack.c.b16 %v2390, %v2388
        %v2475 = vpack.c.b16 %v2391, %v2389
        %v2476 = vpack.c.b16 %v2394, %v2392
        %v2477 = vpack.c.b16 %v2395, %v2393
        %v2478 = vpack.c.b16 %v2398, %v2396
        %v2479 = vpack.c.b16 %v2399, %v2397
        %v2480 = vpack.c.b16 %v2402, %v2400
        %v2481 = vpack.c.b16 %v2403, %v2401
        %v2482 = vpack.c.b16 %v2406, %v2404
        %v2483 = vpack.c.b16 %v2407, %v2405
        %v2484 = vpack.c.b16 %v2410, %v2408
        %v2485 = vpack.c.b16 %v2411, %v2409
        %v2486 = vpack.c.b16 %v2414, %v2412
        %v2487 = vpack.c.b16 %v2415, %v2413
        %v2488 = vpack.c.b16 %v2418, %v2416
        %v2489 = vpack.c.b16 %v2419, %v2417
        %v2490 = vpack.c.b16 %v2422, %v2420
        %v2491 = vpack.c.b16 %v2423, %v2421
        %v2492 = vpack.c.b16 %v2426, %v2424
        %v2493 = vpack.c.b16 %v2427, %v2425
        %v2494 = vpack.c.b16 %v2430, %v2428
        %v2495 = vpack.c.b16 %v2431, %v2429
        %2560 = vmatpush.bf16.msra.mxu0 %v2446
        %2561 = vmatpush.bf16.msra.mxu0 %v2444
        %2562 = vmatpush.bf16.msra.mxu0 %v2442
        %2563 = vmatpush.bf16.msra.mxu0 %v2440
        %2564 = vmatpush.bf16.msra.mxu0 %v2438
        %2565 = vmatpush.bf16.msra.mxu0 %v2436
        %2566 = vmatpush.bf16.msra.mxu0 %v2434
        %2567 = vmatpush.bf16.msra.mxu0 %v2432
        %2568 = vmatmul.bf16.gmra.mxu0 %v2166
        %v2569 = vpop.f32.mrf.mxu0
        %v2570 = vadd.f32 %v2236, %v2569
        %v2571 = vpop.f32.mrf.mxu0
        %2572 = vdwg.mxu0
        %2573 = vmatpush.bf16.msra.mxu0 %v2462
        %2574 = vmatpush.bf16.msra.mxu0 %v2460
        %2575 = vmatpush.bf16.msra.mxu0 %v2458
        %2576 = vmatpush.bf16.msra.mxu0 %v2456
        %2577 = vmatpush.bf16.msra.mxu0 %v2454
        %2578 = vmatpush.bf16.msra.mxu0 %v2452
        %2579 = vmatpush.bf16.msra.mxu0 %v2450
        %2580 = vmatpush.bf16.msra.mxu0 %v2448
        %2581 = vmatmul.bf16.gmra.mxu0 %v2167
        %v2582 = vpop.f32.mrf.mxu0
        %v2583 = vadd.f32 %v2570, %v2582
        %v2584 = vpop.f32.mrf.mxu0
        %2585 = vdwg.mxu0
        %2586 = vmatpush.bf16.msra.mxu0 %v2478
        %2587 = vmatpush.bf16.msra.mxu0 %v2476
        %2588 = vmatpush.bf16.msra.mxu0 %v2474
        %2589 = vmatpush.bf16.msra.mxu0 %v2472
        %2590 = vmatpush.bf16.msra.mxu0 %v2470
        %2591 = vmatpush.bf16.msra.mxu0 %v2468
        %2592 = vmatpush.bf16.msra.mxu0 %v2466
        %2593 = vmatpush.bf16.msra.mxu0 %v2464
        %2594 = vmatmul.bf16.gmra.mxu0 %v2168
        %v2595 = vpop.f32.mrf.mxu0
        %v2596 = vadd.f32 %v2583, %v2595
        %v2597 = vpop.f32.mrf.mxu0
        %2598 = vdwg.mxu0
        %2599 = vmatpush.bf16.msra.mxu0 %v2494
        %2600 = vmatpush.bf16.msra.mxu0 %v2492
        %2601 = vmatpush.bf16.msra.mxu0 %v2490
        %2602 = vmatpush.bf16.msra.mxu0 %v2488
        %2603 = vmatpush.bf16.msra.mxu0 %v2486
        %2604 = vmatpush.bf16.msra.mxu0 %v2484
        %2605 = vmatpush.bf16.msra.mxu0 %v2482
        %2606 = vmatpush.bf16.msra.mxu0 %v2480
        %2607 = vmatmul.bf16.gmra.mxu0 %v2169
        %v2608 = vpop.f32.mrf.mxu0
        %v2609 = vadd.f32 %v2596, %v2608
        %v2610 = vpop.f32.mrf.mxu0
        %2611 = vdwg.mxu0
        %2612 = vmatpush.bf16.msra.mxu0 %v2447
        %2613 = vmatpush.bf16.msra.mxu0 %v2445
        %2614 = vmatpush.bf16.msra.mxu0 %v2443
        %2615 = vmatpush.bf16.msra.mxu0 %v2441
        %2616 = vmatpush.bf16.msra.mxu0 %v2439
        %2617 = vmatpush.bf16.msra.mxu0 %v2437
        %2618 = vmatpush.bf16.msra.mxu0 %v2435
        %2619 = vmatpush.bf16.msra.mxu0 %v2433
        %2620 = vmatmul.bf16.gmra.mxu0 %v2166
        %v2621 = vpop.f32.mrf.mxu0
        %v2622 = vadd.f32 %v2237, %v2621
        %v2623 = vpop.f32.mrf.mxu0
        %2624 = vdwg.mxu0
        %2625 = vmatpush.bf16.msra.mxu0 %v2463
        %2626 = vmatpush.bf16.msra.mxu0 %v2461
        %2627 = vmatpush.bf16.msra.mxu0 %v2459
        %2628 = vmatpush.bf16.msra.mxu0 %v2457
        %2629 = vmatpush.bf16.msra.mxu0 %v2455
        %2630 = vmatpush.bf16.msra.mxu0 %v2453
        %2631 = vmatpush.bf16.msra.mxu0 %v2451
        %2632 = vmatpush.bf16.msra.mxu0 %v2449
        %2633 = vmatmul.bf16.gmra.mxu0 %v2167
        %v2634 = vpop.f32.mrf.mxu0
        %v2635 = vadd.f32 %v2622, %v2634
        %v2636 = vpop.f32.mrf.mxu0
        %2637 = vdwg.mxu0
        %2638 = vmatpush.bf16.msra.mxu0 %v2479
        %2639 = vmatpush.bf16.msra.mxu0 %v2477
        %2640 = vmatpush.bf16.msra.mxu0 %v2475
        %2641 = vmatpush.bf16.msra.mxu0 %v2473
        %2642 = vmatpush.bf16.msra.mxu0 %v2471
        %2643 = vmatpush.bf16.msra.mxu0 %v2469
        %2644 = vmatpush.bf16.msra.mxu0 %v2467
        %2645 = vmatpush.bf16.msra.mxu0 %v2465
        %2646 = vmatmul.bf16.gmra.mxu0 %v2168
        %v2647 = vpop.f32.mrf.mxu0
        %v2648 = vadd.f32 %v2635, %v2647
        %v2649 = vpop.f32.mrf.mxu0
        %2650 = vdwg.mxu0
        %2651 = vmatpush.bf16.msra.mxu0 %v2495
        %2652 = vmatpush.bf16.msra.mxu0 %v2493
        %2653 = vmatpush.bf16.msra.mxu0 %v2491
        %2654 = vmatpush.bf16.msra.mxu0 %v2489
        %2655 = vmatpush.bf16.msra.mxu0 %v2487
        %2656 = vmatpush.bf16.msra.mxu0 %v2485
        %2657 = vmatpush.bf16.msra.mxu0 %v2483
        %2658 = vmatpush.bf16.msra.mxu0 %v2481
        %2659 = vmatmul.bf16.gmra.mxu0 %v2169
        %v2660 = vpop.f32.mrf.mxu0
        %v2661 = vadd.f32 %v2648, %v2660
        %v2662 = vpop.f32.mrf.mxu0
        %2663 = vdwg.mxu0
        %v2664 = vmul.f32 %v2661, 0.5
        %v2665 = vmul.f32 %v2664, 1.442695
        %v2666 = vpow.pop %v2665
        %v2667 = vld [vmem:[%s409] sm:$0xff]
        %v2668 = vmul.f32 %v2666, %v2667
        %v2669 = vadd.f32 %v2609, %v2668
        %v2670 = vpack.c.bf16 %v2669, %v2669
        %v2671 = vld [vmem:[%s6] sm:$0xff]
        %v2672 = vld [vmem:[%s6 + $0x8] sm:$0xff]
        %v2673 = vld [vmem:[%s6 + $0x10] sm:$0xff]
        %v2674 = vld [vmem:[%s6 + $0x18] sm:$0xff]
        %v2675 = vld [vmem:[%s6 + $0x20] sm:$0xff]
        %v2676 = vld [vmem:[%s6 + $0x28] sm:$0xff]
        %v2677 = vld [vmem:[%s6 + $0x30] sm:$0xff]
        %v2678 = vld [vmem:[%s6 + $0x38] sm:$0xff]
        %v2679 = vld [vmem:[%s6 + $0x40] sm:$0xff]
        %v2680 = vld [vmem:[%s6 + $0x48] sm:$0xff]
        %v2681 = vld [vmem:[%s6 + $0x50] sm:$0xff]
        %v2682 = vld [vmem:[%s6 + $0x58] sm:$0xff]
        %v2683 = vld [vmem:[%s6 + $0x60] sm:$0xff]
        %v2684 = vld [vmem:[%s6 + $0x68] sm:$0xff]
        %v2685 = vld [vmem:[%s6 + $0x70] sm:$0xff]
        %v2686 = vld [vmem:[%s6 + $0x78] sm:$0xff]
        %v2687 = vld [vmem:[%s6 + $0x80] sm:$0xff]
        %v2688 = vld [vmem:[%s6 + $0x88] sm:$0xff]
        %v2689 = vld [vmem:[%s6 + $0x90] sm:$0xff]
        %v2690 = vld [vmem:[%s6 + $0x98] sm:$0xff]
        %v2691 = vld [vmem:[%s6 + $0xa0] sm:$0xff]
        %v2692 = vld [vmem:[%s6 + $0xa8] sm:$0xff]
        %v2693 = vld [vmem:[%s6 + $0xb0] sm:$0xff]
        %v2694 = vld [vmem:[%s6 + $0xb8] sm:$0xff]
        %v2695 = vld [vmem:[%s6 + $0xc0] sm:$0xff]
        %v2696 = vld [vmem:[%s6 + $0xc8] sm:$0xff]
        %v2697 = vld [vmem:[%s6 + $0xd0] sm:$0xff]
        %v2698 = vld [vmem:[%s6 + $0xd8] sm:$0xff]
        %v2699 = vld [vmem:[%s6 + $0xe0] sm:$0xff]
        %v2700 = vld [vmem:[%s6 + $0xe8] sm:$0xff]
        %v2701 = vld [vmem:[%s6 + $0xf0] sm:$0xff]
        %v2702 = vld [vmem:[%s6 + $0xf8] sm:$0xff]
        %v2703 = vld [vmem:[%s7] sm:$0xf]
        %v2705 = vperm.slane %v2703, 0
        %v2706 = vperm.slane %v2703, 1
        %v2707 = vperm.slane %v2703, 2
        %v2708 = vperm.slane %v2703, 3
        %v2745 = vunpack.c.l.b16 %v2671
        %v2746 = vunpack.c.h.b16 %v2671
        %v2747 = vunpack.c.l.b16 %v2672
        %v2748 = vunpack.c.h.b16 %v2672
        %v2749 = vunpack.c.l.b16 %v2673
        %v2750 = vunpack.c.h.b16 %v2673
        %v2751 = vunpack.c.l.b16 %v2674
        %v2752 = vunpack.c.h.b16 %v2674
        %v2753 = vunpack.c.l.b16 %v2675
        %v2754 = vunpack.c.h.b16 %v2675
        %v2755 = vunpack.c.l.b16 %v2676
        %v2756 = vunpack.c.h.b16 %v2676
        %v2757 = vunpack.c.l.b16 %v2677
        %v2758 = vunpack.c.h.b16 %v2677
        %v2759 = vunpack.c.l.b16 %v2678
        %v2760 = vunpack.c.h.b16 %v2678
        %v2761 = vunpack.c.l.b16 %v2679
        %v2762 = vunpack.c.h.b16 %v2679
        %v2763 = vunpack.c.l.b16 %v2680
        %v2764 = vunpack.c.h.b16 %v2680
        %v2765 = vunpack.c.l.b16 %v2681
        %v2766 = vunpack.c.h.b16 %v2681
        %v2767 = vunpack.c.l.b16 %v2682
        %v2768 = vunpack.c.h.b16 %v2682
        %v2769 = vunpack.c.l.b16 %v2683
        %v2770 = vunpack.c.h.b16 %v2683
        %v2771 = vunpack.c.l.b16 %v2684
        %v2772 = vunpack.c.h.b16 %v2684
        %v2773 = vunpack.c.l.b16 %v2685
        %v2774 = vunpack.c.h.b16 %v2685
        %v2775 = vunpack.c.l.b16 %v2686
        %v2776 = vunpack.c.h.b16 %v2686
        %v2777 = vunpack.c.l.b16 %v2687
        %v2778 = vunpack.c.h.b16 %v2687
        %v2779 = vunpack.c.l.b16 %v2688
        %v2780 = vunpack.c.h.b16 %v2688
        %v2781 = vunpack.c.l.b16 %v2689
        %v2782 = vunpack.c.h.b16 %v2689
        %v2783 = vunpack.c.l.b16 %v2690
        %v2784 = vunpack.c.h.b16 %v2690
        %v2785 = vunpack.c.l.b16 %v2691
        %v2786 = vunpack.c.h.b16 %v2691
        %v2787 = vunpack.c.l.b16 %v2692
        %v2788 = vunpack.c.h.b16 %v2692
        %v2789 = vunpack.c.l.b16 %v2693
        %v2790 = vunpack.c.h.b16 %v2693
        %v2791 = vunpack.c.l.b16 %v2694
        %v2792 = vunpack.c.h.b16 %v2694
        %v2793 = vunpack.c.l.b16 %v2695
        %v2794 = vunpack.c.h.b16 %v2695
        %v2795 = vunpack.c.l.b16 %v2696
        %v2796 = vunpack.c.h.b16 %v2696
        %v2797 = vunpack.c.l.b16 %v2697
        %v2798 = vunpack.c.h.b16 %v2697
        %v2799 = vunpack.c.l.b16 %v2698
        %v2800 = vunpack.c.h.b16 %v2698
        %v2801 = vunpack.c.l.b16 %v2699
        %v2802 = vunpack.c.h.b16 %v2699
        %v2803 = vunpack.c.l.b16 %v2700
        %v2804 = vunpack.c.h.b16 %v2700
        %v2805 = vunpack.c.l.b16 %v2701
        %v2806 = vunpack.c.h.b16 %v2701
        %v2807 = vunpack.c.l.b16 %v2702
        %v2808 = vunpack.c.h.b16 %v2702
        %v2809 = vpack.c.b16 %v2749, %v2745
        %v2810 = vpack.c.b16 %v2750, %v2746
        %v2811 = vpack.c.b16 %v2751, %v2747
        %v2812 = vpack.c.b16 %v2752, %v2748
        %v2813 = vpack.c.b16 %v2757, %v2753
        %v2814 = vpack.c.b16 %v2758, %v2754
        %v2815 = vpack.c.b16 %v2759, %v2755
        %v2816 = vpack.c.b16 %v2760, %v2756
        %v2817 = vpack.c.b16 %v2765, %v2761
        %v2818 = vpack.c.b16 %v2766, %v2762
        %v2819 = vpack.c.b16 %v2767, %v2763
        %v2820 = vpack.c.b16 %v2768, %v2764
        %v2821 = vpack.c.b16 %v2773, %v2769
        %v2822 = vpack.c.b16 %v2774, %v2770
        %v2823 = vpack.c.b16 %v2775, %v2771
        %v2824 = vpack.c.b16 %v2776, %v2772
        %v2825 = vpack.c.b16 %v2781, %v2777
        %v2826 = vpack.c.b16 %v2782, %v2778
        %v2827 = vpack.c.b16 %v2783, %v2779
        %v2828 = vpack.c.b16 %v2784, %v2780
        %v2829 = vpack.c.b16 %v2789, %v2785
        %v2830 = vpack.c.b16 %v2790, %v2786
        %v2831 = vpack.c.b16 %v2791, %v2787
        %v2832 = vpack.c.b16 %v2792, %v2788
        %v2833 = vpack.c.b16 %v2797, %v2793
        %v2834 = vpack.c.b16 %v2798, %v2794
        %v2835 = vpack.c.b16 %v2799, %v2795
        %v2836 = vpack.c.b16 %v2800, %v2796
        %v2837 = vpack.c.b16 %v2805, %v2801
        %v2838 = vpack.c.b16 %v2806, %v2802
        %v2839 = vpack.c.b16 %v2807, %v2803
        %v2840 = vpack.c.b16 %v2808, %v2804
        %2873 = vmatpush.bf16.msra.mxu0 %v2837
        %2874 = vmatpush.bf16.msra.mxu0 %v2833
        %2875 = vmatpush.bf16.msra.mxu0 %v2829
        %2876 = vmatpush.bf16.msra.mxu0 %v2825
        %2877 = vmatpush.bf16.msra.mxu0 %v2821
        %2878 = vmatpush.bf16.msra.mxu0 %v2817
        %2879 = vmatpush.bf16.msra.mxu0 %v2813
        %2880 = vmatpush.bf16.msra.mxu0 %v2809
        %2881 = vmatmul.bf16.gmra.mxu0 %v2670
        %v2882 = vpop.f32.mrf.mxu0
        %v2883 = vadd.f32 %v2705, %v2882
        %v2884 = vpop.f32.mrf.mxu0
        %2885 = vdwg.mxu0
        %2886 = vmatpush.bf16.msra.mxu0 %v2838
        %2887 = vmatpush.bf16.msra.mxu0 %v2834
        %2888 = vmatpush.bf16.msra.mxu0 %v2830
        %2889 = vmatpush.bf16.msra.mxu0 %v2826
        %2890 = vmatpush.bf16.msra.mxu0 %v2822
        %2891 = vmatpush.bf16.msra.mxu0 %v2818
        %2892 = vmatpush.bf16.msra.mxu0 %v2814
        %2893 = vmatpush.bf16.msra.mxu0 %v2810
        %2894 = vmatmul.bf16.gmra.mxu0 %v2670
        %v2895 = vpop.f32.mrf.mxu0
        %v2896 = vadd.f32 %v2706, %v2895
        %v2897 = vpop.f32.mrf.mxu0
        %2898 = vdwg.mxu0
        %2899 = vmatpush.bf16.msra.mxu0 %v2839
        %2900 = vmatpush.bf16.msra.mxu0 %v2835
        %2901 = vmatpush.bf16.msra.mxu0 %v2831
        %2902 = vmatpush.bf16.msra.mxu0 %v2827
        %2903 = vmatpush.bf16.msra.mxu0 %v2823
        %2904 = vmatpush.bf16.msra.mxu0 %v2819
        %2905 = vmatpush.bf16.msra.mxu0 %v2815
        %2906 = vmatpush.bf16.msra.mxu0 %v2811
        %2907 = vmatmul.bf16.gmra.mxu0 %v2670
        %v2908 = vpop.f32.mrf.mxu0
        %v2909 = vadd.f32 %v2707, %v2908
        %v2910 = vpop.f32.mrf.mxu0
        %2911 = vdwg.mxu0
        %2912 = vmatpush.bf16.msra.mxu0 %v2840
        %2913 = vmatpush.bf16.msra.mxu0 %v2836
        %2914 = vmatpush.bf16.msra.mxu0 %v2832
        %2915 = vmatpush.bf16.msra.mxu0 %v2828
        %2916 = vmatpush.bf16.msra.mxu0 %v2824
        %2917 = vmatpush.bf16.msra.mxu0 %v2820
        %2918 = vmatpush.bf16.msra.mxu0 %v2816
        %2919 = vmatpush.bf16.msra.mxu0 %v2812
        %2920 = vmatmul.bf16.gmra.mxu0 %v2670
        %v2921 = vpop.f32.mrf.mxu0
        %v2922 = vadd.f32 %v2708, %v2921
        %v2923 = vpop.f32.mrf.mxu0
        %2924 = vdwg.mxu0
        %v2925 = vmax.f32 %v2883, 0.0
        %v2926 = vmax.f32 %v2896, 0.0
        %v2927 = vmax.f32 %v2909, 0.0
        %v2928 = vmax.f32 %v2922, 0.0
        %v2929 = vpack.c.bf16 %v2925, %v2925
        %v2930 = vpack.c.bf16 %v2926, %v2926
        %v2931 = vpack.c.bf16 %v2927, %v2927
        %v2932 = vpack.c.bf16 %v2928, %v2928
        %v2933 = vld [vmem:[%s8] sm:$0xff]
        %v2934 = vld [vmem:[%s8 + $0x8] sm:$0xff]
        %v2935 = vld [vmem:[%s8 + $0x10] sm:$0xff]
        %v2936 = vld [vmem:[%s8 + $0x18] sm:$0xf]
        %v2937 = vld [vmem:[%s8 + $0x1c] sm:$0xff]
        %v2938 = vld [vmem:[%s8 + $0x24] sm:$0xff]
        %v2939 = vld [vmem:[%s8 + $0x2c] sm:$0xff]
        %v2940 = vld [vmem:[%s8 + $0x34] sm:$0xf]
        %v2941 = vld [vmem:[%s8 + $0x38] sm:$0xff]
        %v2942 = vld [vmem:[%s8 + $0x40] sm:$0xff]
        %v2943 = vld [vmem:[%s8 + $0x48] sm:$0xff]
        %v2944 = vld [vmem:[%s8 + $0x50] sm:$0xf]
        %v2945 = vld [vmem:[%s8 + $0x54] sm:$0xff]
        %v2946 = vld [vmem:[%s8 + $0x5c] sm:$0xff]
        %v2947 = vld [vmem:[%s8 + $0x64] sm:$0xff]
        %v2948 = vld [vmem:[%s8 + $0x6c] sm:$0xf]
        %v2949 = vld [vmem:[%s8 + $0x70] sm:$0xff]
        %v2950 = vld [vmem:[%s8 + $0x78] sm:$0xff]
        %v2951 = vld [vmem:[%s8 + $0x80] sm:$0xff]
        %v2952 = vld [vmem:[%s8 + $0x88] sm:$0xf]
        %v2953 = vld [vmem:[%s8 + $0x8c] sm:$0xff]
        %v2954 = vld [vmem:[%s8 + $0x94] sm:$0xff]
        %v2955 = vld [vmem:[%s8 + $0x9c] sm:$0xff]
        %v2956 = vld [vmem:[%s8 + $0xa4] sm:$0xf]
        %v2957 = vld [vmem:[%s8 + $0xa8] sm:$0xff]
        %v2958 = vld [vmem:[%s8 + $0xb0] sm:$0xff]
        %v2959 = vld [vmem:[%s8 + $0xb8] sm:$0xff]
        %v2960 = vld [vmem:[%s8 + $0xc0] sm:$0xf]
        %v2961 = vld [vmem:[%s8 + $0xc4] sm:$0xff]
        %v2962 = vld [vmem:[%s8 + $0xcc] sm:$0xff]
        %v2963 = vld [vmem:[%s8 + $0xd4] sm:$0xff]
        %v2964 = vld [vmem:[%s8 + $0xdc] sm:$0xf]
        %v2965 = vld [vmem:[%s8 + $0xe0] sm:$0xff]
        %v2966 = vld [vmem:[%s8 + $0xe8] sm:$0xff]
        %v2967 = vld [vmem:[%s8 + $0xf0] sm:$0xff]
        %v2968 = vld [vmem:[%s8 + $0xf8] sm:$0xf]
        %v2969 = vld [vmem:[%s8 + $0xfc] sm:$0xff]
        %v2970 = vld [vmem:[%s8 + $0x104] sm:$0xff]
        %v2971 = vld [vmem:[%s8 + $0x10c] sm:$0xff]
        %v2972 = vld [vmem:[%s8 + $0x114] sm:$0xf]
        %v2973 = vld [vmem:[%s8 + $0x118] sm:$0xff]
        %v2974 = vld [vmem:[%s8 + $0x120] sm:$0xff]
        %v2975 = vld [vmem:[%s8 + $0x128] sm:$0xff]
        %v2976 = vld [vmem:[%s8 + $0x130] sm:$0xf]
        %v2977 = vld [vmem:[%s8 + $0x134] sm:$0xff]
        %v2978 = vld [vmem:[%s8 + $0x13c] sm:$0xff]
        %v2979 = vld [vmem:[%s8 + $0x144] sm:$0xff]
        %v2980 = vld [vmem:[%s8 + $0x14c] sm:$0xf]
        %v2981 = vld [vmem:[%s8 + $0x150] sm:$0xff]
        %v2982 = vld [vmem:[%s8 + $0x158] sm:$0xff]
        %v2983 = vld [vmem:[%s8 + $0x160] sm:$0xff]
        %v2984 = vld [vmem:[%s8 + $0x168] sm:$0xf]
        %v2985 = vld [vmem:[%s8 + $0x16c] sm:$0xff]
        %v2986 = vld [vmem:[%s8 + $0x174] sm:$0xff]
        %v2987 = vld [vmem:[%s8 + $0x17c] sm:$0xff]
        %v2988 = vld [vmem:[%s8 + $0x184] sm:$0xf]
        %v2989 = vld [vmem:[%s8 + $0x188] sm:$0xff]
        %v2990 = vld [vmem:[%s8 + $0x190] sm:$0xff]
        %v2991 = vld [vmem:[%s8 + $0x198] sm:$0xff]
        %v2992 = vld [vmem:[%s8 + $0x1a0] sm:$0xf]
        %v2993 = vld [vmem:[%s8 + $0x1a4] sm:$0xff]
        %v2994 = vld [vmem:[%s8 + $0x1ac] sm:$0xff]
        %v2995 = vld [vmem:[%s8 + $0x1b4] sm:$0xff]
        %v2996 = vld [vmem:[%s8 + $0x1bc] sm:$0xf]
        %v2997 = vld [vmem:[%s8 + $0x1c0] sm:$0xff]
        %v2998 = vld [vmem:[%s8 + $0x1c8] sm:$0xff]
        %v2999 = vld [vmem:[%s8 + $0x1d0] sm:$0xff]
        %v3000 = vld [vmem:[%s8 + $0x1d8] sm:$0xf]
        %v3001 = vld [vmem:[%s8 + $0x1dc] sm:$0xff]
        %v3002 = vld [vmem:[%s8 + $0x1e4] sm:$0xff]
        %v3003 = vld [vmem:[%s8 + $0x1ec] sm:$0xff]
        %v3004 = vld [vmem:[%s8 + $0x1f4] sm:$0xf]
        %v3005 = vld [vmem:[%s8 + $0x1f8] sm:$0xff]
        %v3006 = vld [vmem:[%s8 + $0x200] sm:$0xff]
        %v3007 = vld [vmem:[%s8 + $0x208] sm:$0xff]
        %v3008 = vld [vmem:[%s8 + $0x210] sm:$0xf]
        %v3009 = vld [vmem:[%s8 + $0x214] sm:$0xff]
        %v3010 = vld [vmem:[%s8 + $0x21c] sm:$0xff]
        %v3011 = vld [vmem:[%s8 + $0x224] sm:$0xff]
        %v3012 = vld [vmem:[%s8 + $0x22c] sm:$0xf]
        %v3013 = vld [vmem:[%s8 + $0x230] sm:$0xff]
        %v3014 = vld [vmem:[%s8 + $0x238] sm:$0xff]
        %v3015 = vld [vmem:[%s8 + $0x240] sm:$0xff]
        %v3016 = vld [vmem:[%s8 + $0x248] sm:$0xf]
        %v3017 = vld [vmem:[%s8 + $0x24c] sm:$0xff]
        %v3018 = vld [vmem:[%s8 + $0x254] sm:$0xff]
        %v3019 = vld [vmem:[%s8 + $0x25c] sm:$0xff]
        %v3020 = vld [vmem:[%s8 + $0x264] sm:$0xf]
        %v3021 = vld [vmem:[%s8 + $0x268] sm:$0xff]
        %v3022 = vld [vmem:[%s8 + $0x270] sm:$0xff]
        %v3023 = vld [vmem:[%s8 + $0x278] sm:$0xff]
        %v3024 = vld [vmem:[%s8 + $0x280] sm:$0xf]
        %v3025 = vld [vmem:[%s8 + $0x284] sm:$0xff]
        %v3026 = vld [vmem:[%s8 + $0x28c] sm:$0xff]
        %v3027 = vld [vmem:[%s8 + $0x294] sm:$0xff]
        %v3028 = vld [vmem:[%s8 + $0x29c] sm:$0xf]
        %v3029 = vld [vmem:[%s8 + $0x2a0] sm:$0xff]
        %v3030 = vld [vmem:[%s8 + $0x2a8] sm:$0xff]
        %v3031 = vld [vmem:[%s8 + $0x2b0] sm:$0xff]
        %v3032 = vld [vmem:[%s8 + $0x2b8] sm:$0xf]
        %v3033 = vld [vmem:[%s8 + $0x2bc] sm:$0xff]
        %v3034 = vld [vmem:[%s8 + $0x2c4] sm:$0xff]
        %v3035 = vld [vmem:[%s8 + $0x2cc] sm:$0xff]
        %v3036 = vld [vmem:[%s8 + $0x2d4] sm:$0xf]
        %v3037 = vld [vmem:[%s8 + $0x2d8] sm:$0xff]
        %v3038 = vld [vmem:[%s8 + $0x2e0] sm:$0xff]
        %v3039 = vld [vmem:[%s8 + $0x2e8] sm:$0xff]
        %v3040 = vld [vmem:[%s8 + $0x2f0] sm:$0xf]
        %v3041 = vld [vmem:[%s8 + $0x2f4] sm:$0xff]
        %v3042 = vld [vmem:[%s8 + $0x2fc] sm:$0xff]
        %v3043 = vld [vmem:[%s8 + $0x304] sm:$0xff]
        %v3044 = vld [vmem:[%s8 + $0x30c] sm:$0xf]
        %v3045 = vld [vmem:[%s8 + $0x310] sm:$0xff]
        %v3046 = vld [vmem:[%s8 + $0x318] sm:$0xff]
        %v3047 = vld [vmem:[%s8 + $0x320] sm:$0xff]
        %v3048 = vld [vmem:[%s8 + $0x328] sm:$0xf]
        %v3049 = vld [vmem:[%s8 + $0x32c] sm:$0xff]
        %v3050 = vld [vmem:[%s8 + $0x334] sm:$0xff]
        %v3051 = vld [vmem:[%s8 + $0x33c] sm:$0xff]
        %v3052 = vld [vmem:[%s8 + $0x344] sm:$0xf]
        %v3053 = vld [vmem:[%s8 + $0x348] sm:$0xff]
        %v3054 = vld [vmem:[%s8 + $0x350] sm:$0xff]
        %v3055 = vld [vmem:[%s8 + $0x358] sm:$0xff]
        %v3056 = vld [vmem:[%s8 + $0x360] sm:$0xf]
        %v3057 = vld [vmem:[%s8 + $0x364] sm:$0xff]
        %v3058 = vld [vmem:[%s8 + $0x36c] sm:$0xff]
        %v3059 = vld [vmem:[%s8 + $0x374] sm:$0xff]
        %v3060 = vld [vmem:[%s8 + $0x37c] sm:$0xf]
        %v3061 = vld [vmem:[%s8 + $0x380] sm:$0xff]
        %v3062 = vld [vmem:[%s8 + $0x388] sm:$0xff]
        %v3063 = vld [vmem:[%s8 + $0x390] sm:$0xff]
        %v3064 = vld [vmem:[%s8 + $0x398] sm:$0xf]
        %v3065 = vld [vmem:[%s8 + $0x39c] sm:$0xff]
        %v3066 = vld [vmem:[%s8 + $0x3a4] sm:$0xff]
        %v3067 = vld [vmem:[%s8 + $0x3ac] sm:$0xff]
        %v3068 = vld [vmem:[%s8 + $0x3b4] sm:$0xf]
        %v3069 = vld [vmem:[%s8 + $0x3b8] sm:$0xff]
        %v3070 = vld [vmem:[%s8 + $0x3c0] sm:$0xff]
        %v3071 = vld [vmem:[%s8 + $0x3c8] sm:$0xff]
        %v3072 = vld [vmem:[%s8 + $0x3d0] sm:$0xf]
        %v3073 = vld [vmem:[%s8 + $0x3d4] sm:$0xff]
        %v3074 = vld [vmem:[%s8 + $0x3dc] sm:$0xff]
        %v3075 = vld [vmem:[%s8 + $0x3e4] sm:$0xff]
        %v3076 = vld [vmem:[%s8 + $0x3ec] sm:$0xf]
        %v3077 = vld [vmem:[%s8 + $0x3f0] sm:$0xff]
        %v3078 = vld [vmem:[%s8 + $0x3f8] sm:$0xff]
        %v3079 = vld [vmem:[%s8 + $0x400] sm:$0xff]
        %v3080 = vld [vmem:[%s8 + $0x408] sm:$0xf]
        %v3081 = vld [vmem:[%s8 + $0x40c] sm:$0xff]
        %v3082 = vld [vmem:[%s8 + $0x414] sm:$0xff]
        %v3083 = vld [vmem:[%s8 + $0x41c] sm:$0xff]
        %v3084 = vld [vmem:[%s8 + $0x424] sm:$0xf]
        %v3085 = vld [vmem:[%s8 + $0x428] sm:$0xff]
        %v3086 = vld [vmem:[%s8 + $0x430] sm:$0xff]
        %v3087 = vld [vmem:[%s8 + $0x438] sm:$0xff]
        %v3088 = vld [vmem:[%s8 + $0x440] sm:$0xf]
        %v3089 = vld [vmem:[%s8 + $0x444] sm:$0xff]
        %v3090 = vld [vmem:[%s8 + $0x44c] sm:$0xff]
        %v3091 = vld [vmem:[%s8 + $0x454] sm:$0xff]
        %v3092 = vld [vmem:[%s8 + $0x45c] sm:$0xf]
        %v3093 = vld [vmem:[%s8 + $0x460] sm:$0xff]
        %v3094 = vld [vmem:[%s8 + $0x468] sm:$0xff]
        %v3095 = vld [vmem:[%s8 + $0x470] sm:$0xff]
        %v3096 = vld [vmem:[%s8 + $0x478] sm:$0xf]
        %v3097 = vld [vmem:[%s8 + $0x47c] sm:$0xff]
        %v3098 = vld [vmem:[%s8 + $0x484] sm:$0xff]
        %v3099 = vld [vmem:[%s8 + $0x48c] sm:$0xff]
        %v3100 = vld [vmem:[%s8 + $0x494] sm:$0xf]
        %v3101 = vld [vmem:[%s8 + $0x498] sm:$0xff]
        %v3102 = vld [vmem:[%s8 + $0x4a0] sm:$0xff]
        %v3103 = vld [vmem:[%s8 + $0x4a8] sm:$0xff]
        %v3104 = vld [vmem:[%s8 + $0x4b0] sm:$0xf]
        %v3105 = vld [vmem:[%s8 + $0x4b4] sm:$0xff]
        %v3106 = vld [vmem:[%s8 + $0x4bc] sm:$0xff]
        %v3107 = vld [vmem:[%s8 + $0x4c4] sm:$0xff]
        %v3108 = vld [vmem:[%s8 + $0x4cc] sm:$0xf]
        %v3109 = vld [vmem:[%s8 + $0x4d0] sm:$0xff]
        %v3110 = vld [vmem:[%s8 + $0x4d8] sm:$0xff]
        %v3111 = vld [vmem:[%s8 + $0x4e0] sm:$0xff]
        %v3112 = vld [vmem:[%s8 + $0x4e8] sm:$0xf]
        %v3113 = vld [vmem:[%s8 + $0x4ec] sm:$0xff]
        %v3114 = vld [vmem:[%s8 + $0x4f4] sm:$0xff]
        %v3115 = vld [vmem:[%s8 + $0x4fc] sm:$0xff]
        %v3116 = vld [vmem:[%s8 + $0x504] sm:$0xf]
        %v3117 = vld [vmem:[%s8 + $0x508] sm:$0xff]
        %v3118 = vld [vmem:[%s8 + $0x510] sm:$0xff]
        %v3119 = vld [vmem:[%s8 + $0x518] sm:$0xff]
        %v3120 = vld [vmem:[%s8 + $0x520] sm:$0xf]
        %v3121 = vld [vmem:[%s8 + $0x524] sm:$0xff]
        %v3122 = vld [vmem:[%s8 + $0x52c] sm:$0xff]
        %v3123 = vld [vmem:[%s8 + $0x534] sm:$0xff]
        %v3124 = vld [vmem:[%s8 + $0x53c] sm:$0xf]
        %v3125 = vld [vmem:[%s8 + $0x540] sm:$0xff]
        %v3126 = vld [vmem:[%s8 + $0x548] sm:$0xff]
        %v3127 = vld [vmem:[%s8 + $0x550] sm:$0xff]
        %v3128 = vld [vmem:[%s8 + $0x558] sm:$0xf]
        %v3129 = vld [vmem:[%s8 + $0x55c] sm:$0xff]
        %v3130 = vld [vmem:[%s8 + $0x564] sm:$0xff]
        %v3131 = vld [vmem:[%s8 + $0x56c] sm:$0xff]
        %v3132 = vld [vmem:[%s8 + $0x574] sm:$0xf]
        %v3133 = vld [vmem:[%s8 + $0x578] sm:$0xff]
        %v3134 = vld [vmem:[%s8 + $0x580] sm:$0xff]
        %v3135 = vld [vmem:[%s8 + $0x588] sm:$0xff]
        %v3136 = vld [vmem:[%s8 + $0x590] sm:$0xf]
        %v3137 = vld [vmem:[%s8 + $0x594] sm:$0xff]
        %v3138 = vld [vmem:[%s8 + $0x59c] sm:$0xff]
        %v3139 = vld [vmem:[%s8 + $0x5a4] sm:$0xff]
        %v3140 = vld [vmem:[%s8 + $0x5ac] sm:$0xf]
        %v3141 = vld [vmem:[%s8 + $0x5b0] sm:$0xff]
        %v3142 = vld [vmem:[%s8 + $0x5b8] sm:$0xff]
        %v3143 = vld [vmem:[%s8 + $0x5c0] sm:$0xff]
        %v3144 = vld [vmem:[%s8 + $0x5c8] sm:$0xf]
        %v3145 = vld [vmem:[%s8 + $0x5cc] sm:$0xff]
        %v3146 = vld [vmem:[%s8 + $0x5d4] sm:$0xff]
        %v3147 = vld [vmem:[%s8 + $0x5dc] sm:$0xff]
        %v3148 = vld [vmem:[%s8 + $0x5e4] sm:$0xf]
        %v3149 = vld [vmem:[%s8 + $0x5e8] sm:$0xff]
        %v3150 = vld [vmem:[%s8 + $0x5f0] sm:$0xff]
        %v3151 = vld [vmem:[%s8 + $0x5f8] sm:$0xff]
        %v3152 = vld [vmem:[%s8 + $0x600] sm:$0xf]
        %v3153 = vld [vmem:[%s8 + $0x604] sm:$0xff]
        %v3154 = vld [vmem:[%s8 + $0x60c] sm:$0xff]
        %v3155 = vld [vmem:[%s8 + $0x614] sm:$0xff]
        %v3156 = vld [vmem:[%s8 + $0x61c] sm:$0xf]
        %v3157 = vld [vmem:[%s8 + $0x620] sm:$0xff]
        %v3158 = vld [vmem:[%s8 + $0x628] sm:$0xff]
        %v3159 = vld [vmem:[%s8 + $0x630] sm:$0xff]
        %v3160 = vld [vmem:[%s8 + $0x638] sm:$0xf]
        %v3161 = vld [vmem:[%s8 + $0x63c] sm:$0xff]
        %v3162 = vld [vmem:[%s8 + $0x644] sm:$0xff]
        %v3163 = vld [vmem:[%s8 + $0x64c] sm:$0xff]
        %v3164 = vld [vmem:[%s8 + $0x654] sm:$0xf]
        %v3165 = vld [vmem:[%s8 + $0x658] sm:$0xff]
        %v3166 = vld [vmem:[%s8 + $0x660] sm:$0xff]
        %v3167 = vld [vmem:[%s8 + $0x668] sm:$0xff]
        %v3168 = vld [vmem:[%s8 + $0x670] sm:$0xf]
        %v3169 = vld [vmem:[%s8 + $0x674] sm:$0xff]
        %v3170 = vld [vmem:[%s8 + $0x67c] sm:$0xff]
        %v3171 = vld [vmem:[%s8 + $0x684] sm:$0xff]
        %v3172 = vld [vmem:[%s8 + $0x68c] sm:$0xf]
        %v3173 = vld [vmem:[%s8 + $0x690] sm:$0xff]
        %v3174 = vld [vmem:[%s8 + $0x698] sm:$0xff]
        %v3175 = vld [vmem:[%s8 + $0x6a0] sm:$0xff]
        %v3176 = vld [vmem:[%s8 + $0x6a8] sm:$0xf]
        %v3177 = vld [vmem:[%s8 + $0x6ac] sm:$0xff]
        %v3178 = vld [vmem:[%s8 + $0x6b4] sm:$0xff]
        %v3179 = vld [vmem:[%s8 + $0x6bc] sm:$0xff]
        %v3180 = vld [vmem:[%s8 + $0x6c4] sm:$0xf]
        %v3181 = vld [vmem:[%s8 + $0x6c8] sm:$0xff]
        %v3182 = vld [vmem:[%s8 + $0x6d0] sm:$0xff]
        %v3183 = vld [vmem:[%s8 + $0x6d8] sm:$0xff]
        %v3184 = vld [vmem:[%s8 + $0x6e0] sm:$0xf]
        %v3185 = vld [vmem:[%s8 + $0x6e4] sm:$0xff]
        %v3186 = vld [vmem:[%s8 + $0x6ec] sm:$0xff]
        %v3187 = vld [vmem:[%s8 + $0x6f4] sm:$0xff]
        %v3188 = vld [vmem:[%s8 + $0x6fc] sm:$0xf]
        %v3189 = vld [vmem:[%s9] sm:$0xff]
        %v3191 = vperm.slane %v3189, 0
        %v3192 = vperm.slane %v3189, 1
        %v3193 = vperm.slane %v3189, 2
        %v3194 = vperm.slane %v3189, 3
        %v3195 = vperm.slane %v3189, 4
        %v3196 = vperm.slane %v3189, 5
        %v3197 = vperm.slane %v3189, 6
        %v3461 = vunpack.c.l.b16 %v2933
        %v3462 = vunpack.c.h.b16 %v2933
        %v3463 = vunpack.c.l.b16 %v2934
        %v3464 = vunpack.c.h.b16 %v2934
        %v3465 = vunpack.c.l.b16 %v2935
        %v3466 = vunpack.c.h.b16 %v2935
        %v3467 = vunpack.c.l.b16 %v2936
        %v3468 = vunpack.c.l.b16 %v2937
        %v3469 = vunpack.c.h.b16 %v2937
        %v3470 = vunpack.c.l.b16 %v2938
        %v3471 = vunpack.c.h.b16 %v2938
        %v3472 = vunpack.c.l.b16 %v2939
        %v3473 = vunpack.c.h.b16 %v2939
        %v3474 = vunpack.c.l.b16 %v2940
        %v3475 = vunpack.c.l.b16 %v2941
        %v3476 = vunpack.c.h.b16 %v2941
        %v3477 = vunpack.c.l.b16 %v2942
        %v3478 = vunpack.c.h.b16 %v2942
        %v3479 = vunpack.c.l.b16 %v2943
        %v3480 = vunpack.c.h.b16 %v2943
        %v3481 = vunpack.c.l.b16 %v2944
        %v3482 = vunpack.c.l.b16 %v2945
        %v3483 = vunpack.c.h.b16 %v2945
        %v3484 = vunpack.c.l.b16 %v2946
        %v3485 = vunpack.c.h.b16 %v2946
        %v3486 = vunpack.c.l.b16 %v2947
        %v3487 = vunpack.c.h.b16 %v2947
        %v3488 = vunpack.c.l.b16 %v2948
        %v3489 = vunpack.c.l.b16 %v2949
        %v3490 = vunpack.c.h.b16 %v2949
        %v3491 = vunpack.c.l.b16 %v2950
        %v3492 = vunpack.c.h.b16 %v2950
        %v3493 = vunpack.c.l.b16 %v2951
        %v3494 = vunpack.c.h.b16 %v2951
        %v3495 = vunpack.c.l.b16 %v2952
        %v3496 = vunpack.c.l.b16 %v2953
        %v3497 = vunpack.c.h.b16 %v2953
        %v3498 = vunpack.c.l.b16 %v2954
        %v3499 = vunpack.c.h.b16 %v2954
        %v3500 = vunpack.c.l.b16 %v2955
        %v3501 = vunpack.c.h.b16 %v2955
        %v3502 = vunpack.c.l.b16 %v2956
        %v3503 = vunpack.c.l.b16 %v2957
        %v3504 = vunpack.c.h.b16 %v2957
        %v3505 = vunpack.c.l.b16 %v2958
        %v3506 = vunpack.c.h.b16 %v2958
        %v3507 = vunpack.c.l.b16 %v2959
        %v3508 = vunpack.c.h.b16 %v2959
        %v3509 = vunpack.c.l.b16 %v2960
        %v3510 = vunpack.c.l.b16 %v2961
        %v3511 = vunpack.c.h.b16 %v2961
        %v3512 = vunpack.c.l.b16 %v2962
        %v3513 = vunpack.c.h.b16 %v2962
        %v3514 = vunpack.c.l.b16 %v2963
        %v3515 = vunpack.c.h.b16 %v2963
        %v3516 = vunpack.c.l.b16 %v2964
        %v3517 = vunpack.c.l.b16 %v2965
        %v3518 = vunpack.c.h.b16 %v2965
        %v3519 = vunpack.c.l.b16 %v2966
        %v3520 = vunpack.c.h.b16 %v2966
        %v3521 = vunpack.c.l.b16 %v2967
        %v3522 = vunpack.c.h.b16 %v2967
        %v3523 = vunpack.c.l.b16 %v2968
        %v3524 = vunpack.c.l.b16 %v2969
        %v3525 = vunpack.c.h.b16 %v2969
        %v3526 = vunpack.c.l.b16 %v2970
        %v3527 = vunpack.c.h.b16 %v2970
        %v3528 = vunpack.c.l.b16 %v2971
        %v3529 = vunpack.c.h.b16 %v2971
        %v3530 = vunpack.c.l.b16 %v2972
        %v3531 = vunpack.c.l.b16 %v2973
        %v3532 = vunpack.c.h.b16 %v2973
        %v3533 = vunpack.c.l.b16 %v2974
        %v3534 = vunpack.c.h.b16 %v2974
        %v3535 = vunpack.c.l.b16 %v2975
        %v3536 = vunpack.c.h.b16 %v2975
        %v3537 = vunpack.c.l.b16 %v2976
        %v3538 = vunpack.c.l.b16 %v2977
        %v3539 = vunpack.c.h.b16 %v2977
        %v3540 = vunpack.c.l.b16 %v2978
        %v3541 = vunpack.c.h.b16 %v2978
        %v3542 = vunpack.c.l.b16 %v2979
        %v3543 = vunpack.c.h.b16 %v2979
        %v3544 = vunpack.c.l.b16 %v2980
        %v3545 = vunpack.c.l.b16 %v2981
        %v3546 = vunpack.c.h.b16 %v2981
        %v3547 = vunpack.c.l.b16 %v2982
        %v3548 = vunpack.c.h.b16 %v2982
        %v3549 = vunpack.c.l.b16 %v2983
        %v3550 = vunpack.c.h.b16 %v2983
        %v3551 = vunpack.c.l.b16 %v2984
        %v3552 = vunpack.c.l.b16 %v2985
        %v3553 = vunpack.c.h.b16 %v2985
        %v3554 = vunpack.c.l.b16 %v2986
        %v3555 = vunpack.c.h.b16 %v2986
        %v3556 = vunpack.c.l.b16 %v2987
        %v3557 = vunpack.c.h.b16 %v2987
        %v3558 = vunpack.c.l.b16 %v2988
        %v3559 = vunpack.c.l.b16 %v2989
        %v3560 = vunpack.c.h.b16 %v2989
        %v3561 = vunpack.c.l.b16 %v2990
        %v3562 = vunpack.c.h.b16 %v2990
        %v3563 = vunpack.c.l.b16 %v2991
        %v3564 = vunpack.c.h.b16 %v2991
        %v3565 = vunpack.c.l.b16 %v2992
        %v3566 = vunpack.c.l.b16 %v2993
        %v3567 = vunpack.c.h.b16 %v2993
        %v3568 = vunpack.c.l.b16 %v2994
        %v3569 = vunpack.c.h.b16 %v2994
        %v3570 = vunpack.c.l.b16 %v2995
        %v3571 = vunpack.c.h.b16 %v2995
        %v3572 = vunpack.c.l.b16 %v2996
        %v3573 = vunpack.c.l.b16 %v2997
        %v3574 = vunpack.c.h.b16 %v2997
        %v3575 = vunpack.c.l.b16 %v2998
        %v3576 = vunpack.c.h.b16 %v2998
        %v3577 = vunpack.c.l.b16 %v2999
        %v3578 = vunpack.c.h.b16 %v2999
        %v3579 = vunpack.c.l.b16 %v3000
        %v3580 = vunpack.c.l.b16 %v3001
        %v3581 = vunpack.c.h.b16 %v3001
        %v3582 = vunpack.c.l.b16 %v3002
        %v3583 = vunpack.c.h.b16 %v3002
        %v3584 = vunpack.c.l.b16 %v3003
        %v3585 = vunpack.c.h.b16 %v3003
        %v3586 = vunpack.c.l.b16 %v3004
        %v3587 = vunpack.c.l.b16 %v3005
        %v3588 = vunpack.c.h.b16 %v3005
        %v3589 = vunpack.c.l.b16 %v3006
        %v3590 = vunpack.c.h.b16 %v3006
        %v3591 = vunpack.c.l.b16 %v3007
        %v3592 = vunpack.c.h.b16 %v3007
        %v3593 = vunpack.c.l.b16 %v3008
        %v3594 = vunpack.c.l.b16 %v3009
        %v3595 = vunpack.c.h.b16 %v3009
        %v3596 = vunpack.c.l.b16 %v3010
        %v3597 = vunpack.c.h.b16 %v3010
        %v3598 = vunpack.c.l.b16 %v3011
        %v3599 = vunpack.c.h.b16 %v3011
        %v3600 = vunpack.c.l.b16 %v3012
        %v3601 = vunpack.c.l.b16 %v3013
        %v3602 = vunpack.c.h.b16 %v3013
        %v3603 = vunpack.c.l.b16 %v3014
        %v3604 = vunpack.c.h.b16 %v3014
        %v3605 = vunpack.c.l.b16 %v3015
        %v3606 = vunpack.c.h.b16 %v3015
        %v3607 = vunpack.c.l.b16 %v3016
        %v3608 = vunpack.c.l.b16 %v3017
        %v3609 = vunpack.c.h.b16 %v3017
        %v3610 = vunpack.c.l.b16 %v3018
        %v3611 = vunpack.c.h.b16 %v3018
        %v3612 = vunpack.c.l.b16 %v3019
        %v3613 = vunpack.c.h.b16 %v3019
        %v3614 = vunpack.c.l.b16 %v3020
        %v3615 = vunpack.c.l.b16 %v3021
        %v3616 = vunpack.c.h.b16 %v3021
        %v3617 = vunpack.c.l.b16 %v3022
        %v3618 = vunpack.c.h.b16 %v3022
        %v3619 = vunpack.c.l.b16 %v3023
        %v3620 = vunpack.c.h.b16 %v3023
        %v3621 = vunpack.c.l.b16 %v3024
        %v3622 = vunpack.c.l.b16 %v3025
        %v3623 = vunpack.c.h.b16 %v3025
        %v3624 = vunpack.c.l.b16 %v3026
        %v3625 = vunpack.c.h.b16 %v3026
        %v3626 = vunpack.c.l.b16 %v3027
        %v3627 = vunpack.c.h.b16 %v3027
        %v3628 = vunpack.c.l.b16 %v3028
        %v3629 = vunpack.c.l.b16 %v3029
        %v3630 = vunpack.c.h.b16 %v3029
        %v3631 = vunpack.c.l.b16 %v3030
        %v3632 = vunpack.c.h.b16 %v3030
        %v3633 = vunpack.c.l.b16 %v3031
        %v3634 = vunpack.c.h.b16 %v3031
        %v3635 = vunpack.c.l.b16 %v3032
        %v3636 = vunpack.c.l.b16 %v3033
        %v3637 = vunpack.c.h.b16 %v3033
        %v3638 = vunpack.c.l.b16 %v3034
        %v3639 = vunpack.c.h.b16 %v3034
        %v3640 = vunpack.c.l.b16 %v3035
        %v3641 = vunpack.c.h.b16 %v3035
        %v3642 = vunpack.c.l.b16 %v3036
        %v3643 = vunpack.c.l.b16 %v3037
        %v3644 = vunpack.c.h.b16 %v3037
        %v3645 = vunpack.c.l.b16 %v3038
        %v3646 = vunpack.c.h.b16 %v3038
        %v3647 = vunpack.c.l.b16 %v3039
        %v3648 = vunpack.c.h.b16 %v3039
        %v3649 = vunpack.c.l.b16 %v3040
        %v3650 = vunpack.c.l.b16 %v3041
        %v3651 = vunpack.c.h.b16 %v3041
        %v3652 = vunpack.c.l.b16 %v3042
        %v3653 = vunpack.c.h.b16 %v3042
        %v3654 = vunpack.c.l.b16 %v3043
        %v3655 = vunpack.c.h.b16 %v3043
        %v3656 = vunpack.c.l.b16 %v3044
        %v3657 = vunpack.c.l.b16 %v3045
        %v3658 = vunpack.c.h.b16 %v3045
        %v3659 = vunpack.c.l.b16 %v3046
        %v3660 = vunpack.c.h.b16 %v3046
        %v3661 = vunpack.c.l.b16 %v3047
        %v3662 = vunpack.c.h.b16 %v3047
        %v3663 = vunpack.c.l.b16 %v3048
        %v3664 = vunpack.c.l.b16 %v3049
        %v3665 = vunpack.c.h.b16 %v3049
        %v3666 = vunpack.c.l.b16 %v3050
        %v3667 = vunpack.c.h.b16 %v3050
        %v3668 = vunpack.c.l.b16 %v3051
        %v3669 = vunpack.c.h.b16 %v3051
        %v3670 = vunpack.c.l.b16 %v3052
        %v3671 = vunpack.c.l.b16 %v3053
        %v3672 = vunpack.c.h.b16 %v3053
        %v3673 = vunpack.c.l.b16 %v3054
        %v3674 = vunpack.c.h.b16 %v3054
        %v3675 = vunpack.c.l.b16 %v3055
        %v3676 = vunpack.c.h.b16 %v3055
        %v3677 = vunpack.c.l.b16 %v3056
        %v3678 = vunpack.c.l.b16 %v3057
        %v3679 = vunpack.c.h.b16 %v3057
        %v3680 = vunpack.c.l.b16 %v3058
        %v3681 = vunpack.c.h.b16 %v3058
        %v3682 = vunpack.c.l.b16 %v3059
        %v3683 = vunpack.c.h.b16 %v3059
        %v3684 = vunpack.c.l.b16 %v3060
        %v3685 = vunpack.c.l.b16 %v3061
        %v3686 = vunpack.c.h.b16 %v3061
        %v3687 = vunpack.c.l.b16 %v3062
        %v3688 = vunpack.c.h.b16 %v3062
        %v3689 = vunpack.c.l.b16 %v3063
        %v3690 = vunpack.c.h.b16 %v3063
        %v3691 = vunpack.c.l.b16 %v3064
        %v3692 = vunpack.c.l.b16 %v3065
        %v3693 = vunpack.c.h.b16 %v3065
        %v3694 = vunpack.c.l.b16 %v3066
        %v3695 = vunpack.c.h.b16 %v3066
        %v3696 = vunpack.c.l.b16 %v3067
        %v3697 = vunpack.c.h.b16 %v3067
        %v3698 = vunpack.c.l.b16 %v3068
        %v3699 = vunpack.c.l.b16 %v3069
        %v3700 = vunpack.c.h.b16 %v3069
        %v3701 = vunpack.c.l.b16 %v3070
        %v3702 = vunpack.c.h.b16 %v3070
        %v3703 = vunpack.c.l.b16 %v3071
        %v3704 = vunpack.c.h.b16 %v3071
        %v3705 = vunpack.c.l.b16 %v3072
        %v3706 = vunpack.c.l.b16 %v3073
        %v3707 = vunpack.c.h.b16 %v3073
        %v3708 = vunpack.c.l.b16 %v3074
        %v3709 = vunpack.c.h.b16 %v3074
        %v3710 = vunpack.c.l.b16 %v3075
        %v3711 = vunpack.c.h.b16 %v3075
        %v3712 = vunpack.c.l.b16 %v3076
        %v3713 = vunpack.c.l.b16 %v3077
        %v3714 = vunpack.c.h.b16 %v3077
        %v3715 = vunpack.c.l.b16 %v3078
        %v3716 = vunpack.c.h.b16 %v3078
        %v3717 = vunpack.c.l.b16 %v3079
        %v3718 = vunpack.c.h.b16 %v3079
        %v3719 = vunpack.c.l.b16 %v3080
        %v3720 = vunpack.c.l.b16 %v3081
        %v3721 = vunpack.c.h.b16 %v3081
        %v3722 = vunpack.c.l.b16 %v3082
        %v3723 = vunpack.c.h.b16 %v3082
        %v3724 = vunpack.c.l.b16 %v3083
        %v3725 = vunpack.c.h.b16 %v3083
        %v3726 = vunpack.c.l.b16 %v3084
        %v3727 = vunpack.c.l.b16 %v3085
        %v3728 = vunpack.c.h.b16 %v3085
        %v3729 = vunpack.c.l.b16 %v3086
        %v3730 = vunpack.c.h.b16 %v3086
        %v3731 = vunpack.c.l.b16 %v3087
        %v3732 = vunpack.c.h.b16 %v3087
        %v3733 = vunpack.c.l.b16 %v3088
        %v3734 = vunpack.c.l.b16 %v3089
        %v3735 = vunpack.c.h.b16 %v3089
        %v3736 = vunpack.c.l.b16 %v3090
        %v3737 = vunpack.c.h.b16 %v3090
        %v3738 = vunpack.c.l.b16 %v3091
        %v3739 = vunpack.c.h.b16 %v3091
        %v3740 = vunpack.c.l.b16 %v3092
        %v3741 = vunpack.c.l.b16 %v3093
        %v3742 = vunpack.c.h.b16 %v3093
        %v3743 = vunpack.c.l.b16 %v3094
        %v3744 = vunpack.c.h.b16 %v3094
        %v3745 = vunpack.c.l.b16 %v3095
        %v3746 = vunpack.c.h.b16 %v3095
        %v3747 = vunpack.c.l.b16 %v3096
        %v3748 = vunpack.c.l.b16 %v3097
        %v3749 = vunpack.c.h.b16 %v3097
        %v3750 = vunpack.c.l.b16 %v3098
        %v3751 = vunpack.c.h.b16 %v3098
        %v3752 = vunpack.c.l.b16 %v3099
        %v3753 = vunpack.c.h.b16 %v3099
        %v3754 = vunpack.c.l.b16 %v3100
        %v3755 = vunpack.c.l.b16 %v3101
        %v3756 = vunpack.c.h.b16 %v3101
        %v3757 = vunpack.c.l.b16 %v3102
        %v3758 = vunpack.c.h.b16 %v3102
        %v3759 = vunpack.c.l.b16 %v3103
        %v3760 = vunpack.c.h.b16 %v3103
        %v3761 = vunpack.c.l.b16 %v3104
        %v3762 = vunpack.c.l.b16 %v3105
        %v3763 = vunpack.c.h.b16 %v3105
        %v3764 = vunpack.c.l.b16 %v3106
        %v3765 = vunpack.c.h.b16 %v3106
        %v3766 = vunpack.c.l.b16 %v3107
        %v3767 = vunpack.c.h.b16 %v3107
        %v3768 = vunpack.c.l.b16 %v3108
        %v3769 = vunpack.c.l.b16 %v3109
        %v3770 = vunpack.c.h.b16 %v3109
        %v3771 = vunpack.c.l.b16 %v3110
        %v3772 = vunpack.c.h.b16 %v3110
        %v3773 = vunpack.c.l.b16 %v3111
        %v3774 = vunpack.c.h.b16 %v3111
        %v3775 = vunpack.c.l.b16 %v3112
        %v3776 = vunpack.c.l.b16 %v3113
        %v3777 = vunpack.c.h.b16 %v3113
        %v3778 = vunpack.c.l.b16 %v3114
        %v3779 = vunpack.c.h.b16 %v3114
        %v3780 = vunpack.c.l.b16 %v3115
        %v3781 = vunpack.c.h.b16 %v3115
        %v3782 = vunpack.c.l.b16 %v3116
        %v3783 = vunpack.c.l.b16 %v3117
        %v3784 = vunpack.c.h.b16 %v3117
        %v3785 = vunpack.c.l.b16 %v3118
        %v3786 = vunpack.c.h.b16 %v3118
        %v3787 = vunpack.c.l.b16 %v3119
        %v3788 = vunpack.c.h.b16 %v3119
        %v3789 = vunpack.c.l.b16 %v3120
        %v3790 = vunpack.c.l.b16 %v3121
        %v3791 = vunpack.c.h.b16 %v3121
        %v3792 = vunpack.c.l.b16 %v3122
        %v3793 = vunpack.c.h.b16 %v3122
        %v3794 = vunpack.c.l.b16 %v3123
        %v3795 = vunpack.c.h.b16 %v3123
        %v3796 = vunpack.c.l.b16 %v3124
        %v3797 = vunpack.c.l.b16 %v3125
        %v3798 = vunpack.c.h.b16 %v3125
        %v3799 = vunpack.c.l.b16 %v3126
        %v3800 = vunpack.c.h.b16 %v3126
        %v3801 = vunpack.c.l.b16 %v3127
        %v3802 = vunpack.c.h.b16 %v3127
        %v3803 = vunpack.c.l.b16 %v3128
        %v3804 = vunpack.c.l.b16 %v3129
        %v3805 = vunpack.c.h.b16 %v3129
        %v3806 = vunpack.c.l.b16 %v3130
        %v3807 = vunpack.c.h.b16 %v3130
        %v3808 = vunpack.c.l.b16 %v3131
        %v3809 = vunpack.c.h.b16 %v3131
        %v3810 = vunpack.c.l.b16 %v3132
        %v3811 = vunpack.c.l.b16 %v3133
        %v3812 = vunpack.c.h.b16 %v3133
        %v3813 = vunpack.c.l.b16 %v3134
        %v3814 = vunpack.c.h.b16 %v3134
        %v3815 = vunpack.c.l.b16 %v3135
        %v3816 = vunpack.c.h.b16 %v3135
        %v3817 = vunpack.c.l.b16 %v3136
        %v3818 = vunpack.c.l.b16 %v3137
        %v3819 = vunpack.c.h.b16 %v3137
        %v3820 = vunpack.c.l.b16 %v3138
        %v3821 = vunpack.c.h.b16 %v3138
        %v3822 = vunpack.c.l.b16 %v3139
        %v3823 = vunpack.c.h.b16 %v3139
        %v3824 = vunpack.c.l.b16 %v3140
        %v3825 = vunpack.c.l.b16 %v3141
        %v3826 = vunpack.c.h.b16 %v3141
        %v3827 = vunpack.c.l.b16 %v3142
        %v3828 = vunpack.c.h.b16 %v3142
        %v3829 = vunpack.c.l.b16 %v3143
        %v3830 = vunpack.c.h.b16 %v3143
        %v3831 = vunpack.c.l.b16 %v3144
        %v3832 = vunpack.c.l.b16 %v3145
        %v3833 = vunpack.c.h.b16 %v3145
        %v3834 = vunpack.c.l.b16 %v3146
        %v3835 = vunpack.c.h.b16 %v3146
        %v3836 = vunpack.c.l.b16 %v3147
        %v3837 = vunpack.c.h.b16 %v3147
        %v3838 = vunpack.c.l.b16 %v3148
        %v3839 = vunpack.c.l.b16 %v3149
        %v3840 = vunpack.c.h.b16 %v3149
        %v3841 = vunpack.c.l.b16 %v3150
        %v3842 = vunpack.c.h.b16 %v3150
        %v3843 = vunpack.c.l.b16 %v3151
        %v3844 = vunpack.c.h.b16 %v3151
        %v3845 = vunpack.c.l.b16 %v3152
        %v3846 = vunpack.c.l.b16 %v3153
        %v3847 = vunpack.c.h.b16 %v3153
        %v3848 = vunpack.c.l.b16 %v3154
        %v3849 = vunpack.c.h.b16 %v3154
        %v3850 = vunpack.c.l.b16 %v3155
        %v3851 = vunpack.c.h.b16 %v3155
        %v3852 = vunpack.c.l.b16 %v3156
        %v3853 = vunpack.c.l.b16 %v3157
        %v3854 = vunpack.c.h.b16 %v3157
        %v3855 = vunpack.c.l.b16 %v3158
        %v3856 = vunpack.c.h.b16 %v3158
        %v3857 = vunpack.c.l.b16 %v3159
        %v3858 = vunpack.c.h.b16 %v3159
        %v3859 = vunpack.c.l.b16 %v3160
        %v3860 = vunpack.c.l.b16 %v3161
        %v3861 = vunpack.c.h.b16 %v3161
        %v3862 = vunpack.c.l.b16 %v3162
        %v3863 = vunpack.c.h.b16 %v3162
        %v3864 = vunpack.c.l.b16 %v3163
        %v3865 = vunpack.c.h.b16 %v3163
        %v3866 = vunpack.c.l.b16 %v3164
        %v3867 = vunpack.c.l.b16 %v3165
        %v3868 = vunpack.c.h.b16 %v3165
        %v3869 = vunpack.c.l.b16 %v3166
        %v3870 = vunpack.c.h.b16 %v3166
        %v3871 = vunpack.c.l.b16 %v3167
        %v3872 = vunpack.c.h.b16 %v3167
        %v3873 = vunpack.c.l.b16 %v3168
        %v3874 = vunpack.c.l.b16 %v3169
        %v3875 = vunpack.c.h.b16 %v3169
        %v3876 = vunpack.c.l.b16 %v3170
        %v3877 = vunpack.c.h.b16 %v3170
        %v3878 = vunpack.c.l.b16 %v3171
        %v3879 = vunpack.c.h.b16 %v3171
        %v3880 = vunpack.c.l.b16 %v3172
        %v3881 = vunpack.c.l.b16 %v3173
        %v3882 = vunpack.c.h.b16 %v3173
        %v3883 = vunpack.c.l.b16 %v3174
        %v3884 = vunpack.c.h.b16 %v3174
        %v3885 = vunpack.c.l.b16 %v3175
        %v3886 = vunpack.c.h.b16 %v3175
        %v3887 = vunpack.c.l.b16 %v3176
        %v3888 = vunpack.c.l.b16 %v3177
        %v3889 = vunpack.c.h.b16 %v3177
        %v3890 = vunpack.c.l.b16 %v3178
        %v3891 = vunpack.c.h.b16 %v3178
        %v3892 = vunpack.c.l.b16 %v3179
        %v3893 = vunpack.c.h.b16 %v3179
        %v3894 = vunpack.c.l.b16 %v3180
        %v3895 = vunpack.c.l.b16 %v3181
        %v3896 = vunpack.c.h.b16 %v3181
        %v3897 = vunpack.c.l.b16 %v3182
        %v3898 = vunpack.c.h.b16 %v3182
        %v3899 = vunpack.c.l.b16 %v3183
        %v3900 = vunpack.c.h.b16 %v3183
        %v3901 = vunpack.c.l.b16 %v3184
        %v3902 = vunpack.c.l.b16 %v3185
        %v3903 = vunpack.c.h.b16 %v3185
        %v3904 = vunpack.c.l.b16 %v3186
        %v3905 = vunpack.c.h.b16 %v3186
        %v3906 = vunpack.c.l.b16 %v3187
        %v3907 = vunpack.c.h.b16 %v3187
        %v3908 = vunpack.c.l.b16 %v3188
        %v3909 = vpack.c.b16 %v3468, %v3461
        %v3910 = vpack.c.b16 %v3469, %v3462
        %v3911 = vpack.c.b16 %v3470, %v3463
        %v3912 = vpack.c.b16 %v3471, %v3464
        %v3913 = vpack.c.b16 %v3472, %v3465
        %v3914 = vpack.c.b16 %v3473, %v3466
        %v3915 = vpack.c.b16 %v3474, %v3467
        %v3916 = vpack.c.b16 %v3482, %v3475
        %v3917 = vpack.c.b16 %v3483, %v3476
        %v3918 = vpack.c.b16 %v3484, %v3477
        %v3919 = vpack.c.b16 %v3485, %v3478
        %v3920 = vpack.c.b16 %v3486, %v3479
        %v3921 = vpack.c.b16 %v3487, %v3480
        %v3922 = vpack.c.b16 %v3488, %v3481
        %v3923 = vpack.c.b16 %v3496, %v3489
        %v3924 = vpack.c.b16 %v3497, %v3490
        %v3925 = vpack.c.b16 %v3498, %v3491
        %v3926 = vpack.c.b16 %v3499, %v3492
        %v3927 = vpack.c.b16 %v3500, %v3493
        %v3928 = vpack.c.b16 %v3501, %v3494
        %v3929 = vpack.c.b16 %v3502, %v3495
        %v3930 = vpack.c.b16 %v3510, %v3503
        %v3931 = vpack.c.b16 %v3511, %v3504
        %v3932 = vpack.c.b16 %v3512, %v3505
        %v3933 = vpack.c.b16 %v3513, %v3506
        %v3934 = vpack.c.b16 %v3514, %v3507
        %v3935 = vpack.c.b16 %v3515, %v3508
        %v3936 = vpack.c.b16 %v3516, %v3509
        %v3937 = vpack.c.b16 %v3524, %v3517
        %v3938 = vpack.c.b16 %v3525, %v3518
        %v3939 = vpack.c.b16 %v3526, %v3519
        %v3940 = vpack.c.b16 %v3527, %v3520
        %v3941 = vpack.c.b16 %v3528, %v3521
        %v3942 = vpack.c.b16 %v3529, %v3522
        %v3943 = vpack.c.b16 %v3530, %v3523
        %v3944 = vpack.c.b16 %v3538, %v3531
        %v3945 = vpack.c.b16 %v3539, %v3532
        %v3946 = vpack.c.b16 %v3540, %v3533
        %v3947 = vpack.c.b16 %v3541, %v3534
        %v3948 = vpack.c.b16 %v3542, %v3535
        %v3949 = vpack.c.b16 %v3543, %v3536
        %v3950 = vpack.c.b16 %v3544, %v3537
        %v3951 = vpack.c.b16 %v3552, %v3545
        %v3952 = vpack.c.b16 %v3553, %v3546
        %v3953 = vpack.c.b16 %v3554, %v3547
        %v3954 = vpack.c.b16 %v3555, %v3548
        %v3955 = vpack.c.b16 %v3556, %v3549
        %v3956 = vpack.c.b16 %v3557, %v3550
        %v3957 = vpack.c.b16 %v3558, %v3551
        %v3958 = vpack.c.b16 %v3566, %v3559
        %v3959 = vpack.c.b16 %v3567, %v3560
        %v3960 = vpack.c.b16 %v3568, %v3561
        %v3961 = vpack.c.b16 %v3569, %v3562
        %v3962 = vpack.c.b16 %v3570, %v3563
        %v3963 = vpack.c.b16 %v3571, %v3564
        %v3964 = vpack.c.b16 %v3572, %v3565
        %v3965 = vpack.c.b16 %v3580, %v3573
        %v3966 = vpack.c.b16 %v3581, %v3574
        %v3967 = vpack.c.b16 %v3582, %v3575
        %v3968 = vpack.c.b16 %v3583, %v3576
        %v3969 = vpack.c.b16 %v3584, %v3577
        %v3970 = vpack.c.b16 %v3585, %v3578
        %v3971 = vpack.c.b16 %v3586, %v3579
        %v3972 = vpack.c.b16 %v3594, %v3587
        %v3973 = vpack.c.b16 %v3595, %v3588
        %v3974 = vpack.c.b16 %v3596, %v3589
        %v3975 = vpack.c.b16 %v3597, %v3590
        %v3976 = vpack.c.b16 %v3598, %v3591
        %v3977 = vpack.c.b16 %v3599, %v3592
        %v3978 = vpack.c.b16 %v3600, %v3593
        %v3979 = vpack.c.b16 %v3608, %v3601
        %v3980 = vpack.c.b16 %v3609, %v3602
        %v3981 = vpack.c.b16 %v3610, %v3603
        %v3982 = vpack.c.b16 %v3611, %v3604
        %v3983 = vpack.c.b16 %v3612, %v3605
        %v3984 = vpack.c.b16 %v3613, %v3606
        %v3985 = vpack.c.b16 %v3614, %v3607
        %v3986 = vpack.c.b16 %v3622, %v3615
        %v3987 = vpack.c.b16 %v3623, %v3616
        %v3988 = vpack.c.b16 %v3624, %v3617
        %v3989 = vpack.c.b16 %v3625, %v3618
        %v3990 = vpack.c.b16 %v3626, %v3619
        %v3991 = vpack.c.b16 %v3627, %v3620
        %v3992 = vpack.c.b16 %v3628, %v3621
        %v3993 = vpack.c.b16 %v3636, %v3629
        %v3994 = vpack.c.b16 %v3637, %v3630
        %v3995 = vpack.c.b16 %v3638, %v3631
        %v3996 = vpack.c.b16 %v3639, %v3632
        %v3997 = vpack.c.b16 %v3640, %v3633
        %v3998 = vpack.c.b16 %v3641, %v3634
        %v3999 = vpack.c.b16 %v3642, %v3635
        %v4000 = vpack.c.b16 %v3650, %v3643
        %v4001 = vpack.c.b16 %v3651, %v3644
        %v4002 = vpack.c.b16 %v3652, %v3645
        %v4003 = vpack.c.b16 %v3653, %v3646
        %v4004 = vpack.c.b16 %v3654, %v3647
        %v4005 = vpack.c.b16 %v3655, %v3648
        %v4006 = vpack.c.b16 %v3656, %v3649
        %v4007 = vpack.c.b16 %v3664, %v3657
        %v4008 = vpack.c.b16 %v3665, %v3658
        %v4009 = vpack.c.b16 %v3666, %v3659
        %v4010 = vpack.c.b16 %v3667, %v3660
        %v4011 = vpack.c.b16 %v3668, %v3661
        %v4012 = vpack.c.b16 %v3669, %v3662
        %v4013 = vpack.c.b16 %v3670, %v3663
        %v4014 = vpack.c.b16 %v3678, %v3671
        %v4015 = vpack.c.b16 %v3679, %v3672
        %v4016 = vpack.c.b16 %v3680, %v3673
        %v4017 = vpack.c.b16 %v3681, %v3674
        %v4018 = vpack.c.b16 %v3682, %v3675
        %v4019 = vpack.c.b16 %v3683, %v3676
        %v4020 = vpack.c.b16 %v3684, %v3677
        %v4021 = vpack.c.b16 %v3692, %v3685
        %v4022 = vpack.c.b16 %v3693, %v3686
        %v4023 = vpack.c.b16 %v3694, %v3687
        %v4024 = vpack.c.b16 %v3695, %v3688
        %v4025 = vpack.c.b16 %v3696, %v3689
        %v4026 = vpack.c.b16 %v3697, %v3690
        %v4027 = vpack.c.b16 %v3698, %v3691
        %v4028 = vpack.c.b16 %v3706, %v3699
        %v4029 = vpack.c.b16 %v3707, %v3700
        %v4030 = vpack.c.b16 %v3708, %v3701
        %v4031 = vpack.c.b16 %v3709, %v3702
        %v4032 = vpack.c.b16 %v3710, %v3703
        %v4033 = vpack.c.b16 %v3711, %v3704
        %v4034 = vpack.c.b16 %v3712, %v3705
        %v4035 = vpack.c.b16 %v3720, %v3713
        %v4036 = vpack.c.b16 %v3721, %v3714
        %v4037 = vpack.c.b16 %v3722, %v3715
        %v4038 = vpack.c.b16 %v3723, %v3716
        %v4039 = vpack.c.b16 %v3724, %v3717
        %v4040 = vpack.c.b16 %v3725, %v3718
        %v4041 = vpack.c.b16 %v3726, %v3719
        %v4042 = vpack.c.b16 %v3734, %v3727
        %v4043 = vpack.c.b16 %v3735, %v3728
        %v4044 = vpack.c.b16 %v3736, %v3729
        %v4045 = vpack.c.b16 %v3737, %v3730
        %v4046 = vpack.c.b16 %v3738, %v3731
        %v4047 = vpack.c.b16 %v3739, %v3732
        %v4048 = vpack.c.b16 %v3740, %v3733
        %v4049 = vpack.c.b16 %v3748, %v3741
        %v4050 = vpack.c.b16 %v3749, %v3742
        %v4051 = vpack.c.b16 %v3750, %v3743
        %v4052 = vpack.c.b16 %v3751, %v3744
        %v4053 = vpack.c.b16 %v3752, %v3745
        %v4054 = vpack.c.b16 %v3753, %v3746
        %v4055 = vpack.c.b16 %v3754, %v3747
        %v4056 = vpack.c.b16 %v3762, %v3755
        %v4057 = vpack.c.b16 %v3763, %v3756
        %v4058 = vpack.c.b16 %v3764, %v3757
        %v4059 = vpack.c.b16 %v3765, %v3758
        %v4060 = vpack.c.b16 %v3766, %v3759
        %v4061 = vpack.c.b16 %v3767, %v3760
        %v4062 = vpack.c.b16 %v3768, %v3761
        %v4063 = vpack.c.b16 %v3776, %v3769
        %v4064 = vpack.c.b16 %v3777, %v3770
        %v4065 = vpack.c.b16 %v3778, %v3771
        %v4066 = vpack.c.b16 %v3779, %v3772
        %v4067 = vpack.c.b16 %v3780, %v3773
        %v4068 = vpack.c.b16 %v3781, %v3774
        %v4069 = vpack.c.b16 %v3782, %v3775
        %v4070 = vpack.c.b16 %v3790, %v3783
        %v4071 = vpack.c.b16 %v3791, %v3784
        %v4072 = vpack.c.b16 %v3792, %v3785
        %v4073 = vpack.c.b16 %v3793, %v3786
        %v4074 = vpack.c.b16 %v3794, %v3787
        %v4075 = vpack.c.b16 %v3795, %v3788
        %v4076 = vpack.c.b16 %v3796, %v3789
        %v4077 = vpack.c.b16 %v3804, %v3797
        %v4078 = vpack.c.b16 %v3805, %v3798
        %v4079 = vpack.c.b16 %v3806, %v3799
        %v4080 = vpack.c.b16 %v3807, %v3800
        %v4081 = vpack.c.b16 %v3808, %v3801
        %v4082 = vpack.c.b16 %v3809, %v3802
        %v4083 = vpack.c.b16 %v3810, %v3803
        %v4084 = vpack.c.b16 %v3818, %v3811
        %v4085 = vpack.c.b16 %v3819, %v3812
        %v4086 = vpack.c.b16 %v3820, %v3813
        %v4087 = vpack.c.b16 %v3821, %v3814
        %v4088 = vpack.c.b16 %v3822, %v3815
        %v4089 = vpack.c.b16 %v3823, %v3816
        %v4090 = vpack.c.b16 %v3824, %v3817
        %v4091 = vpack.c.b16 %v3832, %v3825
        %v4092 = vpack.c.b16 %v3833, %v3826
        %v4093 = vpack.c.b16 %v3834, %v3827
        %v4094 = vpack.c.b16 %v3835, %v3828
        %v4095 = vpack.c.b16 %v3836, %v3829
        %v4096 = vpack.c.b16 %v3837, %v3830
        %v4097 = vpack.c.b16 %v3838, %v3831
        %v4098 = vpack.c.b16 %v3846, %v3839
        %v4099 = vpack.c.b16 %v3847, %v3840
        %v4100 = vpack.c.b16 %v3848, %v3841
        %v4101 = vpack.c.b16 %v3849, %v3842
        %v4102 = vpack.c.b16 %v3850, %v3843
        %v4103 = vpack.c.b16 %v3851, %v3844
        %v4104 = vpack.c.b16 %v3852, %v3845
        %v4105 = vpack.c.b16 %v3860, %v3853
        %v4106 = vpack.c.b16 %v3861, %v3854
        %v4107 = vpack.c.b16 %v3862, %v3855
        %v4108 = vpack.c.b16 %v3863, %v3856
        %v4109 = vpack.c.b16 %v3864, %v3857
        %v4110 = vpack.c.b16 %v3865, %v3858
        %v4111 = vpack.c.b16 %v3866, %v3859
        %v4112 = vpack.c.b16 %v3874, %v3867
        %v4113 = vpack.c.b16 %v3875, %v3868
        %v4114 = vpack.c.b16 %v3876, %v3869
        %v4115 = vpack.c.b16 %v3877, %v3870
        %v4116 = vpack.c.b16 %v3878, %v3871
        %v4117 = vpack.c.b16 %v3879, %v3872
        %v4118 = vpack.c.b16 %v3880, %v3873
        %v4119 = vpack.c.b16 %v3888, %v3881
        %v4120 = vpack.c.b16 %v3889, %v3882
        %v4121 = vpack.c.b16 %v3890, %v3883
        %v4122 = vpack.c.b16 %v3891, %v3884
        %v4123 = vpack.c.b16 %v3892, %v3885
        %v4124 = vpack.c.b16 %v3893, %v3886
        %v4125 = vpack.c.b16 %v3894, %v3887
        %v4126 = vpack.c.b16 %v3902, %v3895
        %v4127 = vpack.c.b16 %v3903, %v3896
        %v4128 = vpack.c.b16 %v3904, %v3897
        %v4129 = vpack.c.b16 %v3905, %v3898
        %v4130 = vpack.c.b16 %v3906, %v3899
        %v4131 = vpack.c.b16 %v3907, %v3900
        %v4132 = vpack.c.b16 %v3908, %v3901
        %4357 = vmatpush.bf16.msra.mxu0 %v3958
        %4358 = vmatpush.bf16.msra.mxu0 %v3951
        %4359 = vmatpush.bf16.msra.mxu0 %v3944
        %4360 = vmatpush.bf16.msra.mxu0 %v3937
        %4361 = vmatpush.bf16.msra.mxu0 %v3930
        %4362 = vmatpush.bf16.msra.mxu0 %v3923
        %4363 = vmatpush.bf16.msra.mxu0 %v3916
        %4364 = vmatpush.bf16.msra.mxu0 %v3909
        %4365 = vmatmul.bf16.gmra.mxu0 %v2929
        %v4366 = vpop.f32.mrf.mxu0
        %v4367 = vadd.f32 %v3191, %v4366
        %v4368 = vpop.f32.mrf.mxu0
        %4369 = vdwg.mxu0
        %4370 = vmatpush.bf16.msra.mxu0 %v4014
        %4371 = vmatpush.bf16.msra.mxu0 %v4007
        %4372 = vmatpush.bf16.msra.mxu0 %v4000
        %4373 = vmatpush.bf16.msra.mxu0 %v3993
        %4374 = vmatpush.bf16.msra.mxu0 %v3986
        %4375 = vmatpush.bf16.msra.mxu0 %v3979
        %4376 = vmatpush.bf16.msra.mxu0 %v3972
        %4377 = vmatpush.bf16.msra.mxu0 %v3965
        %4378 = vmatmul.bf16.gmra.mxu0 %v2930
        %v4379 = vpop.f32.mrf.mxu0
        %v4380 = vadd.f32 %v4367, %v4379
        %v4381 = vpop.f32.mrf.mxu0
        %4382 = vdwg.mxu0
        %4383 = vmatpush.bf16.msra.mxu0 %v4070
        %4384 = vmatpush.bf16.msra.mxu0 %v4063
        %4385 = vmatpush.bf16.msra.mxu0 %v4056
        %4386 = vmatpush.bf16.msra.mxu0 %v4049
        %4387 = vmatpush.bf16.msra.mxu0 %v4042
        %4388 = vmatpush.bf16.msra.mxu0 %v4035
        %4389 = vmatpush.bf16.msra.mxu0 %v4028
        %4390 = vmatpush.bf16.msra.mxu0 %v4021
        %4391 = vmatmul.bf16.gmra.mxu0 %v2931
        %v4392 = vpop.f32.mrf.mxu0
        %v4393 = vadd.f32 %v4380, %v4392
        %v4394 = vpop.f32.mrf.mxu0
        %4395 = vdwg.mxu0
        %4396 = vmatpush.bf16.msra.mxu0 %v4126
        %4397 = vmatpush.bf16.msra.mxu0 %v4119
        %4398 = vmatpush.bf16.msra.mxu0 %v4112
        %4399 = vmatpush.bf16.msra.mxu0 %v4105
        %4400 = vmatpush.bf16.msra.mxu0 %v4098
        %4401 = vmatpush.bf16.msra.mxu0 %v4091
        %4402 = vmatpush.bf16.msra.mxu0 %v4084
        %4403 = vmatpush.bf16.msra.mxu0 %v4077
        %4404 = vmatmul.bf16.gmra.mxu0 %v2932
        %v4405 = vpop.f32.mrf.mxu0
        %v4406 = vadd.f32 %v4393, %v4405
        %v4407 = vpop.f32.mrf.mxu0
        %4408 = vdwg.mxu0
        %4409 = vmatpush.bf16.msra.mxu0 %v3959
        %4410 = vmatpush.bf16.msra.mxu0 %v3952
        %4411 = vmatpush.bf16.msra.mxu0 %v3945
        %4412 = vmatpush.bf16.msra.mxu0 %v3938
        %4413 = vmatpush.bf16.msra.mxu0 %v3931
        %4414 = vmatpush.bf16.msra.mxu0 %v3924
        %4415 = vmatpush.bf16.msra.mxu0 %v3917
        %4416 = vmatpush.bf16.msra.mxu0 %v3910
        %4417 = vmatmul.bf16.gmra.mxu0 %v2929
        %v4418 = vpop.f32.mrf.mxu0
        %v4419 = vadd.f32 %v3192, %v4418
        %v4420 = vpop.f32.mrf.mxu0
        %4421 = vdwg.mxu0
        %4422 = vmatpush.bf16.msra.mxu0 %v4015
        %4423 = vmatpush.bf16.msra.mxu0 %v4008
        %4424 = vmatpush.bf16.msra.mxu0 %v4001
        %4425 = vmatpush.bf16.msra.mxu0 %v3994
        %4426 = vmatpush.bf16.msra.mxu0 %v3987
        %4427 = vmatpush.bf16.msra.mxu0 %v3980
        %4428 = vmatpush.bf16.msra.mxu0 %v3973
        %4429 = vmatpush.bf16.msra.mxu0 %v3966
        %4430 = vmatmul.bf16.gmra.mxu0 %v2930
        %v4431 = vpop.f32.mrf.mxu0
        %v4432 = vadd.f32 %v4419, %v4431
        %v4433 = vpop.f32.mrf.mxu0
        %4434 = vdwg.mxu0
        %4435 = vmatpush.bf16.msra.mxu0 %v4071
        %4436 = vmatpush.bf16.msra.mxu0 %v4064
        %4437 = vmatpush.bf16.msra.mxu0 %v4057
        %4438 = vmatpush.bf16.msra.mxu0 %v4050
        %4439 = vmatpush.bf16.msra.mxu0 %v4043
        %4440 = vmatpush.bf16.msra.mxu0 %v4036
        %4441 = vmatpush.bf16.msra.mxu0 %v4029
        %4442 = vmatpush.bf16.msra.mxu0 %v4022
        %4443 = vmatmul.bf16.gmra.mxu0 %v2931
        %v4444 = vpop.f32.mrf.mxu0
        %v4445 = vadd.f32 %v4432, %v4444
        %v4446 = vpop.f32.mrf.mxu0
        %4447 = vdwg.mxu0
        %4448 = vmatpush.bf16.msra.mxu0 %v4127
        %4449 = vmatpush.bf16.msra.mxu0 %v4120
        %4450 = vmatpush.bf16.msra.mxu0 %v4113
        %4451 = vmatpush.bf16.msra.mxu0 %v4106
        %4452 = vmatpush.bf16.msra.mxu0 %v4099
        %4453 = vmatpush.bf16.msra.mxu0 %v4092
        %4454 = vmatpush.bf16.msra.mxu0 %v4085
        %4455 = vmatpush.bf16.msra.mxu0 %v4078
        %4456 = vmatmul.bf16.gmra.mxu0 %v2932
        %v4457 = vpop.f32.mrf.mxu0
        %v4458 = vadd.f32 %v4445, %v4457
        %v4459 = vpop.f32.mrf.mxu0
        %4460 = vdwg.mxu0
        %4461 = vmatpush.bf16.msra.mxu0 %v3960
        %4462 = vmatpush.bf16.msra.mxu0 %v3953
        %4463 = vmatpush.bf16.msra.mxu0 %v3946
        %4464 = vmatpush.bf16.msra.mxu0 %v3939
        %4465 = vmatpush.bf16.msra.mxu0 %v3932
        %4466 = vmatpush.bf16.msra.mxu0 %v3925
        %4467 = vmatpush.bf16.msra.mxu0 %v3918
        %4468 = vmatpush.bf16.msra.mxu0 %v3911
        %4469 = vmatmul.bf16.gmra.mxu0 %v2929
        %v4470 = vpop.f32.mrf.mxu0
        %v4471 = vadd.f32 %v3193, %v4470
        %v4472 = vpop.f32.mrf.mxu0
        %4473 = vdwg.mxu0
        %4474 = vmatpush.bf16.msra.mxu0 %v4016
        %4475 = vmatpush.bf16.msra.mxu0 %v4009
        %4476 = vmatpush.bf16.msra.mxu0 %v4002
        %4477 = vmatpush.bf16.msra.mxu0 %v3995
        %4478 = vmatpush.bf16.msra.mxu0 %v3988
        %4479 = vmatpush.bf16.msra.mxu0 %v3981
        %4480 = vmatpush.bf16.msra.mxu0 %v3974
        %4481 = vmatpush.bf16.msra.mxu0 %v3967
        %4482 = vmatmul.bf16.gmra.mxu0 %v2930
        %v4483 = vpop.f32.mrf.mxu0
        %v4484 = vadd.f32 %v4471, %v4483
        %v4485 = vpop.f32.mrf.mxu0
        %4486 = vdwg.mxu0
        %4487 = vmatpush.bf16.msra.mxu0 %v4072
        %4488 = vmatpush.bf16.msra.mxu0 %v4065
        %4489 = vmatpush.bf16.msra.mxu0 %v4058
        %4490 = vmatpush.bf16.msra.mxu0 %v4051
        %4491 = vmatpush.bf16.msra.mxu0 %v4044
        %4492 = vmatpush.bf16.msra.mxu0 %v4037
        %4493 = vmatpush.bf16.msra.mxu0 %v4030
        %4494 = vmatpush.bf16.msra.mxu0 %v4023
        %4495 = vmatmul.bf16.gmra.mxu0 %v2931
        %v4496 = vpop.f32.mrf.mxu0
        %v4497 = vadd.f32 %v4484, %v4496
        %v4498 = vpop.f32.mrf.mxu0
        %4499 = vdwg.mxu0
        %4500 = vmatpush.bf16.msra.mxu0 %v4128
        %4501 = vmatpush.bf16.msra.mxu0 %v4121
        %4502 = vmatpush.bf16.msra.mxu0 %v4114
        %4503 = vmatpush.bf16.msra.mxu0 %v4107
        %4504 = vmatpush.bf16.msra.mxu0 %v4100
        %4505 = vmatpush.bf16.msra.mxu0 %v4093
        %4506 = vmatpush.bf16.msra.mxu0 %v4086
        %4507 = vmatpush.bf16.msra.mxu0 %v4079
        %4508 = vmatmul.bf16.gmra.mxu0 %v2932
        %v4509 = vpop.f32.mrf.mxu0
        %v4510 = vadd.f32 %v4497, %v4509
        %v4511 = vpop.f32.mrf.mxu0
        %4512 = vdwg.mxu0
        %4513 = vmatpush.bf16.msra.mxu0 %v3961
        %4514 = vmatpush.bf16.msra.mxu0 %v3954
        %4515 = vmatpush.bf16.msra.mxu0 %v3947
        %4516 = vmatpush.bf16.msra.mxu0 %v3940
        %4517 = vmatpush.bf16.msra.mxu0 %v3933
        %4518 = vmatpush.bf16.msra.mxu0 %v3926
        %4519 = vmatpush.bf16.msra.mxu0 %v3919
        %4520 = vmatpush.bf16.msra.mxu0 %v3912
        %4521 = vmatmul.bf16.gmra.mxu0 %v2929
        %v4522 = vpop.f32.mrf.mxu0
        %v4523 = vadd.f32 %v3194, %v4522
        %v4524 = vpop.f32.mrf.mxu0
        %4525 = vdwg.mxu0
        %4526 = vmatpush.bf16.msra.mxu0 %v4017
        %4527 = vmatpush.bf16.msra.mxu0 %v4010
        %4528 = vmatpush.bf16.msra.mxu0 %v4003
        %4529 = vmatpush.bf16.msra.mxu0 %v3996
        %4530 = vmatpush.bf16.msra.mxu0 %v3989
        %4531 = vmatpush.bf16.msra.mxu0 %v3982
        %4532 = vmatpush.bf16.msra.mxu0 %v3975
        %4533 = vmatpush.bf16.msra.mxu0 %v3968
        %4534 = vmatmul.bf16.gmra.mxu0 %v2930
        %v4535 = vpop.f32.mrf.mxu0
        %v4536 = vadd.f32 %v4523, %v4535
        %v4537 = vpop.f32.mrf.mxu0
        %4538 = vdwg.mxu0
        %4539 = vmatpush.bf16.msra.mxu0 %v4073
        %4540 = vmatpush.bf16.msra.mxu0 %v4066
        %4541 = vmatpush.bf16.msra.mxu0 %v4059
        %4542 = vmatpush.bf16.msra.mxu0 %v4052
        %4543 = vmatpush.bf16.msra.mxu0 %v4045
        %4544 = vmatpush.bf16.msra.mxu0 %v4038
        %4545 = vmatpush.bf16.msra.mxu0 %v4031
        %4546 = vmatpush.bf16.msra.mxu0 %v4024
        %4547 = vmatmul.bf16.gmra.mxu0 %v2931
        %v4548 = vpop.f32.mrf.mxu0
        %v4549 = vadd.f32 %v4536, %v4548
        %v4550 = vpop.f32.mrf.mxu0
        %4551 = vdwg.mxu0
        %4552 = vmatpush.bf16.msra.mxu0 %v4129
        %4553 = vmatpush.bf16.msra.mxu0 %v4122
        %4554 = vmatpush.bf16.msra.mxu0 %v4115
        %4555 = vmatpush.bf16.msra.mxu0 %v4108
        %4556 = vmatpush.bf16.msra.mxu0 %v4101
        %4557 = vmatpush.bf16.msra.mxu0 %v4094
        %4558 = vmatpush.bf16.msra.mxu0 %v4087
        %4559 = vmatpush.bf16.msra.mxu0 %v4080
        %4560 = vmatmul.bf16.gmra.mxu0 %v2932
        %v4561 = vpop.f32.mrf.mxu0
        %v4562 = vadd.f32 %v4549, %v4561
        %v4563 = vpop.f32.mrf.mxu0
        %4564 = vdwg.mxu0
        %4565 = vmatpush.bf16.msra.mxu0 %v3962
        %4566 = vmatpush.bf16.msra.mxu0 %v3955
        %4567 = vmatpush.bf16.msra.mxu0 %v3948
        %4568 = vmatpush.bf16.msra.mxu0 %v3941
        %4569 = vmatpush.bf16.msra.mxu0 %v3934
        %4570 = vmatpush.bf16.msra.mxu0 %v3927
        %4571 = vmatpush.bf16.msra.mxu0 %v3920
        %4572 = vmatpush.bf16.msra.mxu0 %v3913
        %4573 = vmatmul.bf16.gmra.mxu0 %v2929
        %v4574 = vpop.f32.mrf.mxu0
        %v4575 = vadd.f32 %v3195, %v4574
        %v4576 = vpop.f32.mrf.mxu0
        %4577 = vdwg.mxu0
        %4578 = vmatpush.bf16.msra.mxu0 %v4018
        %4579 = vmatpush.bf16.msra.mxu0 %v4011
        %4580 = vmatpush.bf16.msra.mxu0 %v4004
        %4581 = vmatpush.bf16.msra.mxu0 %v3997
        %4582 = vmatpush.bf16.msra.mxu0 %v3990
        %4583 = vmatpush.bf16.msra.mxu0 %v3983
        %4584 = vmatpush.bf16.msra.mxu0 %v3976
        %4585 = vmatpush.bf16.msra.mxu0 %v3969
        %4586 = vmatmul.bf16.gmra.mxu0 %v2930
        %v4587 = vpop.f32.mrf.mxu0
        %v4588 = vadd.f32 %v4575, %v4587
        %v4589 = vpop.f32.mrf.mxu0
        %4590 = vdwg.mxu0
        %4591 = vmatpush.bf16.msra.mxu0 %v4074
        %4592 = vmatpush.bf16.msra.mxu0 %v4067
        %4593 = vmatpush.bf16.msra.mxu0 %v4060
        %4594 = vmatpush.bf16.msra.mxu0 %v4053
        %4595 = vmatpush.bf16.msra.mxu0 %v4046
        %4596 = vmatpush.bf16.msra.mxu0 %v4039
        %4597 = vmatpush.bf16.msra.mxu0 %v4032
        %4598 = vmatpush.bf16.msra.mxu0 %v4025
        %4599 = vmatmul.bf16.gmra.mxu0 %v2931
        %v4600 = vpop.f32.mrf.mxu0
        %v4601 = vadd.f32 %v4588, %v4600
        %v4602 = vpop.f32.mrf.mxu0
        %4603 = vdwg.mxu0
        %4604 = vmatpush.bf16.msra.mxu0 %v4130
        %4605 = vmatpush.bf16.msra.mxu0 %v4123
        %4606 = vmatpush.bf16.msra.mxu0 %v4116
        %4607 = vmatpush.bf16.msra.mxu0 %v4109
        %4608 = vmatpush.bf16.msra.mxu0 %v4102
        %4609 = vmatpush.bf16.msra.mxu0 %v4095
        %4610 = vmatpush.bf16.msra.mxu0 %v4088
        %4611 = vmatpush.bf16.msra.mxu0 %v4081
        %4612 = vmatmul.bf16.gmra.mxu0 %v2932
        %v4613 = vpop.f32.mrf.mxu0
        %v4614 = vadd.f32 %v4601, %v4613
        %v4615 = vpop.f32.mrf.mxu0
        %4616 = vdwg.mxu0
        %4617 = vmatpush.bf16.msra.mxu0 %v3963
        %4618 = vmatpush.bf16.msra.mxu0 %v3956
        %4619 = vmatpush.bf16.msra.mxu0 %v3949
        %4620 = vmatpush.bf16.msra.mxu0 %v3942
        %4621 = vmatpush.bf16.msra.mxu0 %v3935
        %4622 = vmatpush.bf16.msra.mxu0 %v3928
        %4623 = vmatpush.bf16.msra.mxu0 %v3921
        %4624 = vmatpush.bf16.msra.mxu0 %v3914
        %4625 = vmatmul.bf16.gmra.mxu0 %v2929
        %v4626 = vpop.f32.mrf.mxu0
        %v4627 = vadd.f32 %v3196, %v4626
        %v4628 = vpop.f32.mrf.mxu0
        %4629 = vdwg.mxu0
        %4630 = vmatpush.bf16.msra.mxu0 %v4019
        %4631 = vmatpush.bf16.msra.mxu0 %v4012
        %4632 = vmatpush.bf16.msra.mxu0 %v4005
        %4633 = vmatpush.bf16.msra.mxu0 %v3998
        %4634 = vmatpush.bf16.msra.mxu0 %v3991
        %4635 = vmatpush.bf16.msra.mxu0 %v3984
        %4636 = vmatpush.bf16.msra.mxu0 %v3977
        %4637 = vmatpush.bf16.msra.mxu0 %v3970
        %4638 = vmatmul.bf16.gmra.mxu0 %v2930
        %v4639 = vpop.f32.mrf.mxu0
        %v4640 = vadd.f32 %v4627, %v4639
        %v4641 = vpop.f32.mrf.mxu0
        %4642 = vdwg.mxu0
        %4643 = vmatpush.bf16.msra.mxu0 %v4075
        %4644 = vmatpush.bf16.msra.mxu0 %v4068
        %4645 = vmatpush.bf16.msra.mxu0 %v4061
        %4646 = vmatpush.bf16.msra.mxu0 %v4054
        %4647 = vmatpush.bf16.msra.mxu0 %v4047
        %4648 = vmatpush.bf16.msra.mxu0 %v4040
        %4649 = vmatpush.bf16.msra.mxu0 %v4033
        %4650 = vmatpush.bf16.msra.mxu0 %v4026
        %4651 = vmatmul.bf16.gmra.mxu0 %v2931
        %v4652 = vpop.f32.mrf.mxu0
        %v4653 = vadd.f32 %v4640, %v4652
        %v4654 = vpop.f32.mrf.mxu0
        %4655 = vdwg.mxu0
        %4656 = vmatpush.bf16.msra.mxu0 %v4131
        %4657 = vmatpush.bf16.msra.mxu0 %v4124
        %4658 = vmatpush.bf16.msra.mxu0 %v4117
        %4659 = vmatpush.bf16.msra.mxu0 %v4110
        %4660 = vmatpush.bf16.msra.mxu0 %v4103
        %4661 = vmatpush.bf16.msra.mxu0 %v4096
        %4662 = vmatpush.bf16.msra.mxu0 %v4089
        %4663 = vmatpush.bf16.msra.mxu0 %v4082
        %4664 = vmatmul.bf16.gmra.mxu0 %v2932
        %v4665 = vpop.f32.mrf.mxu0
        %v4666 = vadd.f32 %v4653, %v4665
        %v4667 = vpop.f32.mrf.mxu0
        %4668 = vdwg.mxu0
        %4669 = vmatpush.bf16.msra.mxu0 %v3964
        %4670 = vmatpush.bf16.msra.mxu0 %v3957
        %4671 = vmatpush.bf16.msra.mxu0 %v3950
        %4672 = vmatpush.bf16.msra.mxu0 %v3943
        %4673 = vmatpush.bf16.msra.mxu0 %v3936
        %4674 = vmatpush.bf16.msra.mxu0 %v3929
        %4675 = vmatpush.bf16.msra.mxu0 %v3922
        %4676 = vmatpush.bf16.msra.mxu0 %v3915
        %4677 = vmatmul.bf16.gmra.mxu0 %v2929
        %v4678 = vpop.f32.mrf.mxu0
        %v4679 = vadd.f32 %v3197, %v4678
        %v4680 = vpop.f32.mrf.mxu0
        %4681 = vdwg.mxu0
        %4682 = vmatpush.bf16.msra.mxu0 %v4020
        %4683 = vmatpush.bf16.msra.mxu0 %v4013
        %4684 = vmatpush.bf16.msra.mxu0 %v4006
        %4685 = vmatpush.bf16.msra.mxu0 %v3999
        %4686 = vmatpush.bf16.msra.mxu0 %v3992
        %4687 = vmatpush.bf16.msra.mxu0 %v3985
        %4688 = vmatpush.bf16.msra.mxu0 %v3978
        %4689 = vmatpush.bf16.msra.mxu0 %v3971
        %4690 = vmatmul.bf16.gmra.mxu0 %v2930
        %v4691 = vpop.f32.mrf.mxu0
        %v4692 = vadd.f32 %v4679, %v4691
        %v4693 = vpop.f32.mrf.mxu0
        %4694 = vdwg.mxu0
        %4695 = vmatpush.bf16.msra.mxu0 %v4076
        %4696 = vmatpush.bf16.msra.mxu0 %v4069
        %4697 = vmatpush.bf16.msra.mxu0 %v4062
        %4698 = vmatpush.bf16.msra.mxu0 %v4055
        %4699 = vmatpush.bf16.msra.mxu0 %v4048
        %4700 = vmatpush.bf16.msra.mxu0 %v4041
        %4701 = vmatpush.bf16.msra.mxu0 %v4034
        %4702 = vmatpush.bf16.msra.mxu0 %v4027
        %4703 = vmatmul.bf16.gmra.mxu0 %v2931
        %v4704 = vpop.f32.mrf.mxu0
        %v4705 = vadd.f32 %v4692, %v4704
        %v4706 = vpop.f32.mrf.mxu0
        %4707 = vdwg.mxu0
        %4708 = vmatpush.bf16.msra.mxu0 %v4132
        %4709 = vmatpush.bf16.msra.mxu0 %v4125
        %4710 = vmatpush.bf16.msra.mxu0 %v4118
        %4711 = vmatpush.bf16.msra.mxu0 %v4111
        %4712 = vmatpush.bf16.msra.mxu0 %v4104
        %4713 = vmatpush.bf16.msra.mxu0 %v4097
        %4714 = vmatpush.bf16.msra.mxu0 %v4090
        %4715 = vmatpush.bf16.msra.mxu0 %v4083
        %4716 = vmatmul.bf16.gmra.mxu0 %v2932
        %v4717 = vpop.f32.mrf.mxu0
        %v4718 = vadd.f32 %v4705, %v4717
        %v4719 = vpop.f32.mrf.mxu0
        %4720 = vdwg.mxu0
        %v4721 = vsub.f32 0.0, %v4406
        %v4722 = vsub.f32 0.0, %v4458
        %v4723 = vsub.f32 0.0, %v4510
        %v4724 = vsub.f32 0.0, %v4562
        %v4725 = vsub.f32 0.0, %v4614
        %v4726 = vsub.f32 0.0, %v4666
        %v4727 = vsub.f32 0.0, %v4718
        %v4728 = vmul.f32 %v4721, 1.442695
        %v4729 = vpow.pop %v4728
        %v4730 = vmul.f32 %v4722, 1.442695
        %v4731 = vpow.pop %v4730
        %v4732 = vmul.f32 %v4723, 1.442695
        %v4733 = vpow.pop %v4732
        %v4734 = vmul.f32 %v4724, 1.442695
        %v4735 = vpow.pop %v4734
        %v4736 = vmul.f32 %v4725, 1.442695
        %v4737 = vpow.pop %v4736
        %v4738 = vmul.f32 %v4726, 1.442695
        %v4739 = vpow.pop %v4738
        %v4740 = vmul.f32 %v4727, 1.442695
        %v4741 = vpow.pop %v4740
        %v4742 = vadd.f32 %v4729, 1.0
        %v4743 = vadd.f32 %v4731, 1.0
        %v4744 = vadd.f32 %v4733, 1.0
        %v4745 = vadd.f32 %v4735, 1.0
        %v4746 = vadd.f32 %v4737, 1.0
        %v4747 = vadd.f32 %v4739, 1.0
        %v4748 = vadd.f32 %v4741, 1.0
        %v4749 = vrcp.pop %v4742
        %v4750 = vrcp.pop %v4743
        %v4751 = vrcp.pop %v4744
        %v4752 = vrcp.pop %v4745
        %v4753 = vrcp.pop %v4746
        %v4754 = vrcp.pop %v4747
        %v4755 = vrcp.pop %v4748
        %4756 = vst [vmem:[%s393] sm:$0xff] %v4749
        %4757 = vst [vmem:[%s393 + $0x8] sm:$0xff] %v4750
        %4758 = vst [vmem:[%s393 + $0x10] sm:$0xff] %v4751
        %4759 = vst [vmem:[%s393 + $0x18] sm:$0xff] %v4752
        %4760 = vst [vmem:[%s393 + $0x20] sm:$0xff] %v4753
        %4761 = vst [vmem:[%s393 + $0x28] sm:$0xff] %v4754
        %4762 = vst [vmem:[%s393 + $0x30] sm:$0xff] %v4755
        %4763 = vst [vmem:[%s414] sm:$0xff] %v2609
        %4764 = vst [vmem:[%s414 + $0x8] sm:$0xff] %v2661
        %s4765 = sand.u32 %s254, 1
        %s4766 = scalar_lea.sflag [#allocation3], %s4765
        %s4767 = sand.u32 %s254, 1
        %s4768 = smul.addr %s4767, 56
        %s4769 = scalar_lea.vmem [#allocation2], %s4768
        %p4770 = scmp.lt.s32.totalorder %s26, 1
        %s4771 = scalar_select %p4770, %s26, 1
        %s4772 = smul.addr %s4771, 2
        %s4773 = smul.addr %s4772, 8
        %s4774 = scalar_lea.vmem %s11, %s4773
        // Predicated region
        $region61: #{vae_forward.1} parent=59 // pred_check
          %p4775 = pneg %p264
        $region62: #{vae_forward.1} parent=59 // pred_check_branch
          %4777 = sbr.rel (%p4775) target = $region64
        $region63: #{vae_forward.1} parent=59 // pred_region
          %4779 = vsyncadd %s4766, 0
          %s4780 = smul.addr %s26, 7
          %s4781 = smul.addr %s4780, 8
          %s4782 = scalar_lea.hbm %s10, %s4781
          %s4784 = sshll.u32 %s4769, 4
          %s4785 = int_to_ptr.vmem [resolvable:$true] %s4784
          %s4786 = sshll.u32 %s4782, 4
          %s4787 = int_to_ptr.hbm [resolvable:$true] %s4786
          %4789 = dma.vmem_to_hbm [thread:$0]  %s4785, 896, %s4787, %s4766
        $region64: #{vae_forward.1} parent=59 // pred_fallthru
          _
        // Predicated region
        $region65: #{vae_forward.1} parent=59 // pred_check
          %p4790 = pneg %p290
        $region66: #{vae_forward.1} parent=59 // pred_check_branch
          %4792 = sbr.rel (%p4790) target = $region68
        $region67: #{vae_forward.1} parent=59 // pred_region
          _
        $region68: #{vae_forward.1} parent=59 // pred_fallthru
          _
      $region60: #{vae_forward.1} parent=5 // pred_fallthru
        _
      %p4793 = scmp.le.s32.totalorder 2, %s21
      // Predicated region
      $region69: #{vae_forward.1} parent=5 // pred_check
        %p4794 = pneg %p4793
      $region70: #{vae_forward.1} parent=5 // pred_check_branch
        %4796 = sbr.rel (%p4794) target = $region72
      $region71: #{vae_forward.1} parent=5 // pred_region
        %s4797 = ssub.s32 %s21, 2
        // Predicated region
        $region73: #{vae_forward.1} parent=71 // pred_check
          %p4798 = pneg %p270
        $region74: #{vae_forward.1} parent=71 // pred_check_branch
          %4800 = sbr.rel (%p4798) target = $region76
        $region75: #{vae_forward.1} parent=71 // pred_region
          %s4801 = sand.u32 %s255, 1
          %s4802 = scalar_lea.sflag [#allocation3], %s4801
          %s4803 = sand.u32 %s255, 1
          %s4804 = smul.addr %s4803, 56
          %s4805 = scalar_lea.vmem [#allocation2], %s4804
          %4807 = dma.done %s4802, 896
        $region76: #{vae_forward.1} parent=71 // pred_fallthru
          _
        // Predicated region
        $region77: #{vae_forward.1} parent=71 // pred_check
          %p4808 = pneg %p296
        $region78: #{vae_forward.1} parent=71 // pred_check_branch
          %4810 = sbr.rel (%p4808) target = $region80
        $region79: #{vae_forward.1} parent=71 // pred_region
          %p4811 = scmp.lt.s32.totalorder %s27, 1
          %s4812 = scalar_select %p4811, %s27, 1
          %s4813 = smul.addr %s4812, 2
          %s4814 = smul.addr %s4813, 8
          %s4815 = scalar_lea.vmem %s11, %s4814
        $region80: #{vae_forward.1} parent=71 // pred_fallthru
          _
      $region72: #{vae_forward.1} parent=5 // pred_fallthru
        _
    $region6: #{vae_forward.1} parent=1 // loop_footer
      %s25 = sadd.s32 1, %s21
    $region7: #{vae_forward.1} parent=1 // loop_footer_branch
      %20 = sbr.rel target = $region3
    $region8: #{vae_forward.1} parent=1 // loop_exit
      _
    %4816 = vsyncpa [#allocation3], 1
    %s4817 = scalar_lea.sflag [#allocation3], 1
    %4818 = vsyncpa %s4817, 1

</llo_original>
